<compile_context>
chip_gen: v7x
topology: tpu7x:2x2x1
jax: 0.10.0
libtpu: 0.0.40
codegen_flags: <defaults>
</compile_context>

<pallas_src>
import functools
import math

import jax
import jax.numpy as jnp
from jax import lax
from jax.experimental import pallas as pl
from jax.experimental.pallas import tpu as pltpu

# ---- fixed geometry -------------------------------------------------------
H = W = 16                     # input spatial size
CIN = 3                        # input channels (cat folded into weights)
KH = KW = 5
OH1 = OW1 = H - KH + 1         # 12
M1 = OH1 * W                   # 192 conv1 rows (m = oh*W + ow; ow in [12,16) is garbage)
K1 = KH * KW * CIN             # 75 im2col K for conv1
K1P = 128                      # padded to one lane tile
C1, C1P = 10, 16               # conv1 out channels (padded to 16 lanes)
PH = PW = OH1 // 2             # 6
VROWS = M1 - W                 # 176 rows of vertical pair-max
P1_ROWS = 40                   # compact pooled map rows (36 valid, p = ph*6 + pw)
OH2 = OW2 = PH - KH + 1        # 2
M2 = 8                         # conv2 rows in compact layout (valid rows {0,1,6,7})
C2, C2P = 20, 128              # conv2 out channels (padded to 128 lanes)


# ---------------------------------------------------------------------------
# The fused kernel: per grid step, loop over IMGS images; per image:
#   tanh -> conv1(one GEMM)+ReLU -> vectorized pool1 -> conv2(25 taps)+ReLU -> pool2
# ---------------------------------------------------------------------------
def _fused_forward_kernel(x_ref, w1_ref, b1_ref, w2_ref, b2_ref, o_ref,
                          h1_ref, v_ref, p1_ref, *, imgs):
    b1 = b1_ref[...]                                   # (1, 16)
    acc2_init = jnp.broadcast_to(b2_ref[...], (M2, C2P))   # hoisted bias broadcast (1 vreg)

    def one_image(b, carry):
        r0 = pl.multiple_of(b * M1, 8)

        # ---- conv1 (+ folded cat, tanh, bias, ReLU): one lane-dense GEMM ----
        xt = jnp.tanh(x_ref[pl.ds(r0, M1), :])                       # (192, 128)
        h1_ref[...] = jnp.maximum(
            jnp.dot(xt, w1_ref[...], preferred_element_type=jnp.float32) + b1, 0.0)

        # ---- maxpool1 2x2, vectorized ----
        # vertical pair-max of conv rows oh and oh+1 as one slab op
        v_ref[...] = jnp.maximum(h1_ref[0:VROWS, :], h1_ref[W:W + VROWS, :])
        # horizontal pair-max: stride-2 row slabs (even vs odd ow), 6 ops per image
        for ph in range(PH):
            left = v_ref[pl.ds(2 * ph * W, PW, stride=2), :]          # (6, 16)
            right = v_ref[pl.ds(2 * ph * W + 1, PW, stride=2), :]     # (6, 16)
            p1_ref[PW * ph:PW * ph + PW, :] = jnp.maximum(left, right)

        # ---- conv2 + bias + ReLU: 25 taps (8,16)@(16,128); acc2 is one vreg ----
        acc2 = acc2_init
        for t in range(KH * KW):
            i, j = divmod(t, KW)
            acc2 = acc2 + jnp.dot(p1_ref[pl.ds(i * PW + j, M2), :], w2_ref[t],
                                  preferred_element_type=jnp.float32)
        h2 = jnp.maximum(acc2, 0.0)                                   # (8, 128)

        # ---- maxpool2 over the 4 valid conv2 outputs (rows 0,1,6,7) ----
        # trailing Sequential ReLU is a no-op on non-negative values -> dropped
        out = jnp.maximum(jnp.maximum(h2[0:1, :], h2[1:2, :]),
                          jnp.maximum(h2[PW:PW + 1, :], h2[PW + 1:PW + 2, :]))
        o_ref[pl.ds(b, 1)] = out.reshape(1, 1, C2P)                   # lane-dense store
        return carry

    lax.fori_loop(0, imgs, one_image, 0)


# ---------------------------------------------------------------------------
# Wrapper: layout plumbing only (tiny tensors), one pallas_call
# ---------------------------------------------------------------------------
def _pick_imgs_per_step(n, max_imgs=16):
    """Largest divisor of n that is <= max_imgs while keeping grid >= 2 (v7x megacore)."""
    upper = min(max_imgs, max(1, n // 2))
    for b in range(upper, 0, -1):
        if n % b == 0:
            return b
    return 1


def _pack_conv1_lhs(x_nchw):
    """25-tap im2col: LHS[n, oh*16+ow, (i*5+j)*3+ci] = x[n, ci, oh+i, ow+j] (75 -> 128 lanes)."""
    n = x_nchw.shape[0]
    x_nhwc = jnp.transpose(x_nchw, (0, 2, 3, 1)).astype(jnp.float32)       # (N,16,16,3)
    x_flat = jnp.pad(x_nhwc.reshape(n, H * W, CIN), ((0, 0), (0, 16), (0, 0)))  # (N,272,3)
    cols = [x_flat[:, i * W + j: i * W + j + M1, :]
            for i in range(KH) for j in range(KW)]
    lhs = jnp.concatenate(cols, axis=-1)                                    # (N,192,75)
    lhs = jnp.pad(lhs, ((0, 0), (0, 0), (0, K1P - K1)))                     # (N,192,128)
    return lhs.reshape(n * M1, K1P)


def model_forward(x_nchw, kp):
    n = x_nchw.shape[0]
    imgs = _pick_imgs_per_step(n)
    grid = n // imgs
    lhs = _pack_conv1_lhs(x_nchw)                                           # (N*192, 128)

    out = pl.pallas_call(
        functools.partial(_fused_forward_kernel, imgs=imgs),
        out_shape=jax.ShapeDtypeStruct((n, 1, C2P), jnp.float32),
        grid=(grid,),
        in_specs=[
            pl.BlockSpec((imgs * M1, K1P), lambda s: (s, 0)),     # im2col'd images
            pl.BlockSpec((K1P, C1P), lambda s: (0, 0)),           # w1 (resident)
            pl.BlockSpec((1, C1P), lambda s: (0, 0)),             # b1
            pl.BlockSpec((KH * KW, C1P, C2P), lambda s: (0, 0, 0)),  # w2 (resident)
            pl.BlockSpec((1, C2P), lambda s: (0, 0)),             # b2
        ],
        out_specs=pl.BlockSpec((imgs, 1, C2P), lambda s: (s, 0, 0)),
        scratch_shapes=[
            pltpu.VMEM((M1, C1P), jnp.float32),        # conv1+ReLU output (per image)
            pltpu.VMEM((VROWS, C1P), jnp.float32),     # vertical pool pair-max
            pltpu.VMEM((P1_ROWS, C1P), jnp.float32),   # compact pooled map (p = ph*6+pw)
        ],
        compiler_params=pltpu.CompilerParams(dimension_semantics=("parallel",)),
    )(lhs, kp["w1"], kp["b1"], kp["w2"], kp["b2"])

    return out[:, 0, :C2].reshape(n, C2, 1, 1)                    # NCHW (N, 20, 1, 1)


def prepare_params(p):
    """Fold the channel-cat into conv1 and lay weights out for the kernel."""
    # conv(cat([x,x]), w6ch) == conv(x, w6ch[:, :3] + w6ch[:, 3:])   (halves identical)
    w1f = p["w1"][:, :CIN] + p["w1"][:, CIN:]                              # (10,3,5,5)
    w1k = jnp.transpose(w1f, (2, 3, 1, 0)).reshape(K1, C1)                 # row=(i*5+j)*3+ci
    w1k = jnp.pad(w1k, ((0, K1P - K1), (0, C1P - C1)))                     # (128, 16)
    b1k = jnp.pad(p["b1"], (0, C1P - C1)).reshape(1, C1P)

    w2k = jnp.transpose(p["w2"], (2, 3, 1, 0)).reshape(KH * KW, C1, C2)    # (25,10,20)
    w2k = jnp.pad(w2k, ((0, 0), (0, C1P - C1), (0, C2P - C2)))             # (25,16,128)
    b2k = jnp.pad(p["b2"], (0, C2P - C2)).reshape(1, C2P)
    return {"w1": w1k, "b1": b1k, "w2": w2k, "b2": b2k}


# ---------------------------------------------------------------------------
# Pure-JAX reference (unfolded weights, explicit cat) for correctness check
# ---------------------------------------------------------------------------
def reference_forward(x_nchw, params):
    t2 = jnp.tanh(jnp.concatenate([x_nchw, x_nchw], axis=1))

    def conv(h, w, b):
        y = lax.conv_general_dilated(
            h, w, (1, 1), "VALID", dimension_numbers=("NCHW", "OIHW", "NCHW"))
        return y + b.reshape(1, -1, 1, 1)

    def pool(h):
        return lax.reduce_window(h, -jnp.inf, lax.max,
                                 (1, 1, 2, 2), (1, 1, 2, 2), "VALID")

    h = pool(jax.nn.relu(conv(t2, params["w1"], params["b1"])))
    h = pool(jax.nn.relu(conv(h, params["w2"], params["b2"])))
    return jax.nn.relu(h)


# ---------------------------------------------------------------------------
if __name__ == "__main__":
    key = jax.random.PRNGKey(0)
    kx, k1, k2, k3, k4 = jax.random.split(key, 5)

    # input (NCHW): batch 8 so the step-batched grid is 2 (feeds both v7x TCs);
    # spatial = 16 so both k=5 convs + 2x2 pools are valid.
    N = 8
    x = jax.random.normal(kx, (N, 3, 16, 16), dtype=jnp.float32)

    # deterministic PyTorch-style uniform init (conv1 gets 6 in-channels, see TODO)
    bnd1 = 1.0 / math.sqrt(6 * 5 * 5)
    bnd2 = 1.0 / math.sqrt(10 * 5 * 5)
    params = {
        "w1": jax.random.uniform(k1, (10, 6, 5, 5), jnp.float32, -bnd1, bnd1),
        "b1": jax.random.uniform(k2, (10,), jnp.float32, -bnd1, bnd1),
        "w2": jax.random.uniform(k3, (20, 10, 5, 5), jnp.float32, -bnd2, bnd2),
        "b2": jax.random.uniform(k4, (20,), jnp.float32, -bnd2, bnd2),
    }
    kparams = prepare_params(params)

    out = jax.block_until_ready(jax.jit(model_forward)(x, kparams))
    ref = jax.block_until_ready(reference_forward(x, params))

    assert out.shape == (N, 20, 1, 1), out.shape
    err = float(jnp.max(jnp.abs(out - ref)))
    assert jnp.allclose(out, ref, atol=1e-3, rtol=1e-3), f"mismatch vs reference: {err}"

    print("KERNEL_OK")
</pallas_src>

<mosaic_0001>
module attributes {stable_mosaic.version = 11 : i64} {
  func.func @_fused_forward_kernel(%arg0: i32, %arg1: memref<768x128xf32, #tpu.memory_space<vmem>>, %arg2: memref<128x16xf32, #tpu.memory_space<vmem>>, %arg3: memref<1x16xf32, #tpu.memory_space<vmem>>, %arg4: memref<25x16x128xf32, #tpu.memory_space<vmem>>, %arg5: memref<1x128xf32, #tpu.memory_space<vmem>>, %arg6: memref<4x1x128xf32, #tpu.memory_space<vmem>>, %arg7: memref<192x16xf32, #tpu.memory_space<vmem>>, %arg8: memref<176x16xf32, #tpu.memory_space<vmem>>, %arg9: memref<40x16xf32, #tpu.memory_space<vmem>>) attributes {dimension_semantics = [#tpu.dimension_semantics<parallel>], iteration_bounds = array<i64: 2>, scalar_prefetch = 0 : i64, scratch_operands = 3 : i64, tpu.core_type = #tpu.core_type<tc>, window_params = [{transform_indices = @transform_0, window_bounds = array<i64: 768, 128>}, {pipeline_mode = #tpu.pipeline_mode<synchronous>, transform_indices = @transform_1, window_bounds = array<i64: 128, 16>}, {pipeline_mode = #tpu.pipeline_mode<synchronous>, transform_indices = @transform_2, window_bounds = array<i64: 1, 16>}, {pipeline_mode = #tpu.pipeline_mode<synchronous>, transform_indices = @transform_3, window_bounds = array<i64: 25, 16, 128>}, {pipeline_mode = #tpu.pipeline_mode<synchronous>, transform_indices = @transform_4, window_bounds = array<i64: 1, 128>}, {transform_indices = @transform_5, window_bounds = array<i64: 4, 1, 128>}]} {
    %c0 = arith.constant 0 : index
    %c0_0 = arith.constant 0 : index
    %0 = vector.load %arg3[%c0, %c0_0] : memref<1x16xf32, #tpu.memory_space<vmem>>, vector<1x16xf32>
    %c0_1 = arith.constant 0 : index
    %c0_2 = arith.constant 0 : index
    %1 = vector.load %arg5[%c0_1, %c0_2] : memref<1x128xf32, #tpu.memory_space<vmem>>, vector<1x128xf32>
    %2 = vector.shape_cast %1 : vector<1x128xf32> to vector<1x128xf32>
    %3 = vector.broadcast %2 : vector<1x128xf32> to vector<8x128xf32>
    %c0_i32 = arith.constant 0 : i32
    %c4_i32 = arith.constant 4 : i32
    %4 = arith.addi %c0_i32, %c4_i32 : i32
    %c1_i32 = arith.constant 1 : i32
    scf.for %arg10 = %c0_i32 to %4 step %c1_i32  : i32 {
      %c192_i32 = arith.constant 192 : i32
      %5 = arith.muli %arg10, %c192_i32 : i32
      %6 = tpu.assume_multiple %5, 8 : i32
      %7 = arith.index_cast %6 : i32 to index
      %c0_4 = arith.constant 0 : index
      %8 = vector.load %arg1[%7, %c0_4] : memref<768x128xf32, #tpu.memory_space<vmem>>, vector<192x128xf32>
      %9 = math.tanh %8 : vector<192x128xf32>
      %c0_5 = arith.constant 0 : index
      %c0_6 = arith.constant 0 : index
      %10 = vector.load %arg2[%c0_5, %c0_6] : memref<128x16xf32, #tpu.memory_space<vmem>>, vector<128x16xf32>
      %cst = arith.constant dense<0.000000e+00> : vector<192x16xf32>
      %11 = tpu.matmul %9, %10, %cst {dimension_numbers = #tpu.dot_dimension_numbers<[1], [0], [0], [1], [0, 0, 1, 1], [], []>} : vector<192x128xf32>, vector<128x16xf32>, vector<192x16xf32> -> vector<192x16xf32>
      %12 = vector.broadcast %0 : vector<1x16xf32> to vector<192x16xf32>
      %13 = arith.addf %11, %12 : vector<192x16xf32>
      %cst_7 = arith.constant 0.000000e+00 : f32
      %14 = vector.broadcast %cst_7 : f32 to vector<192x16xf32>
      %15 = arith.maximumf %13, %14 : vector<192x16xf32>
      %c0_8 = arith.constant 0 : index
      %c0_9 = arith.constant 0 : index
      %16 = vector.load %arg7[%c0_8, %c0_9] : memref<192x16xf32, #tpu.memory_space<vmem>>, vector<192x16xf32>
      tpu.vector_store %arg7[%c0_8, %c0_9], %15 {strides = array<i32>} : memref<192x16xf32, #tpu.memory_space<vmem>>, vector<192x16xf32>,
      %c0_10 = arith.constant 0 : index
      %c0_11 = arith.constant 0 : index
      %17 = vector.load %arg7[%c0_10, %c0_11] : memref<192x16xf32, #tpu.memory_space<vmem>>, vector<176x16xf32>
      %c16 = arith.constant 16 : index
      %c0_12 = arith.constant 0 : index
      %18 = vector.load %arg7[%c16, %c0_12] : memref<192x16xf32, #tpu.memory_space<vmem>>, vector<176x16xf32>
      %19 = arith.maximumf %17, %18 : vector<176x16xf32>
      %c0_13 = arith.constant 0 : index
      %c0_14 = arith.constant 0 : index
      %20 = vector.load %arg8[%c0_13, %c0_14] : memref<176x16xf32, #tpu.memory_space<vmem>>, vector<176x16xf32>
      tpu.vector_store %arg8[%c0_13, %c0_14], %19 {strides = array<i32>} : memref<176x16xf32, #tpu.memory_space<vmem>>, vector<176x16xf32>,
      %c0_15 = arith.constant 0 : index
      %c0_16 = arith.constant 0 : index
      %21 = tpu.strided_load %arg8[%c0_15, %c0_16] {strides = array<i32: 2, 1>} : memref<176x16xf32, #tpu.memory_space<vmem>>, vector<6x16xf32>
      %c1 = arith.constant 1 : index
      %c0_17 = arith.constant 0 : index
      %22 = tpu.strided_load %arg8[%c1, %c0_17] {strides = array<i32: 2, 1>} : memref<176x16xf32, #tpu.memory_space<vmem>>, vector<6x16xf32>
      %23 = arith.maximumf %21, %22 : vector<6x16xf32>
      %c0_18 = arith.constant 0 : index
      %c0_19 = arith.constant 0 : index
      %24 = vector.load %arg9[%c0_18, %c0_19] : memref<40x16xf32, #tpu.memory_space<vmem>>, vector<6x16xf32>
      tpu.vector_store %arg9[%c0_18, %c0_19], %23 {strides = array<i32>} : memref<40x16xf32, #tpu.memory_space<vmem>>, vector<6x16xf32>,
      %c32 = arith.constant 32 : index
      %c0_20 = arith.constant 0 : index
      %25 = tpu.strided_load %arg8[%c32, %c0_20] {strides = array<i32: 2, 1>} : memref<176x16xf32, #tpu.memory_space<vmem>>, vector<6x16xf32>
      %c33 = arith.constant 33 : index
      %c0_21 = arith.constant 0 : index
      %26 = tpu.strided_load %arg8[%c33, %c0_21] {strides = array<i32: 2, 1>} : memref<176x16xf32, #tpu.memory_space<vmem>>, vector<6x16xf32>
      %27 = arith.maximumf %25, %26 : vector<6x16xf32>
      %c6 = arith.constant 6 : index
      %c0_22 = arith.constant 0 : index
      %28 = vector.load %arg9[%c6, %c0_22] : memref<40x16xf32, #tpu.memory_space<vmem>>, vector<6x16xf32>
      tpu.vector_store %arg9[%c6, %c0_22], %27 {strides = array<i32>} : memref<40x16xf32, #tpu.memory_space<vmem>>, vector<6x16xf32>,
      %c64 = arith.constant 64 : index
      %c0_23 = arith.constant 0 : index
      %29 = tpu.strided_load %arg8[%c64, %c0_23] {strides = array<i32: 2, 1>} : memref<176x16xf32, #tpu.memory_space<vmem>>, vector<6x16xf32>
      %c65 = arith.constant 65 : index
      %c0_24 = arith.constant 0 : index
      %30 = tpu.strided_load %arg8[%c65, %c0_24] {strides = array<i32: 2, 1>} : memref<176x16xf32, #tpu.memory_space<vmem>>, vector<6x16xf32>
      %31 = arith.maximumf %29, %30 : vector<6x16xf32>
      %c12 = arith.constant 12 : index
      %c0_25 = arith.constant 0 : index
      %32 = vector.load %arg9[%c12, %c0_25] : memref<40x16xf32, #tpu.memory_space<vmem>>, vector<6x16xf32>
      tpu.vector_store %arg9[%c12, %c0_25], %31 {strides = array<i32>} : memref<40x16xf32, #tpu.memory_space<vmem>>, vector<6x16xf32>,
      %c96 = arith.constant 96 : index
      %c0_26 = arith.constant 0 : index
      %33 = tpu.strided_load %arg8[%c96, %c0_26] {strides = array<i32: 2, 1>} : memref<176x16xf32, #tpu.memory_space<vmem>>, vector<6x16xf32>
      %c97 = arith.constant 97 : index
      %c0_27 = arith.constant 0 : index
      %34 = tpu.strided_load %arg8[%c97, %c0_27] {strides = array<i32: 2, 1>} : memref<176x16xf32, #tpu.memory_space<vmem>>, vector<6x16xf32>
      %35 = arith.maximumf %33, %34 : vector<6x16xf32>
      %c18 = arith.constant 18 : index
      %c0_28 = arith.constant 0 : index
      %36 = vector.load %arg9[%c18, %c0_28] : memref<40x16xf32, #tpu.memory_space<vmem>>, vector<6x16xf32>
      tpu.vector_store %arg9[%c18, %c0_28], %35 {strides = array<i32>} : memref<40x16xf32, #tpu.memory_space<vmem>>, vector<6x16xf32>,
      %c128 = arith.constant 128 : index
      %c0_29 = arith.constant 0 : index
      %37 = tpu.strided_load %arg8[%c128, %c0_29] {strides = array<i32: 2, 1>} : memref<176x16xf32, #tpu.memory_space<vmem>>, vector<6x16xf32>
      %c129 = arith.constant 129 : index
      %c0_30 = arith.constant 0 : index
      %38 = tpu.strided_load %arg8[%c129, %c0_30] {strides = array<i32: 2, 1>} : memref<176x16xf32, #tpu.memory_space<vmem>>, vector<6x16xf32>
      %39 = arith.maximumf %37, %38 : vector<6x16xf32>
      %c24 = arith.constant 24 : index
      %c0_31 = arith.constant 0 : index
      %40 = vector.load %arg9[%c24, %c0_31] : memref<40x16xf32, #tpu.memory_space<vmem>>, vector<6x16xf32>
      tpu.vector_store %arg9[%c24, %c0_31], %39 {strides = array<i32>} : memref<40x16xf32, #tpu.memory_space<vmem>>, vector<6x16xf32>,
      %c160 = arith.constant 160 : index
      %c0_32 = arith.constant 0 : index
      %41 = tpu.strided_load %arg8[%c160, %c0_32] {strides = array<i32: 2, 1>} : memref<176x16xf32, #tpu.memory_space<vmem>>, vector<6x16xf32>
      %c161 = arith.constant 161 : index
      %c0_33 = arith.constant 0 : index
      %42 = tpu.strided_load %arg8[%c161, %c0_33] {strides = array<i32: 2, 1>} : memref<176x16xf32, #tpu.memory_space<vmem>>, vector<6x16xf32>
      %43 = arith.maximumf %41, %42 : vector<6x16xf32>
      %c30 = arith.constant 30 : index
      %c0_34 = arith.constant 0 : index
      %44 = vector.load %arg9[%c30, %c0_34] : memref<40x16xf32, #tpu.memory_space<vmem>>, vector<6x16xf32>
      tpu.vector_store %arg9[%c30, %c0_34], %43 {strides = array<i32>} : memref<40x16xf32, #tpu.memory_space<vmem>>, vector<6x16xf32>,
      %c0_35 = arith.constant 0 : index
      %c0_36 = arith.constant 0 : index
      %45 = vector.load %arg9[%c0_35, %c0_36] : memref<40x16xf32, #tpu.memory_space<vmem>>, vector<8x16xf32>
      %c0_37 = arith.constant 0 : index
      %c0_38 = arith.constant 0 : index
      %c0_39 = arith.constant 0 : index
      %46 = vector.load %arg4[%c0_37, %c0_38, %c0_39] : memref<25x16x128xf32, #tpu.memory_space<vmem>>, vector<1x16x128xf32>
      %47 = vector.shape_cast %46 : vector<1x16x128xf32> to vector<16x128xf32>
      %cst_40 = arith.constant dense<0.000000e+00> : vector<8x128xf32>
      %48 = tpu.matmul %45, %47, %cst_40 {dimension_numbers = #tpu.dot_dimension_numbers<[1], [0], [0], [1], [0, 0, 1, 1], [], []>} : vector<8x16xf32>, vector<16x128xf32>, vector<8x128xf32> -> vector<8x128xf32>
      %49 = arith.addf %3, %48 : vector<8x128xf32>
      %c1_41 = arith.constant 1 : index
      %c0_42 = arith.constant 0 : index
      %50 = vector.load %arg9[%c1_41, %c0_42] : memref<40x16xf32, #tpu.memory_space<vmem>>, vector<8x16xf32>
      %c1_43 = arith.constant 1 : index
      %c0_44 = arith.constant 0 : index
      %c0_45 = arith.constant 0 : index
      %51 = vector.load %arg4[%c1_43, %c0_44, %c0_45] : memref<25x16x128xf32, #tpu.memory_space<vmem>>, vector<1x16x128xf32>
      %52 = vector.shape_cast %51 : vector<1x16x128xf32> to vector<16x128xf32>
      %cst_46 = arith.constant dense<0.000000e+00> : vector<8x128xf32>
      %53 = tpu.matmul %50, %52, %cst_46 {dimension_numbers = #tpu.dot_dimension_numbers<[1], [0], [0], [1], [0, 0, 1, 1], [], []>} : vector<8x16xf32>, vector<16x128xf32>, vector<8x128xf32> -> vector<8x128xf32>
      %54 = arith.addf %49, %53 : vector<8x128xf32>
      %c2 = arith.constant 2 : index
      %c0_47 = arith.constant 0 : index
      %55 = vector.load %arg9[%c2, %c0_47] : memref<40x16xf32, #tpu.memory_space<vmem>>, vector<8x16xf32>
      %c2_48 = arith.constant 2 : index
      %c0_49 = arith.constant 0 : index
      %c0_50 = arith.constant 0 : index
      %56 = vector.load %arg4[%c2_48, %c0_49, %c0_50] : memref<25x16x128xf32, #tpu.memory_space<vmem>>, vector<1x16x128xf32>
      %57 = vector.shape_cast %56 : vector<1x16x128xf32> to vector<16x128xf32>
      %cst_51 = arith.constant dense<0.000000e+00> : vector<8x128xf32>
      %58 = tpu.matmul %55, %57, %cst_51 {dimension_numbers = #tpu.dot_dimension_numbers<[1], [0], [0], [1], [0, 0, 1, 1], [], []>} : vector<8x16xf32>, vector<16x128xf32>, vector<8x128xf32> -> vector<8x128xf32>
      %59 = arith.addf %54, %58 : vector<8x128xf32>
      %c3 = arith.constant 3 : index
      %c0_52 = arith.constant 0 : index
      %60 = vector.load %arg9[%c3, %c0_52] : memref<40x16xf32, #tpu.memory_space<vmem>>, vector<8x16xf32>
      %c3_53 = arith.constant 3 : index
      %c0_54 = arith.constant 0 : index
      %c0_55 = arith.constant 0 : index
      %61 = vector.load %arg4[%c3_53, %c0_54, %c0_55] : memref<25x16x128xf32, #tpu.memory_space<vmem>>, vector<1x16x128xf32>
      %62 = vector.shape_cast %61 : vector<1x16x128xf32> to vector<16x128xf32>
      %cst_56 = arith.constant dense<0.000000e+00> : vector<8x128xf32>
      %63 = tpu.matmul %60, %62, %cst_56 {dimension_numbers = #tpu.dot_dimension_numbers<[1], [0], [0], [1], [0, 0, 1, 1], [], []>} : vector<8x16xf32>, vector<16x128xf32>, vector<8x128xf32> -> vector<8x128xf32>
      %64 = arith.addf %59, %63 : vector<8x128xf32>
      %c4 = arith.constant 4 : index
      %c0_57 = arith.constant 0 : index
      %65 = vector.load %arg9[%c4, %c0_57] : memref<40x16xf32, #tpu.memory_space<vmem>>, vector<8x16xf32>
      %c4_58 = arith.constant 4 : index
      %c0_59 = arith.constant 0 : index
      %c0_60 = arith.constant 0 : index
      %66 = vector.load %arg4[%c4_58, %c0_59, %c0_60] : memref<25x16x128xf32, #tpu.memory_space<vmem>>, vector<1x16x128xf32>
      %67 = vector.shape_cast %66 : vector<1x16x128xf32> to vector<16x128xf32>
      %cst_61 = arith.constant dense<0.000000e+00> : vector<8x128xf32>
      %68 = tpu.matmul %65, %67, %cst_61 {dimension_numbers = #tpu.dot_dimension_numbers<[1], [0], [0], [1], [0, 0, 1, 1], [], []>} : vector<8x16xf32>, vector<16x128xf32>, vector<8x128xf32> -> vector<8x128xf32>
      %69 = arith.addf %64, %68 : vector<8x128xf32>
      %c6_62 = arith.constant 6 : index
      %c0_63 = arith.constant 0 : index
      %70 = vector.load %arg9[%c6_62, %c0_63] : memref<40x16xf32, #tpu.memory_space<vmem>>, vector<8x16xf32>
      %c5 = arith.constant 5 : index
      %c0_64 = arith.constant 0 : index
      %c0_65 = arith.constant 0 : index
      %71 = vector.load %arg4[%c5, %c0_64, %c0_65] : memref<25x16x128xf32, #tpu.memory_space<vmem>>, vector<1x16x128xf32>
      %72 = vector.shape_cast %71 : vector<1x16x128xf32> to vector<16x128xf32>
      %cst_66 = arith.constant dense<0.000000e+00> : vector<8x128xf32>
      %73 = tpu.matmul %70, %72, %cst_66 {dimension_numbers = #tpu.dot_dimension_numbers<[1], [0], [0], [1], [0, 0, 1, 1], [], []>} : vector<8x16xf32>, vector<16x128xf32>, vector<8x128xf32> -> vector<8x128xf32>
      %74 = arith.addf %69, %73 : vector<8x128xf32>
      %c7 = arith.constant 7 : index
      %c0_67 = arith.constant 0 : index
      %75 = vector.load %arg9[%c7, %c0_67] : memref<40x16xf32, #tpu.memory_space<vmem>>, vector<8x16xf32>
      %c6_68 = arith.constant 6 : index
      %c0_69 = arith.constant 0 : index
      %c0_70 = arith.constant 0 : index
      %76 = vector.load %arg4[%c6_68, %c0_69, %c0_70] : memref<25x16x128xf32, #tpu.memory_space<vmem>>, vector<1x16x128xf32>
      %77 = vector.shape_cast %76 : vector<1x16x128xf32> to vector<16x128xf32>
      %cst_71 = arith.constant dense<0.000000e+00> : vector<8x128xf32>
      %78 = tpu.matmul %75, %77, %cst_71 {dimension_numbers = #tpu.dot_dimension_numbers<[1], [0], [0], [1], [0, 0, 1, 1], [], []>} : vector<8x16xf32>, vector<16x128xf32>, vector<8x128xf32> -> vector<8x128xf32>
      %79 = arith.addf %74, %78 : vector<8x128xf32>
      %c8 = arith.constant 8 : index
      %c0_72 = arith.constant 0 : index
      %80 = vector.load %arg9[%c8, %c0_72] : memref<40x16xf32, #tpu.memory_space<vmem>>, vector<8x16xf32>
      %c7_73 = arith.constant 7 : index
      %c0_74 = arith.constant 0 : index
      %c0_75 = arith.constant 0 : index
      %81 = vector.load %arg4[%c7_73, %c0_74, %c0_75] : memref<25x16x128xf32, #tpu.memory_space<vmem>>, vector<1x16x128xf32>
      %82 = vector.shape_cast %81 : vector<1x16x128xf32> to vector<16x128xf32>
      %cst_76 = arith.constant dense<0.000000e+00> : vector<8x128xf32>
      %83 = tpu.matmul %80, %82, %cst_76 {dimension_numbers = #tpu.dot_dimension_numbers<[1], [0], [0], [1], [0, 0, 1, 1], [], []>} : vector<8x16xf32>, vector<16x128xf32>, vector<8x128xf32> -> vector<8x128xf32>
      %84 = arith.addf %79, %83 : vector<8x128xf32>
      %c9 = arith.constant 9 : index
      %c0_77 = arith.constant 0 : index
      %85 = vector.load %arg9[%c9, %c0_77] : memref<40x16xf32, #tpu.memory_space<vmem>>, vector<8x16xf32>
      %c8_78 = arith.constant 8 : index
      %c0_79 = arith.constant 0 : index
      %c0_80 = arith.constant 0 : index
      %86 = vector.load %arg4[%c8_78, %c0_79, %c0_80] : memref<25x16x128xf32, #tpu.memory_space<vmem>>, vector<1x16x128xf32>
      %87 = vector.shape_cast %86 : vector<1x16x128xf32> to vector<16x128xf32>
      %cst_81 = arith.constant dense<0.000000e+00> : vector<8x128xf32>
      %88 = tpu.matmul %85, %87, %cst_81 {dimension_numbers = #tpu.dot_dimension_numbers<[1], [0], [0], [1], [0, 0, 1, 1], [], []>} : vector<8x16xf32>, vector<16x128xf32>, vector<8x128xf32> -> vector<8x128xf32>
      %89 = arith.addf %84, %88 : vector<8x128xf32>
      %c10 = arith.constant 10 : index
      %c0_82 = arith.constant 0 : index
      %90 = vector.load %arg9[%c10, %c0_82] : memref<40x16xf32, #tpu.memory_space<vmem>>, vector<8x16xf32>
      %c9_83 = arith.constant 9 : index
      %c0_84 = arith.constant 0 : index
      %c0_85 = arith.constant 0 : index
      %91 = vector.load %arg4[%c9_83, %c0_84, %c0_85] : memref<25x16x128xf32, #tpu.memory_space<vmem>>, vector<1x16x128xf32>
      %92 = vector.shape_cast %91 : vector<1x16x128xf32> to vector<16x128xf32>
      %cst_86 = arith.constant dense<0.000000e+00> : vector<8x128xf32>
      %93 = tpu.matmul %90, %92, %cst_86 {dimension_numbers = #tpu.dot_dimension_numbers<[1], [0], [0], [1], [0, 0, 1, 1], [], []>} : vector<8x16xf32>, vector<16x128xf32>, vector<8x128xf32> -> vector<8x128xf32>
      %94 = arith.addf %89, %93 : vector<8x128xf32>
      %c12_87 = arith.constant 12 : index
      %c0_88 = arith.constant 0 : index
      %95 = vector.load %arg9[%c12_87, %c0_88] : memref<40x16xf32, #tpu.memory_space<vmem>>, vector<8x16xf32>
      %c10_89 = arith.constant 10 : index
      %c0_90 = arith.constant 0 : index
      %c0_91 = arith.constant 0 : index
      %96 = vector.load %arg4[%c10_89, %c0_90, %c0_91] : memref<25x16x128xf32, #tpu.memory_space<vmem>>, vector<1x16x128xf32>
      %97 = vector.shape_cast %96 : vector<1x16x128xf32> to vector<16x128xf32>
      %cst_92 = arith.constant dense<0.000000e+00> : vector<8x128xf32>
      %98 = tpu.matmul %95, %97, %cst_92 {dimension_numbers = #tpu.dot_dimension_numbers<[1], [0], [0], [1], [0, 0, 1, 1], [], []>} : vector<8x16xf32>, vector<16x128xf32>, vector<8x128xf32> -> vector<8x128xf32>
      %99 = arith.addf %94, %98 : vector<8x128xf32>
      %c13 = arith.constant 13 : index
      %c0_93 = arith.constant 0 : index
      %100 = vector.load %arg9[%c13, %c0_93] : memref<40x16xf32, #tpu.memory_space<vmem>>, vector<8x16xf32>
      %c11 = arith.constant 11 : index
      %c0_94 = arith.constant 0 : index
      %c0_95 = arith.constant 0 : index
      %101 = vector.load %arg4[%c11, %c0_94, %c0_95] : memref<25x16x128xf32, #tpu.memory_space<vmem>>, vector<1x16x128xf32>
      %102 = vector.shape_cast %101 : vector<1x16x128xf32> to vector<16x128xf32>
      %cst_96 = arith.constant dense<0.000000e+00> : vector<8x128xf32>
      %103 = tpu.matmul %100, %102, %cst_96 {dimension_numbers = #tpu.dot_dimension_numbers<[1], [0], [0], [1], [0, 0, 1, 1], [], []>} : vector<8x16xf32>, vector<16x128xf32>, vector<8x128xf32> -> vector<8x128xf32>
      %104 = arith.addf %99, %103 : vector<8x128xf32>
      %c14 = arith.constant 14 : index
      %c0_97 = arith.constant 0 : index
      %105 = vector.load %arg9[%c14, %c0_97] : memref<40x16xf32, #tpu.memory_space<vmem>>, vector<8x16xf32>
      %c12_98 = arith.constant 12 : index
      %c0_99 = arith.constant 0 : index
      %c0_100 = arith.constant 0 : index
      %106 = vector.load %arg4[%c12_98, %c0_99, %c0_100] : memref<25x16x128xf32, #tpu.memory_space<vmem>>, vector<1x16x128xf32>
      %107 = vector.shape_cast %106 : vector<1x16x128xf32> to vector<16x128xf32>
      %cst_101 = arith.constant dense<0.000000e+00> : vector<8x128xf32>
      %108 = tpu.matmul %105, %107, %cst_101 {dimension_numbers = #tpu.dot_dimension_numbers<[1], [0], [0], [1], [0, 0, 1, 1], [], []>} : vector<8x16xf32>, vector<16x128xf32>, vector<8x128xf32> -> vector<8x128xf32>
      %109 = arith.addf %104, %108 : vector<8x128xf32>
      %c15 = arith.constant 15 : index
      %c0_102 = arith.constant 0 : index
      %110 = vector.load %arg9[%c15, %c0_102] : memref<40x16xf32, #tpu.memory_space<vmem>>, vector<8x16xf32>
      %c13_103 = arith.constant 13 : index
      %c0_104 = arith.constant 0 : index
      %c0_105 = arith.constant 0 : index
      %111 = vector.load %arg4[%c13_103, %c0_104, %c0_105] : memref<25x16x128xf32, #tpu.memory_space<vmem>>, vector<1x16x128xf32>
      %112 = vector.shape_cast %111 : vector<1x16x128xf32> to vector<16x128xf32>
      %cst_106 = arith.constant dense<0.000000e+00> : vector<8x128xf32>
      %113 = tpu.matmul %110, %112, %cst_106 {dimension_numbers = #tpu.dot_dimension_numbers<[1], [0], [0], [1], [0, 0, 1, 1], [], []>} : vector<8x16xf32>, vector<16x128xf32>, vector<8x128xf32> -> vector<8x128xf32>
      %114 = arith.addf %109, %113 : vector<8x128xf32>
      %c16_107 = arith.constant 16 : index
      %c0_108 = arith.constant 0 : index
      %115 = vector.load %arg9[%c16_107, %c0_108] : memref<40x16xf32, #tpu.memory_space<vmem>>, vector<8x16xf32>
      %c14_109 = arith.constant 14 : index
      %c0_110 = arith.constant 0 : index
      %c0_111 = arith.constant 0 : index
      %116 = vector.load %arg4[%c14_109, %c0_110, %c0_111] : memref<25x16x128xf32, #tpu.memory_space<vmem>>, vector<1x16x128xf32>
      %117 = vector.shape_cast %116 : vector<1x16x128xf32> to vector<16x128xf32>
      %cst_112 = arith.constant dense<0.000000e+00> : vector<8x128xf32>
      %118 = tpu.matmul %115, %117, %cst_112 {dimension_numbers = #tpu.dot_dimension_numbers<[1], [0], [0], [1], [0, 0, 1, 1], [], []>} : vector<8x16xf32>, vector<16x128xf32>, vector<8x128xf32> -> vector<8x128xf32>
      %119 = arith.addf %114, %118 : vector<8x128xf32>
      %c18_113 = arith.constant 18 : index
      %c0_114 = arith.constant 0 : index
      %120 = vector.load %arg9[%c18_113, %c0_114] : memref<40x16xf32, #tpu.memory_space<vmem>>, vector<8x16xf32>
      %c15_115 = arith.constant 15 : index
      %c0_116 = arith.constant 0 : index
      %c0_117 = arith.constant 0 : index
      %121 = vector.load %arg4[%c15_115, %c0_116, %c0_117] : memref<25x16x128xf32, #tpu.memory_space<vmem>>, vector<1x16x128xf32>
      %122 = vector.shape_cast %121 : vector<1x16x128xf32> to vector<16x128xf32>
      %cst_118 = arith.constant dense<0.000000e+00> : vector<8x128xf32>
      %123 = tpu.matmul %120, %122, %cst_118 {dimension_numbers = #tpu.dot_dimension_numbers<[1], [0], [0], [1], [0, 0, 1, 1], [], []>} : vector<8x16xf32>, vector<16x128xf32>, vector<8x128xf32> -> vector<8x128xf32>
      %124 = arith.addf %119, %123 : vector<8x128xf32>
      %c19 = arith.constant 19 : index
      %c0_119 = arith.constant 0 : index
      %125 = vector.load %arg9[%c19, %c0_119] : memref<40x16xf32, #tpu.memory_space<vmem>>, vector<8x16xf32>
      %c16_120 = arith.constant 16 : index
      %c0_121 = arith.constant 0 : index
      %c0_122 = arith.constant 0 : index
      %126 = vector.load %arg4[%c16_120, %c0_121, %c0_122] : memref<25x16x128xf32, #tpu.memory_space<vmem>>, vector<1x16x128xf32>
      %127 = vector.shape_cast %126 : vector<1x16x128xf32> to vector<16x128xf32>
      %cst_123 = arith.constant dense<0.000000e+00> : vector<8x128xf32>
      %128 = tpu.matmul %125, %127, %cst_123 {dimension_numbers = #tpu.dot_dimension_numbers<[1], [0], [0], [1], [0, 0, 1, 1], [], []>} : vector<8x16xf32>, vector<16x128xf32>, vector<8x128xf32> -> vector<8x128xf32>
      %129 = arith.addf %124, %128 : vector<8x128xf32>
      %c20 = arith.constant 20 : index
      %c0_124 = arith.constant 0 : index
      %130 = vector.load %arg9[%c20, %c0_124] : memref<40x16xf32, #tpu.memory_space<vmem>>, vector<8x16xf32>
      %c17 = arith.constant 17 : index
      %c0_125 = arith.constant 0 : index
      %c0_126 = arith.constant 0 : index
      %131 = vector.load %arg4[%c17, %c0_125, %c0_126] : memref<25x16x128xf32, #tpu.memory_space<vmem>>, vector<1x16x128xf32>
      %132 = vector.shape_cast %131 : vector<1x16x128xf32> to vector<16x128xf32>
      %cst_127 = arith.constant dense<0.000000e+00> : vector<8x128xf32>
      %133 = tpu.matmul %130, %132, %cst_127 {dimension_numbers = #tpu.dot_dimension_numbers<[1], [0], [0], [1], [0, 0, 1, 1], [], []>} : vector<8x16xf32>, vector<16x128xf32>, vector<8x128xf32> -> vector<8x128xf32>
      %134 = arith.addf %129, %133 : vector<8x128xf32>
      %c21 = arith.constant 21 : index
      %c0_128 = arith.constant 0 : index
      %135 = vector.load %arg9[%c21, %c0_128] : memref<40x16xf32, #tpu.memory_space<vmem>>, vector<8x16xf32>
      %c18_129 = arith.constant 18 : index
      %c0_130 = arith.constant 0 : index
      %c0_131 = arith.constant 0 : index
      %136 = vector.load %arg4[%c18_129, %c0_130, %c0_131] : memref<25x16x128xf32, #tpu.memory_space<vmem>>, vector<1x16x128xf32>
      %137 = vector.shape_cast %136 : vector<1x16x128xf32> to vector<16x128xf32>
      %cst_132 = arith.constant dense<0.000000e+00> : vector<8x128xf32>
      %138 = tpu.matmul %135, %137, %cst_132 {dimension_numbers = #tpu.dot_dimension_numbers<[1], [0], [0], [1], [0, 0, 1, 1], [], []>} : vector<8x16xf32>, vector<16x128xf32>, vector<8x128xf32> -> vector<8x128xf32>
      %139 = arith.addf %134, %138 : vector<8x128xf32>
      %c22 = arith.constant 22 : index
      %c0_133 = arith.constant 0 : index
      %140 = vector.load %arg9[%c22, %c0_133] : memref<40x16xf32, #tpu.memory_space<vmem>>, vector<8x16xf32>
      %c19_134 = arith.constant 19 : index
      %c0_135 = arith.constant 0 : index
      %c0_136 = arith.constant 0 : index
      %141 = vector.load %arg4[%c19_134, %c0_135, %c0_136] : memref<25x16x128xf32, #tpu.memory_space<vmem>>, vector<1x16x128xf32>
      %142 = vector.shape_cast %141 : vector<1x16x128xf32> to vector<16x128xf32>
      %cst_137 = arith.constant dense<0.000000e+00> : vector<8x128xf32>
      %143 = tpu.matmul %140, %142, %cst_137 {dimension_numbers = #tpu.dot_dimension_numbers<[1], [0], [0], [1], [0, 0, 1, 1], [], []>} : vector<8x16xf32>, vector<16x128xf32>, vector<8x128xf32> -> vector<8x128xf32>
      %144 = arith.addf %139, %143 : vector<8x128xf32>
      %c24_138 = arith.constant 24 : index
      %c0_139 = arith.constant 0 : index
      %145 = vector.load %arg9[%c24_138, %c0_139] : memref<40x16xf32, #tpu.memory_space<vmem>>, vector<8x16xf32>
      %c20_140 = arith.constant 20 : index
      %c0_141 = arith.constant 0 : index
      %c0_142 = arith.constant 0 : index
      %146 = vector.load %arg4[%c20_140, %c0_141, %c0_142] : memref<25x16x128xf32, #tpu.memory_space<vmem>>, vector<1x16x128xf32>
      %147 = vector.shape_cast %146 : vector<1x16x128xf32> to vector<16x128xf32>
      %cst_143 = arith.constant dense<0.000000e+00> : vector<8x128xf32>
      %148 = tpu.matmul %145, %147, %cst_143 {dimension_numbers = #tpu.dot_dimension_numbers<[1], [0], [0], [1], [0, 0, 1, 1], [], []>} : vector<8x16xf32>, vector<16x128xf32>, vector<8x128xf32> -> vector<8x128xf32>
      %149 = arith.addf %144, %148 : vector<8x128xf32>
      %c25 = arith.constant 25 : index
      %c0_144 = arith.constant 0 : index
      %150 = vector.load %arg9[%c25, %c0_144] : memref<40x16xf32, #tpu.memory_space<vmem>>, vector<8x16xf32>
      %c21_145 = arith.constant 21 : index
      %c0_146 = arith.constant 0 : index
      %c0_147 = arith.constant 0 : index
      %151 = vector.load %arg4[%c21_145, %c0_146, %c0_147] : memref<25x16x128xf32, #tpu.memory_space<vmem>>, vector<1x16x128xf32>
      %152 = vector.shape_cast %151 : vector<1x16x128xf32> to vector<16x128xf32>
      %cst_148 = arith.constant dense<0.000000e+00> : vector<8x128xf32>
      %153 = tpu.matmul %150, %152, %cst_148 {dimension_numbers = #tpu.dot_dimension_numbers<[1], [0], [0], [1], [0, 0, 1, 1], [], []>} : vector<8x16xf32>, vector<16x128xf32>, vector<8x128xf32> -> vector<8x128xf32>
      %154 = arith.addf %149, %153 : vector<8x128xf32>
      %c26 = arith.constant 26 : index
      %c0_149 = arith.constant 0 : index
      %155 = vector.load %arg9[%c26, %c0_149] : memref<40x16xf32, #tpu.memory_space<vmem>>, vector<8x16xf32>
      %c22_150 = arith.constant 22 : index
      %c0_151 = arith.constant 0 : index
      %c0_152 = arith.constant 0 : index
      %156 = vector.load %arg4[%c22_150, %c0_151, %c0_152] : memref<25x16x128xf32, #tpu.memory_space<vmem>>, vector<1x16x128xf32>
      %157 = vector.shape_cast %156 : vector<1x16x128xf32> to vector<16x128xf32>
      %cst_153 = arith.constant dense<0.000000e+00> : vector<8x128xf32>
      %158 = tpu.matmul %155, %157, %cst_153 {dimension_numbers = #tpu.dot_dimension_numbers<[1], [0], [0], [1], [0, 0, 1, 1], [], []>} : vector<8x16xf32>, vector<16x128xf32>, vector<8x128xf32> -> vector<8x128xf32>
      %159 = arith.addf %154, %158 : vector<8x128xf32>
      %c27 = arith.constant 27 : index
      %c0_154 = arith.constant 0 : index
      %160 = vector.load %arg9[%c27, %c0_154] : memref<40x16xf32, #tpu.memory_space<vmem>>, vector<8x16xf32>
      %c23 = arith.constant 23 : index
      %c0_155 = arith.constant 0 : index
      %c0_156 = arith.constant 0 : index
      %161 = vector.load %arg4[%c23, %c0_155, %c0_156] : memref<25x16x128xf32, #tpu.memory_space<vmem>>, vector<1x16x128xf32>
      %162 = vector.shape_cast %161 : vector<1x16x128xf32> to vector<16x128xf32>
      %cst_157 = arith.constant dense<0.000000e+00> : vector<8x128xf32>
      %163 = tpu.matmul %160, %162, %cst_157 {dimension_numbers = #tpu.dot_dimension_numbers<[1], [0], [0], [1], [0, 0, 1, 1], [], []>} : vector<8x16xf32>, vector<16x128xf32>, vector<8x128xf32> -> vector<8x128xf32>
      %164 = arith.addf %159, %163 : vector<8x128xf32>
      %c28 = arith.constant 28 : index
      %c0_158 = arith.constant 0 : index
      %165 = vector.load %arg9[%c28, %c0_158] : memref<40x16xf32, #tpu.memory_space<vmem>>, vector<8x16xf32>
      %c24_159 = arith.constant 24 : index
      %c0_160 = arith.constant 0 : index
      %c0_161 = arith.constant 0 : index
      %166 = vector.load %arg4[%c24_159, %c0_160, %c0_161] : memref<25x16x128xf32, #tpu.memory_space<vmem>>, vector<1x16x128xf32>
      %167 = vector.shape_cast %166 : vector<1x16x128xf32> to vector<16x128xf32>
      %cst_162 = arith.constant dense<0.000000e+00> : vector<8x128xf32>
      %168 = tpu.matmul %165, %167, %cst_162 {dimension_numbers = #tpu.dot_dimension_numbers<[1], [0], [0], [1], [0, 0, 1, 1], [], []>} : vector<8x16xf32>, vector<16x128xf32>, vector<8x128xf32> -> vector<8x128xf32>
      %169 = arith.addf %164, %168 : vector<8x128xf32>
      %cst_163 = arith.constant 0.000000e+00 : f32
      %170 = vector.broadcast %cst_163 : f32 to vector<8x128xf32>
      %171 = arith.maximumf %169, %170 : vector<8x128xf32>
      %172 = vector.extract_strided_slice %171 {offsets = [0, 0], sizes = [1, 128], strides = [1, 1]} : vector<8x128xf32> to vector<1x128xf32>
      %173 = vector.extract_strided_slice %171 {offsets = [1, 0], sizes = [1, 128], strides = [1, 1]} : vector<8x128xf32> to vector<1x128xf32>
      %174 = arith.maximumf %172, %173 : vector<1x128xf32>
      %175 = vector.extract_strided_slice %171 {offsets = [6, 0], sizes = [1, 128], strides = [1, 1]} : vector<8x128xf32> to vector<1x128xf32>
      %176 = vector.extract_strided_slice %171 {offsets = [7, 0], sizes = [1, 128], strides = [1, 1]} : vector<8x128xf32> to vector<1x128xf32>
      %177 = arith.maximumf %175, %176 : vector<1x128xf32>
      %178 = arith.maximumf %174, %177 : vector<1x128xf32>
      %179 = vector.shape_cast %178 : vector<1x128xf32> to vector<1x1x128xf32>
      %180 = arith.index_cast %arg10 : i32 to index
      %c0_164 = arith.constant 0 : index
      %c0_165 = arith.constant 0 : index
      %181 = vector.load %arg6[%180, %c0_164, %c0_165] : memref<4x1x128xf32, #tpu.memory_space<vmem>>, vector<1x1x128xf32>
      tpu.vector_store %arg6[%180, %c0_164, %c0_165], %179 {strides = array<i32>} : memref<4x1x128xf32, #tpu.memory_space<vmem>>, vector<1x1x128xf32>,
    }
    %c4_i32_3 = arith.constant 4 : i32
    return
  }
  func.func @transform_0(%arg0: i32) -> (i32, i32) {
    %c0_i32 = arith.constant 0 : i32
    %c0_i32_0 = arith.constant 0 : i32
    return %arg0, %c0_i32 : i32, i32
  }
  func.func @transform_1(%arg0: i32) -> (i32, i32) {
    %c0_i32 = arith.constant 0 : i32
    %c0_i32_0 = arith.constant 0 : i32
    %c0_i32_1 = arith.constant 0 : i32
    return %c0_i32, %c0_i32_0 : i32, i32
  }
  func.func @transform_2(%arg0: i32) -> (i32, i32) {
    %c0_i32 = arith.constant 0 : i32
    %c0_i32_0 = arith.constant 0 : i32
    %c0_i32_1 = arith.constant 0 : i32
    return %c0_i32, %c0_i32_0 : i32, i32
  }
  func.func @transform_3(%arg0: i32) -> (i32, i32, i32) {
    %c0_i32 = arith.constant 0 : i32
    %c0_i32_0 = arith.constant 0 : i32
    %c0_i32_1 = arith.constant 0 : i32
    %c0_i32_2 = arith.constant 0 : i32
    return %c0_i32, %c0_i32_0, %c0_i32_1 : i32, i32, i32
  }
  func.func @transform_4(%arg0: i32) -> (i32, i32) {
    %c0_i32 = arith.constant 0 : i32
    %c0_i32_0 = arith.constant 0 : i32
    %c0_i32_1 = arith.constant 0 : i32
    return %c0_i32, %c0_i32_0 : i32, i32
  }
  func.func @transform_5(%arg0: i32) -> (i32, i32, i32) {
    %c0_i32 = arith.constant 0 : i32
    %c0_i32_0 = arith.constant 0 : i32
    %c0_i32_1 = arith.constant 0 : i32
    return %arg0, %c0_i32, %c0_i32_0 : i32, i32, i32
  }
}

</mosaic_0001>

<llo_original>
// kernel: model_forward.1
$region0: #{model_forward.1}
  #allocation0 [shape = 'u32[]', space=smem, size = 0x4, offset = 0x4, fixed_abs, tag = 'smem constant byte address 0x4 - core index']
  #allocation1 [shape = 'u32[144,128]{1,0:T(1,128)}', space=vmem, size = 0x12000, scoped, tag = 'internal scratch']
  #allocation2 [shape = 'f32[192,16]{1,0:T(8,128)}', space=vmem, size = 0x18000, scoped, tag = 'scratch operand']
  #allocation3 [shape = 'f32[176,16]{1,0:T(8,128)}', space=vmem, size = 0x16000, scoped, tag = 'scratch operand']
  #allocation4 [shape = 'f32[40,16]{1,0:T(8,128)}', space=vmem, size = 0x5000, scoped, tag = 'scratch operand']
  %s0 = inlined_call_operand.vmem [shape: f32[1536,128], index: 0, kind: input, shape index: {}]
  %s1 = inlined_call_operand.vmem [shape: f32[128,16], index: 1, kind: input, shape index: {}]
  %s2 = inlined_call_operand.vmem [shape: f32[1,16], index: 2, kind: input, shape index: {}]
  %s3 = inlined_call_operand.vmem [shape: f32[25,16,128], index: 3, kind: input, shape index: {}]
  %s4 = inlined_call_operand.vmem [shape: f32[1,128], index: 4, kind: input, shape index: {}]
  %s5 = inlined_call_operand.vmem [shape: f32[8,1,128], index: 5, kind: output, shape index: {}]
  %s6 = sld [smem:[#allocation0]]
  $region60: #{model_forward.1} parent=0
    _
  %s8 = ssub.s32 1, %s6
  %s9 = scalar_select 0, %s8, %s6
  loop: start=0, step=1, limit=4
  $region2: #{model_forward.1} parent=0 // loop_pre_header
    _
  $region3: #{model_forward.1} parent=0 // loop_header
    %s11 = sphi 0, %s15
    %p12 = scmp.ge.s32.totalorder %s11, 4
    %s21 = sphi 0, %s23
    %s24 = sphi 0, %s21
    %s25 = sphi 0, %s24
    %s41 = sphi 0, %s25
    %s45 = sphi 0, %s45
    %s47 = sphi 0, %s45
    %s48 = sphi 0, %s47
    %s62 = sphi 0, %s48
    %s66 = sphi 0, %s66
    %s68 = sphi 0, %s66
    %s69 = sphi 0, %s68
    %s83 = sphi 0, %s69
    %s87 = sphi 0, %s87
    %s89 = sphi 0, %s87
    %s90 = sphi 0, %s89
    %s104 = sphi 0, %s90
    %s108 = sphi 0, %s108
    %s110 = sphi 0, %s108
    %s111 = sphi 0, %s110
    %s125 = sphi 0, %s111
    %s131 = sphi 0, %s133
    %s134 = sphi 0, %s131
    %s135 = sphi 0, %s134
    %s151 = sphi 0, %s135
  $region4: #{model_forward.1} parent=0 // loop_header_branch
    %14 = sbr.rel (%p12) target = $region8
  $region5: #{model_forward.1} parent=0 // loop_body
    %s16 = ssub.s32 %s11, 1
    %s17 = ssub.s32 %s11, 2
    %s18 = sadd.s32 %s11, 1
    %s19 = ssub.s32 %s11, %s18
    %p20 = scmp.eq.s32.totalorder %s19, 0
    %s22 = sadd.s32 %s21, 1
    %s23 = scalar_select %p20, %s21, %s22
    %p26 = pneg %p20
    %p27 = scmp.eq.s32.totalorder %s11, 1
    %p28 = por %p26, %p27
    %p29 = scmp.ne.s32.totalorder %s21, %s24
    %p30 = scmp.eq.s32.totalorder %s11, 0
    %p31 = por %p29, %p30
    %p32 = scmp.ne.s32.totalorder %s21, %s24
    %p33 = scmp.eq.s32.totalorder %s16, 1
    %p34 = por %p32, %p33
    %p35 = scmp.ne.s32.totalorder %s24, %s25
    %p36 = scmp.eq.s32.totalorder %s16, 0
    %p37 = por %p35, %p36
    %p38 = scmp.ne.s32.totalorder %s24, %s25
    %p39 = scmp.eq.s32.totalorder %s17, 1
    %p40 = por %p38, %p39
    %p42 = scmp.ne.s32.totalorder %s25, %s41
    %p43 = scmp.eq.s32.totalorder %s17, 0
    %p44 = por %p42, %p43
    %s46 = sadd.s32 %s45, 1
    %p49 = scmp.eq.s32.totalorder %s11, 1
    %p50 = scmp.ne.s32.totalorder %s45, %s47
    %p51 = scmp.eq.s32.totalorder %s11, 0
    %p52 = por %p50, %p51
    %p53 = scmp.ne.s32.totalorder %s45, %s47
    %p54 = scmp.eq.s32.totalorder %s16, 1
    %p55 = por %p53, %p54
    %p56 = scmp.ne.s32.totalorder %s47, %s48
    %p57 = scmp.eq.s32.totalorder %s16, 0
    %p58 = por %p56, %p57
    %p59 = scmp.ne.s32.totalorder %s47, %s48
    %p60 = scmp.eq.s32.totalorder %s17, 1
    %p61 = por %p59, %p60
    %p63 = scmp.ne.s32.totalorder %s48, %s62
    %p64 = scmp.eq.s32.totalorder %s17, 0
    %p65 = por %p63, %p64
    %s67 = sadd.s32 %s66, 1
    %p70 = scmp.eq.s32.totalorder %s11, 1
    %p71 = scmp.ne.s32.totalorder %s66, %s68
    %p72 = scmp.eq.s32.totalorder %s11, 0
    %p73 = por %p71, %p72
    %p74 = scmp.ne.s32.totalorder %s66, %s68
    %p75 = scmp.eq.s32.totalorder %s16, 1
    %p76 = por %p74, %p75
    %p77 = scmp.ne.s32.totalorder %s68, %s69
    %p78 = scmp.eq.s32.totalorder %s16, 0
    %p79 = por %p77, %p78
    %p80 = scmp.ne.s32.totalorder %s68, %s69
    %p81 = scmp.eq.s32.totalorder %s17, 1
    %p82 = por %p80, %p81
    %p84 = scmp.ne.s32.totalorder %s69, %s83
    %p85 = scmp.eq.s32.totalorder %s17, 0
    %p86 = por %p84, %p85
    %s88 = sadd.s32 %s87, 1
    %p91 = scmp.eq.s32.totalorder %s11, 1
    %p92 = scmp.ne.s32.totalorder %s87, %s89
    %p93 = scmp.eq.s32.totalorder %s11, 0
    %p94 = por %p92, %p93
    %p95 = scmp.ne.s32.totalorder %s87, %s89
    %p96 = scmp.eq.s32.totalorder %s16, 1
    %p97 = por %p95, %p96
    %p98 = scmp.ne.s32.totalorder %s89, %s90
    %p99 = scmp.eq.s32.totalorder %s16, 0
    %p100 = por %p98, %p99
    %p101 = scmp.ne.s32.totalorder %s89, %s90
    %p102 = scmp.eq.s32.totalorder %s17, 1
    %p103 = por %p101, %p102
    %p105 = scmp.ne.s32.totalorder %s90, %s104
    %p106 = scmp.eq.s32.totalorder %s17, 0
    %p107 = por %p105, %p106
    %s109 = sadd.s32 %s108, 1
    %p112 = scmp.eq.s32.totalorder %s11, 1
    %p113 = scmp.ne.s32.totalorder %s108, %s110
    %p114 = scmp.eq.s32.totalorder %s11, 0
    %p115 = por %p113, %p114
    %p116 = scmp.ne.s32.totalorder %s108, %s110
    %p117 = scmp.eq.s32.totalorder %s16, 1
    %p118 = por %p116, %p117
    %p119 = scmp.ne.s32.totalorder %s110, %s111
    %p120 = scmp.eq.s32.totalorder %s16, 0
    %p121 = por %p119, %p120
    %p122 = scmp.ne.s32.totalorder %s110, %s111
    %p123 = scmp.eq.s32.totalorder %s17, 1
    %p124 = por %p122, %p123
    %p126 = scmp.ne.s32.totalorder %s111, %s125
    %p127 = scmp.eq.s32.totalorder %s17, 0
    %p128 = por %p126, %p127
    %s129 = ssub.s32 %s11, %s18
    %p130 = scmp.eq.s32.totalorder %s129, 0
    %s132 = sadd.s32 %s131, 1
    %s133 = scalar_select %p130, %s131, %s132
    %p136 = pneg %p130
    %p137 = scmp.eq.s32.totalorder %s11, 1
    %p138 = por %p136, %p137
    %p139 = scmp.ne.s32.totalorder %s131, %s134
    %p140 = scmp.eq.s32.totalorder %s11, 0
    %p141 = por %p139, %p140
    %p142 = scmp.ne.s32.totalorder %s131, %s134
    %p143 = scmp.eq.s32.totalorder %s16, 1
    %p144 = por %p142, %p143
    %p145 = scmp.ne.s32.totalorder %s134, %s135
    %p146 = scmp.eq.s32.totalorder %s16, 0
    %p147 = por %p145, %p146
    %p148 = scmp.ne.s32.totalorder %s134, %s135
    %p149 = scmp.eq.s32.totalorder %s17, 1
    %p150 = por %p148, %p149
    %p152 = scmp.ne.s32.totalorder %s135, %s151
    %p153 = scmp.eq.s32.totalorder %s17, 0
    %p154 = por %p152, %p153
    %p155 = scmp.le.s32.totalorder 1, %s11
    %p156 = scmp.lt.s32.totalorder %s11, 3
    %p157 = pnand %p155, %p156
    %p158 = pneg %p157
    // Predicated region
    $region9: #{model_forward.1} parent=5 // pred_check
      _
    $region10: #{model_forward.1} parent=5 // pred_check_branch
      %160 = sbr.rel (%p157) target = $region12
    $region11: #{model_forward.1} parent=5 // pred_region
      %s161 = ssub.s32 %s11, 1
      // Predicated region
      $region13: #{model_forward.1} parent=11 // pred_check
        %p162 = pneg %p58
      $region14: #{model_forward.1} parent=11 // pred_check_branch
        %164 = sbr.rel (%p162) target = $region16
      $region15: #{model_forward.1} parent=11 // pred_region
        _
      $region16: #{model_forward.1} parent=11 // pred_fallthru
        _
      // Predicated region
      $region17: #{model_forward.1} parent=11 // pred_check
        %p165 = pneg %p79
      $region18: #{model_forward.1} parent=11 // pred_check_branch
        %167 = sbr.rel (%p165) target = $region20
      $region19: #{model_forward.1} parent=11 // pred_region
        _
      $region20: #{model_forward.1} parent=11 // pred_fallthru
        _
      // Predicated region
      $region21: #{model_forward.1} parent=11 // pred_check
        %p168 = pneg %p100
      $region22: #{model_forward.1} parent=11 // pred_check_branch
        %170 = sbr.rel (%p168) target = $region24
      $region23: #{model_forward.1} parent=11 // pred_region
        _
      $region24: #{model_forward.1} parent=11 // pred_fallthru
        _
      // Predicated region
      $region25: #{model_forward.1} parent=11 // pred_check
        %p171 = pneg %p121
      $region26: #{model_forward.1} parent=11 // pred_check_branch
        %173 = sbr.rel (%p171) target = $region28
      $region27: #{model_forward.1} parent=11 // pred_region
        _
      $region28: #{model_forward.1} parent=11 // pred_fallthru
        _
    $region12: #{model_forward.1} parent=5 // pred_fallthru
      _
    %p174 = scmp.lt.s32.totalorder %s11, 2
    // Predicated region
    $region29: #{model_forward.1} parent=5 // pred_check
      %p175 = pneg %p174
    $region30: #{model_forward.1} parent=5 // pred_check_branch
      %177 = sbr.rel (%p175) target = $region32
    $region31: #{model_forward.1} parent=5 // pred_region
      // Predicated region
      $region33: #{model_forward.1} parent=31 // pred_check
        %p178 = pneg %p31
      $region34: #{model_forward.1} parent=31 // pred_check_branch
        %180 = sbr.rel (%p178) target = $region36
      $region35: #{model_forward.1} parent=31 // pred_region
        %s181 = smul.u32 96, %s11
        %p182 = scmp.lt.s32.totalorder %s181, 191
        %s183 = scalar_select %p182, %s181, 191
        %s184 = smul.addr %s183, 8
        %s185 = scalar_lea.vmem %s0, %s184
        %s186 = smul.u32 96, %s11
      $region36: #{model_forward.1} parent=31 // pred_fallthru
        _
    $region32: #{model_forward.1} parent=5 // pred_fallthru
      _
    %p187 = scmp.le.s32.totalorder 1, %s11
    %p188 = scmp.lt.s32.totalorder %s11, 3
    %p189 = pnand %p187, %p188
    %p190 = pneg %p189
    // Predicated region
    $region37: #{model_forward.1} parent=5 // pred_check
      _
    $region38: #{model_forward.1} parent=5 // pred_check_branch
      %192 = sbr.rel (%p189) target = $region40
    $region39: #{model_forward.1} parent=5 // pred_region
      %s193 = ssub.s32 %s11, 1
      %s194 = smul.u32 96, %s16
      %p195 = scmp.lt.s32.totalorder %s194, 191
      %s196 = scalar_select %p195, %s194, 191
      %s197 = smul.addr %s196, 8
      %s198 = scalar_lea.vmem %s0, %s197
      %p199 = pneg %p37
      %p200 = pneg %p34
      %p201 = pneg %p58
      %p202 = pneg %p55
      %p203 = pneg %p79
      %p204 = pneg %p76
      %p205 = pneg %p100
      %p206 = pneg %p97
      %p207 = pneg %p121
      %p208 = pneg %p118
      %p209 = pneg %p147
      %p210 = pneg %p144
      %s211 = smul.u32 4, %s16
      %p212 = scmp.lt.s32.totalorder %s211, 7
      %s213 = scalar_select %p212, %s211, 7
      %s214 = scalar_lea.vmem %s5, %s213
      %s215 = smul.u32 96, %s16
      %p216 = scmp.lt.s32.totalorder %s215, 191
      %s217 = scalar_select %p216, %s215, 191
      %s218 = smul.addr %s217, 8
      %s219 = scalar_lea.vmem %s0, %s218
      %s220 = smul.u32 96, %s16
      %s221 = smul.u32 4, %s16
      %p222 = scmp.lt.s32.totalorder %s221, 7
      %s223 = scalar_select %p222, %s221, 7
      %s224 = scalar_lea.vmem %s5, %s223
      %s225 = smul.u32 4, %s16
      %v226 = vld [vmem:[%s2] sm:$0x1]
      %v227 = vld [vmem:[%s4] sm:$0x1]
      %v229 = vlaneseq
      %v230 = vshrl.u32 %v229, 7
      %v231 = vsub.s32 0, %v230
      %v232 = vrot.slane %v227, %v231
      loop: start=0, step=1, limit=4
      $region41: #{model_forward.1} parent=39 // loop_pre_header
        _
      $region42: #{model_forward.1} parent=39 // loop_header
        %s235 = sphi 0, %s239
        %p236 = scmp.ge.s32.totalorder %s235, 4
      $region43: #{model_forward.1} parent=39 // loop_header_branch
        %238 = sbr.rel (%p236) target = $region47
      $region44: #{model_forward.1} parent=39 // loop_body
        %s240 = smul.u32 %s235, 192
        %s241 = scalar_lea.vmem %s219, %s240
        %v242 = vld [vmem:[%s241] sm:$0xff]
        %v243 = vld [vmem:[%s241 + $0x8] sm:$0xff]
        %v244 = vld [vmem:[%s241 + $0x10] sm:$0xff]
        %v245 = vld [vmem:[%s241 + $0x18] sm:$0xff]
        %v246 = vld [vmem:[%s241 + $0x20] sm:$0xff]
        %v247 = vld [vmem:[%s241 + $0x28] sm:$0xff]
        %v248 = vld [vmem:[%s241 + $0x30] sm:$0xff]
        %v249 = vld [vmem:[%s241 + $0x38] sm:$0xff]
        %v250 = vld [vmem:[%s241 + $0x40] sm:$0xff]
        %v251 = vld [vmem:[%s241 + $0x48] sm:$0xff]
        %v252 = vld [vmem:[%s241 + $0x50] sm:$0xff]
        %v253 = vld [vmem:[%s241 + $0x58] sm:$0xff]
        %v254 = vld [vmem:[%s241 + $0x60] sm:$0xff]
        %v255 = vld [vmem:[%s241 + $0x68] sm:$0xff]
        %v256 = vld [vmem:[%s241 + $0x70] sm:$0xff]
        %v257 = vld [vmem:[%s241 + $0x78] sm:$0xff]
        %v258 = vld [vmem:[%s241 + $0x80] sm:$0xff]
        %v259 = vld [vmem:[%s241 + $0x88] sm:$0xff]
        %v260 = vld [vmem:[%s241 + $0x90] sm:$0xff]
        %v261 = vld [vmem:[%s241 + $0x98] sm:$0xff]
        %v262 = vld [vmem:[%s241 + $0xa0] sm:$0xff]
        %v263 = vld [vmem:[%s241 + $0xa8] sm:$0xff]
        %v264 = vld [vmem:[%s241 + $0xb0] sm:$0xff]
        %v265 = vld [vmem:[%s241 + $0xb8] sm:$0xff]
        %v266 = vtanh.pop %v242
        %v267 = vtanh.pop %v243
        %v268 = vtanh.pop %v244
        %v269 = vtanh.pop %v245
        %v270 = vtanh.pop %v246
        %v271 = vtanh.pop %v247
        %v272 = vtanh.pop %v248
        %v273 = vtanh.pop %v249
        %v274 = vtanh.pop %v250
        %v275 = vtanh.pop %v251
        %v276 = vtanh.pop %v252
        %v277 = vtanh.pop %v253
        %v278 = vtanh.pop %v254
        %v279 = vtanh.pop %v255
        %v280 = vtanh.pop %v256
        %v281 = vtanh.pop %v257
        %v282 = vtanh.pop %v258
        %v283 = vtanh.pop %v259
        %v284 = vtanh.pop %v260
        %v285 = vtanh.pop %v261
        %v286 = vtanh.pop %v262
        %v287 = vtanh.pop %v263
        %v288 = vtanh.pop %v264
        %v289 = vtanh.pop %v265
        %v290 = vld [vmem:[%s1] sm:$0xff]
        %v291 = vld [vmem:[%s1 + $0x8] sm:$0xff]
        %v292 = vld [vmem:[%s1 + $0x10] sm:$0xff]
        %v293 = vld [vmem:[%s1 + $0x18] sm:$0xff]
        %v294 = vld [vmem:[%s1 + $0x20] sm:$0xff]
        %v295 = vld [vmem:[%s1 + $0x28] sm:$0xff]
        %v296 = vld [vmem:[%s1 + $0x30] sm:$0xff]
        %v297 = vld [vmem:[%s1 + $0x38] sm:$0xff]
        %v298 = vld [vmem:[%s1 + $0x40] sm:$0xff]
        %v299 = vld [vmem:[%s1 + $0x48] sm:$0xff]
        %v300 = vld [vmem:[%s1 + $0x50] sm:$0xff]
        %v301 = vld [vmem:[%s1 + $0x58] sm:$0xff]
        %v302 = vld [vmem:[%s1 + $0x60] sm:$0xff]
        %v303 = vld [vmem:[%s1 + $0x68] sm:$0xff]
        %v304 = vld [vmem:[%s1 + $0x70] sm:$0xff]
        %v305 = vld [vmem:[%s1 + $0x78] sm:$0xff]
        %v307 = vlaneseq
        %v308 = vshrl.u32 %v307, 7
        %v309 = vsub.s32 0, %v308
        %v310 = vrot.slane %v226, %v309
        %312 = vmatprep.subr.mxu0 0.0
        %313 = vmatpush1.msra.mxu0 %v290
        %314 = vmatprep.subr.mxu0 0.0
        %315 = vmatpush1.msra.mxu0 %v291
        %316 = vmatprep.subr.mxu0 0.0
        %317 = vmatpush1.msra.mxu0 %v292
        %318 = vmatprep.subr.mxu0 0.0
        %319 = vmatpush1.msra.mxu0 %v293
        %320 = vmatprep.subr.mxu0 0.0
        %321 = vmatpush1.msra.mxu0 %v294
        %322 = vmatprep.subr.mxu0 0.0
        %323 = vmatpush1.msra.mxu0 %v295
        %324 = vmatprep.subr.mxu0 0.0
        %325 = vmatpush1.msra.mxu0 %v296
        %326 = vmatprep.subr.mxu0 0.0
        %327 = vmatpush1.msra.mxu0 %v297
        %328 = vmatprep.subr.mxu0 0.0
        %329 = vmatpush1.msra.mxu0 %v298
        %330 = vmatprep.subr.mxu0 0.0
        %331 = vmatpush1.msra.mxu0 %v299
        %332 = vmatprep.subr.mxu0 0.0
        %333 = vmatpush1.msra.mxu0 %v300
        %334 = vmatprep.subr.mxu0 0.0
        %335 = vmatpush1.msra.mxu0 %v301
        %336 = vmatprep.subr.mxu0 0.0
        %337 = vmatpush1.msra.mxu0 %v302
        %338 = vmatprep.subr.mxu0 0.0
        %339 = vmatpush1.msra.mxu0 %v303
        %340 = vmatprep.subr.mxu0 0.0
        %341 = vmatpush1.msra.mxu0 %v304
        %342 = vmatprep.subr.mxu0 0.0
        %343 = vmatpush1.msra.mxu0 %v305
        %344 = vmatprep.subr.mxu0 0.0
        %345 = vmatpush1.msra.mxu0 0.0
        %346 = vmatprep.subr.mxu0 0.0
        %347 = vmatpush1.msra.mxu0 0.0
        %348 = vmatprep.subr.mxu0 0.0
        %349 = vmatpush1.msra.mxu0 0.0
        %350 = vmatprep.subr.mxu0 0.0
        %351 = vmatpush1.msra.mxu0 0.0
        %352 = vmatprep.subr.mxu0 0.0
        %353 = vmatpush1.msra.mxu0 0.0
        %354 = vmatprep.subr.mxu0 0.0
        %355 = vmatpush1.msra.mxu0 0.0
        %356 = vmatprep.subr.mxu0 0.0
        %357 = vmatpush1.msra.mxu0 0.0
        %358 = vmatprep.subr.mxu0 0.0
        %359 = vmatpush1.msra.mxu0 0.0
        %360 = vmatprep.subr.mxu0 0.0
        %361 = vmatpush1.msra.mxu0 0.0
        %362 = vmatprep.subr.mxu0 0.0
        %363 = vmatpush1.msra.mxu0 0.0
        %364 = vmatprep.subr.mxu0 0.0
        %365 = vmatpush1.msra.mxu0 0.0
        %366 = vmatprep.subr.mxu0 0.0
        %367 = vmatpush1.msra.mxu0 0.0
        %368 = vmatprep.subr.mxu0 0.0
        %369 = vmatpush1.msra.mxu0 0.0
        %370 = vmatprep.subr.mxu0 0.0
        %371 = vmatpush1.msra.mxu0 0.0
        %372 = vmatprep.subr.mxu0 0.0
        %373 = vmatpush1.msra.mxu0 0.0
        %374 = vmatprep.subr.mxu0 0.0
        %375 = vmatpush1.msra.mxu0 0.0
        %376 = vmatprep.mubr.f32.mxu0 0.0
        %377 = vmatmul.mubr.f32.gmra.mrb[0].mxu0 %v266
        %v378 = vpop.f32.mrb[0].mxu0
        %v379 = vadd.f32 %v310, %v378
        %v380 = vpop.f32.mrb[0].mxu0
        %381 = vmatprep.mubr.f32.mxu0 0.0
        %382 = vmatmul.mubr.f32.gmra.mrb[0].mxu0 %v267
        %v383 = vpop.f32.mrb[0].mxu0
        %v384 = vadd.f32 %v310, %v383
        %v385 = vpop.f32.mrb[0].mxu0
        %386 = vmatprep.mubr.f32.mxu0 0.0
        %387 = vmatmul.mubr.f32.gmra.mrb[0].mxu0 %v268
        %v388 = vpop.f32.mrb[0].mxu0
        %v389 = vadd.f32 %v310, %v388
        %v390 = vpop.f32.mrb[0].mxu0
        %391 = vmatprep.mubr.f32.mxu0 0.0
        %392 = vmatmul.mubr.f32.gmra.mrb[0].mxu0 %v269
        %v393 = vpop.f32.mrb[0].mxu0
        %v394 = vadd.f32 %v310, %v393
        %v395 = vpop.f32.mrb[0].mxu0
        %396 = vmatprep.mubr.f32.mxu0 0.0
        %397 = vmatmul.mubr.f32.gmra.mrb[0].mxu0 %v270
        %v398 = vpop.f32.mrb[0].mxu0
        %v399 = vadd.f32 %v310, %v398
        %v400 = vpop.f32.mrb[0].mxu0
        %401 = vmatprep.mubr.f32.mxu0 0.0
        %402 = vmatmul.mubr.f32.gmra.mrb[0].mxu0 %v271
        %v403 = vpop.f32.mrb[0].mxu0
        %v404 = vadd.f32 %v310, %v403
        %v405 = vpop.f32.mrb[0].mxu0
        %406 = vmatprep.mubr.f32.mxu0 0.0
        %407 = vmatmul.mubr.f32.gmra.mrb[0].mxu0 %v272
        %v408 = vpop.f32.mrb[0].mxu0
        %v409 = vadd.f32 %v310, %v408
        %v410 = vpop.f32.mrb[0].mxu0
        %411 = vmatprep.mubr.f32.mxu0 0.0
        %412 = vmatmul.mubr.f32.gmra.mrb[0].mxu0 %v273
        %v413 = vpop.f32.mrb[0].mxu0
        %v414 = vadd.f32 %v310, %v413
        %v415 = vpop.f32.mrb[0].mxu0
        %416 = vmatprep.mubr.f32.mxu0 0.0
        %417 = vmatmul.mubr.f32.gmra.mrb[0].mxu0 %v274
        %v418 = vpop.f32.mrb[0].mxu0
        %v419 = vadd.f32 %v310, %v418
        %v420 = vpop.f32.mrb[0].mxu0
        %421 = vmatprep.mubr.f32.mxu0 0.0
        %422 = vmatmul.mubr.f32.gmra.mrb[0].mxu0 %v275
        %v423 = vpop.f32.mrb[0].mxu0
        %v424 = vadd.f32 %v310, %v423
        %v425 = vpop.f32.mrb[0].mxu0
        %426 = vmatprep.mubr.f32.mxu0 0.0
        %427 = vmatmul.mubr.f32.gmra.mrb[0].mxu0 %v276
        %v428 = vpop.f32.mrb[0].mxu0
        %v429 = vadd.f32 %v310, %v428
        %v430 = vpop.f32.mrb[0].mxu0
        %431 = vmatprep.mubr.f32.mxu0 0.0
        %432 = vmatmul.mubr.f32.gmra.mrb[0].mxu0 %v277
        %v433 = vpop.f32.mrb[0].mxu0
        %v434 = vadd.f32 %v310, %v433
        %v435 = vpop.f32.mrb[0].mxu0
        %436 = vmatprep.mubr.f32.mxu0 0.0
        %437 = vmatmul.mubr.f32.gmra.mrb[0].mxu0 %v278
        %v438 = vpop.f32.mrb[0].mxu0
        %v439 = vadd.f32 %v310, %v438
        %v440 = vpop.f32.mrb[0].mxu0
        %441 = vmatprep.mubr.f32.mxu0 0.0
        %442 = vmatmul.mubr.f32.gmra.mrb[0].mxu0 %v279
        %v443 = vpop.f32.mrb[0].mxu0
        %v444 = vadd.f32 %v310, %v443
        %v445 = vpop.f32.mrb[0].mxu0
        %446 = vmatprep.mubr.f32.mxu0 0.0
        %447 = vmatmul.mubr.f32.gmra.mrb[0].mxu0 %v280
        %v448 = vpop.f32.mrb[0].mxu0
        %v449 = vadd.f32 %v310, %v448
        %v450 = vpop.f32.mrb[0].mxu0
        %451 = vmatprep.mubr.f32.mxu0 0.0
        %452 = vmatmul.mubr.f32.gmra.mrb[0].mxu0 %v281
        %v453 = vpop.f32.mrb[0].mxu0
        %v454 = vadd.f32 %v310, %v453
        %v455 = vpop.f32.mrb[0].mxu0
        %456 = vmatprep.mubr.f32.mxu0 0.0
        %457 = vmatmul.mubr.f32.gmra.mrb[0].mxu0 %v282
        %v458 = vpop.f32.mrb[0].mxu0
        %v459 = vadd.f32 %v310, %v458
        %v460 = vpop.f32.mrb[0].mxu0
        %461 = vmatprep.mubr.f32.mxu0 0.0
        %462 = vmatmul.mubr.f32.gmra.mrb[0].mxu0 %v283
        %v463 = vpop.f32.mrb[0].mxu0
        %v464 = vadd.f32 %v310, %v463
        %v465 = vpop.f32.mrb[0].mxu0
        %466 = vmatprep.mubr.f32.mxu0 0.0
        %467 = vmatmul.mubr.f32.gmra.mrb[0].mxu0 %v284
        %v468 = vpop.f32.mrb[0].mxu0
        %v469 = vadd.f32 %v310, %v468
        %v470 = vpop.f32.mrb[0].mxu0
        %471 = vmatprep.mubr.f32.mxu0 0.0
        %472 = vmatmul.mubr.f32.gmra.mrb[0].mxu0 %v285
        %v473 = vpop.f32.mrb[0].mxu0
        %v474 = vadd.f32 %v310, %v473
        %v475 = vpop.f32.mrb[0].mxu0
        %476 = vmatprep.mubr.f32.mxu0 0.0
        %477 = vmatmul.mubr.f32.gmra.mrb[0].mxu0 %v286
        %v478 = vpop.f32.mrb[0].mxu0
        %v479 = vadd.f32 %v310, %v478
        %v480 = vpop.f32.mrb[0].mxu0
        %481 = vmatprep.mubr.f32.mxu0 0.0
        %482 = vmatmul.mubr.f32.gmra.mrb[0].mxu0 %v287
        %v483 = vpop.f32.mrb[0].mxu0
        %v484 = vadd.f32 %v310, %v483
        %v485 = vpop.f32.mrb[0].mxu0
        %486 = vmatprep.mubr.f32.mxu0 0.0
        %487 = vmatmul.mubr.f32.gmra.mrb[0].mxu0 %v288
        %v488 = vpop.f32.mrb[0].mxu0
        %v489 = vadd.f32 %v310, %v488
        %v490 = vpop.f32.mrb[0].mxu0
        %491 = vmatprep.mubr.f32.mxu0 0.0
        %492 = vmatmul.mubr.f32.gmra.mrb[0].mxu0 %v289
        %v493 = vpop.f32.mrb[0].mxu0
        %v494 = vadd.f32 %v310, %v493
        %v495 = vpop.f32.mrb[0].mxu0
        %496 = vdwg.mxu0
        %v497 = vmax.f32 %v379, 0.0
        %v498 = vmax.f32 %v384, 0.0
        %v499 = vmax.f32 %v389, 0.0
        %v500 = vmax.f32 %v394, 0.0
        %v501 = vmax.f32 %v399, 0.0
        %v502 = vmax.f32 %v404, 0.0
        %v503 = vmax.f32 %v409, 0.0
        %v504 = vmax.f32 %v414, 0.0
        %v505 = vmax.f32 %v419, 0.0
        %v506 = vmax.f32 %v424, 0.0
        %v507 = vmax.f32 %v429, 0.0
        %v508 = vmax.f32 %v434, 0.0
        %v509 = vmax.f32 %v439, 0.0
        %v510 = vmax.f32 %v444, 0.0
        %v511 = vmax.f32 %v449, 0.0
        %v512 = vmax.f32 %v454, 0.0
        %v513 = vmax.f32 %v459, 0.0
        %v514 = vmax.f32 %v464, 0.0
        %v515 = vmax.f32 %v469, 0.0
        %v516 = vmax.f32 %v474, 0.0
        %v517 = vmax.f32 %v479, 0.0
        %v518 = vmax.f32 %v484, 0.0
        %v519 = vmax.f32 %v489, 0.0
        %v520 = vmax.f32 %v494, 0.0
        %vm521 = vcmask 130048
        %522 = vst.msk [vmem:[#allocation2] sm:$0xff] %vm521, %v497
        %523 = vst.msk [vmem:[#allocation2 + $0x8] sm:$0xff] %vm521, %v498
        %524 = vst.msk [vmem:[#allocation2 + $0x10] sm:$0xff] %vm521, %v499
        %525 = vst.msk [vmem:[#allocation2 + $0x18] sm:$0xff] %vm521, %v500
        %526 = vst.msk [vmem:[#allocation2 + $0x20] sm:$0xff] %vm521, %v501
        %527 = vst.msk [vmem:[#allocation2 + $0x28] sm:$0xff] %vm521, %v502
        %528 = vst.msk [vmem:[#allocation2 + $0x30] sm:$0xff] %vm521, %v503
        %529 = vst.msk [vmem:[#allocation2 + $0x38] sm:$0xff] %vm521, %v504
        %530 = vst.msk [vmem:[#allocation2 + $0x40] sm:$0xff] %vm521, %v505
        %531 = vst.msk [vmem:[#allocation2 + $0x48] sm:$0xff] %vm521, %v506
        %532 = vst.msk [vmem:[#allocation2 + $0x50] sm:$0xff] %vm521, %v507
        %533 = vst.msk [vmem:[#allocation2 + $0x58] sm:$0xff] %vm521, %v508
        %534 = vst.msk [vmem:[#allocation2 + $0x60] sm:$0xff] %vm521, %v509
        %535 = vst.msk [vmem:[#allocation2 + $0x68] sm:$0xff] %vm521, %v510
        %536 = vst.msk [vmem:[#allocation2 + $0x70] sm:$0xff] %vm521, %v511
        %537 = vst.msk [vmem:[#allocation2 + $0x78] sm:$0xff] %vm521, %v512
        %538 = vst.msk [vmem:[#allocation2 + $0x80] sm:$0xff] %vm521, %v513
        %539 = vst.msk [vmem:[#allocation2 + $0x88] sm:$0xff] %vm521, %v514
        %540 = vst.msk [vmem:[#allocation2 + $0x90] sm:$0xff] %vm521, %v515
        %541 = vst.msk [vmem:[#allocation2 + $0x98] sm:$0xff] %vm521, %v516
        %542 = vst.msk [vmem:[#allocation2 + $0xa0] sm:$0xff] %vm521, %v517
        %543 = vst.msk [vmem:[#allocation2 + $0xa8] sm:$0xff] %vm521, %v518
        %544 = vst.msk [vmem:[#allocation2 + $0xb0] sm:$0xff] %vm521, %v519
        %545 = vst.msk [vmem:[#allocation2 + $0xb8] sm:$0xff] %vm521, %v520
        %v546 = vld [vmem:[#allocation2] sm:$0xff]
        %v547 = vld [vmem:[#allocation2 + $0x8] sm:$0xff]
        %v548 = vld [vmem:[#allocation2 + $0x10] sm:$0xff]
        %v549 = vld [vmem:[#allocation2 + $0x18] sm:$0xff]
        %v550 = vld [vmem:[#allocation2 + $0x20] sm:$0xff]
        %v551 = vld [vmem:[#allocation2 + $0x28] sm:$0xff]
        %v552 = vld [vmem:[#allocation2 + $0x30] sm:$0xff]
        %v553 = vld [vmem:[#allocation2 + $0x38] sm:$0xff]
        %v554 = vld [vmem:[#allocation2 + $0x40] sm:$0xff]
        %v555 = vld [vmem:[#allocation2 + $0x48] sm:$0xff]
        %v556 = vld [vmem:[#allocation2 + $0x50] sm:$0xff]
        %v557 = vld [vmem:[#allocation2 + $0x58] sm:$0xff]
        %v558 = vld [vmem:[#allocation2 + $0x60] sm:$0xff]
        %v559 = vld [vmem:[#allocation2 + $0x68] sm:$0xff]
        %v560 = vld [vmem:[#allocation2 + $0x70] sm:$0xff]
        %v561 = vld [vmem:[#allocation2 + $0x78] sm:$0xff]
        %v562 = vld [vmem:[#allocation2 + $0x80] sm:$0xff]
        %v563 = vld [vmem:[#allocation2 + $0x88] sm:$0xff]
        %v564 = vld [vmem:[#allocation2 + $0x90] sm:$0xff]
        %v565 = vld [vmem:[#allocation2 + $0x98] sm:$0xff]
        %v566 = vld [vmem:[#allocation2 + $0xa0] sm:$0xff]
        %v567 = vld [vmem:[#allocation2 + $0xa8] sm:$0xff]
        %v568 = vld [vmem:[#allocation2 + $0xb0] sm:$0xff]
        %v569 = vld [vmem:[#allocation2 + $0xb8] sm:$0xff]
        %v570 = vmax.f32 %v546, %v548
        %v571 = vmax.f32 %v547, %v549
        %v572 = vmax.f32 %v548, %v550
        %v573 = vmax.f32 %v549, %v551
        %v574 = vmax.f32 %v550, %v552
        %v575 = vmax.f32 %v551, %v553
        %v576 = vmax.f32 %v552, %v554
        %v577 = vmax.f32 %v553, %v555
        %v578 = vmax.f32 %v554, %v556
        %v579 = vmax.f32 %v555, %v557
        %v580 = vmax.f32 %v556, %v558
        %v581 = vmax.f32 %v557, %v559
        %v582 = vmax.f32 %v558, %v560
        %v583 = vmax.f32 %v559, %v561
        %v584 = vmax.f32 %v560, %v562
        %v585 = vmax.f32 %v561, %v563
        %v586 = vmax.f32 %v562, %v564
        %v587 = vmax.f32 %v563, %v565
        %v588 = vmax.f32 %v564, %v566
        %v589 = vmax.f32 %v565, %v567
        %v590 = vmax.f32 %v566, %v568
        %v591 = vmax.f32 %v567, %v569
        %592 = vst.msk [vmem:[#allocation3] sm:$0xff] %vm521, %v570
        %593 = vst.msk [vmem:[#allocation3 + $0x8] sm:$0xff] %vm521, %v571
        %594 = vst.msk [vmem:[#allocation3 + $0x10] sm:$0xff] %vm521, %v572
        %595 = vst.msk [vmem:[#allocation3 + $0x18] sm:$0xff] %vm521, %v573
        %596 = vst.msk [vmem:[#allocation3 + $0x20] sm:$0xff] %vm521, %v574
        %597 = vst.msk [vmem:[#allocation3 + $0x28] sm:$0xff] %vm521, %v575
        %598 = vst.msk [vmem:[#allocation3 + $0x30] sm:$0xff] %vm521, %v576
        %599 = vst.msk [vmem:[#allocation3 + $0x38] sm:$0xff] %vm521, %v577
        %600 = vst.msk [vmem:[#allocation3 + $0x40] sm:$0xff] %vm521, %v578
        %601 = vst.msk [vmem:[#allocation3 + $0x48] sm:$0xff] %vm521, %v579
        %602 = vst.msk [vmem:[#allocation3 + $0x50] sm:$0xff] %vm521, %v580
        %603 = vst.msk [vmem:[#allocation3 + $0x58] sm:$0xff] %vm521, %v581
        %604 = vst.msk [vmem:[#allocation3 + $0x60] sm:$0xff] %vm521, %v582
        %605 = vst.msk [vmem:[#allocation3 + $0x68] sm:$0xff] %vm521, %v583
        %606 = vst.msk [vmem:[#allocation3 + $0x70] sm:$0xff] %vm521, %v584
        %607 = vst.msk [vmem:[#allocation3 + $0x78] sm:$0xff] %vm521, %v585
        %608 = vst.msk [vmem:[#allocation3 + $0x80] sm:$0xff] %vm521, %v586
        %609 = vst.msk [vmem:[#allocation3 + $0x88] sm:$0xff] %vm521, %v587
        %610 = vst.msk [vmem:[#allocation3 + $0x90] sm:$0xff] %vm521, %v588
        %611 = vst.msk [vmem:[#allocation3 + $0x98] sm:$0xff] %vm521, %v589
        %612 = vst.msk [vmem:[#allocation3 + $0xa0] sm:$0xff] %vm521, %v590
        %613 = vst.msk [vmem:[#allocation3 + $0xa8] sm:$0xff] %vm521, %v591
        %v614 = vld [vmem:[#allocation3] ss:$2 sm:$0x3f]
        %s615 = scalar_lea.vmem [#allocation3], 1
        %v616 = vld [vmem:[%s615] ss:$2 sm:$0x3f]
        %v617 = vmax.f32 %v614, %v616
        %vm618 = vcmask 128000
        %619 = vst.msk [vmem:[#allocation4] sm:$0x3f] %vm618, %v617
        %s620 = scalar_lea.vmem [#allocation3], 32
        %v621 = vld [vmem:[%s620] ss:$2 sm:$0x3f]
        %s622 = scalar_lea.vmem [#allocation3], 33
        %v623 = vld [vmem:[%s622] ss:$2 sm:$0x3f]
        %v624 = vmax.f32 %v621, %v623
        %625 = vst.msk [vmem:[#allocation4 + $0x6] sm:$0x3f] %vm618, %v624
        %s626 = scalar_lea.vmem [#allocation3], 64
        %v627 = vld [vmem:[%s626] ss:$2 sm:$0x3f]
        %s628 = scalar_lea.vmem [#allocation3], 65
        %v629 = vld [vmem:[%s628] ss:$2 sm:$0x3f]
        %v630 = vmax.f32 %v627, %v629
        %631 = vst.msk [vmem:[#allocation4 + $0xc] sm:$0x3f] %vm618, %v630
        %s632 = scalar_lea.vmem [#allocation3], 96
        %v633 = vld [vmem:[%s632] ss:$2 sm:$0x3f]
        %s634 = scalar_lea.vmem [#allocation3], 97
        %v635 = vld [vmem:[%s634] ss:$2 sm:$0x3f]
        %v636 = vmax.f32 %v633, %v635
        %637 = vst.msk [vmem:[#allocation4 + $0x12] sm:$0x3f] %vm618, %v636
        %s638 = scalar_lea.vmem [#allocation3], 128
        %v639 = vld [vmem:[%s638] ss:$2 sm:$0x3f]
        %s640 = scalar_lea.vmem [#allocation3], 129
        %v641 = vld [vmem:[%s640] ss:$2 sm:$0x3f]
        %v642 = vmax.f32 %v639, %v641
        %643 = vst.msk [vmem:[#allocation4 + $0x18] sm:$0x3f] %vm618, %v642
        %s644 = scalar_lea.vmem [#allocation3], 160
        %v645 = vld [vmem:[%s644] ss:$2 sm:$0x3f]
        %s646 = scalar_lea.vmem [#allocation3], 161
        %v647 = vld [vmem:[%s646] ss:$2 sm:$0x3f]
        %v648 = vmax.f32 %v645, %v647
        %649 = vst.msk [vmem:[#allocation4 + $0x1e] sm:$0x3f] %vm618, %v648
        %v650 = vld [vmem:[#allocation4] sm:$0xff]
        %v651 = vld [vmem:[%s3] sm:$0xff]
        %v652 = vld [vmem:[%s3 + $0x8] sm:$0xff]
        %v654 = vsel %vm521, %v650, 0
        %656 = vmatprep.subr.mxu0 0.0
        %657 = vmatpush1.msra.mxu0 %v651
        %658 = vmatprep.subr.mxu0 0.0
        %659 = vmatpush1.msra.mxu0 %v652
        %660 = vmatprep.subr.mxu0 0.0
        %661 = vmatpush1.msra.mxu0 0.0
        %662 = vmatprep.subr.mxu0 0.0
        %663 = vmatpush1.msra.mxu0 0.0
        %664 = vmatprep.subr.mxu0 0.0
        %665 = vmatpush1.msra.mxu0 0.0
        %666 = vmatprep.subr.mxu0 0.0
        %667 = vmatpush1.msra.mxu0 0.0
        %668 = vmatprep.subr.mxu0 0.0
        %669 = vmatpush1.msra.mxu0 0.0
        %670 = vmatprep.subr.mxu0 0.0
        %671 = vmatpush1.msra.mxu0 0.0
        %672 = vmatprep.subr.mxu0 0.0
        %673 = vmatpush1.msra.mxu0 0.0
        %674 = vmatprep.subr.mxu0 0.0
        %675 = vmatpush1.msra.mxu0 0.0
        %676 = vmatprep.subr.mxu0 0.0
        %677 = vmatpush1.msra.mxu0 0.0
        %678 = vmatprep.subr.mxu0 0.0
        %679 = vmatpush1.msra.mxu0 0.0
        %680 = vmatprep.subr.mxu0 0.0
        %681 = vmatpush1.msra.mxu0 0.0
        %682 = vmatprep.subr.mxu0 0.0
        %683 = vmatpush1.msra.mxu0 0.0
        %684 = vmatprep.subr.mxu0 0.0
        %685 = vmatpush1.msra.mxu0 0.0
        %686 = vmatprep.subr.mxu0 0.0
        %687 = vmatpush1.msra.mxu0 0.0
        %688 = vmatprep.subr.mxu0 0.0
        %689 = vmatpush1.msra.mxu0 0.0
        %690 = vmatprep.subr.mxu0 0.0
        %691 = vmatpush1.msra.mxu0 0.0
        %692 = vmatprep.subr.mxu0 0.0
        %693 = vmatpush1.msra.mxu0 0.0
        %694 = vmatprep.subr.mxu0 0.0
        %695 = vmatpush1.msra.mxu0 0.0
        %696 = vmatprep.subr.mxu0 0.0
        %697 = vmatpush1.msra.mxu0 0.0
        %698 = vmatprep.subr.mxu0 0.0
        %699 = vmatpush1.msra.mxu0 0.0
        %700 = vmatprep.subr.mxu0 0.0
        %701 = vmatpush1.msra.mxu0 0.0
        %702 = vmatprep.subr.mxu0 0.0
        %703 = vmatpush1.msra.mxu0 0.0
        %704 = vmatprep.subr.mxu0 0.0
        %705 = vmatpush1.msra.mxu0 0.0
        %706 = vmatprep.subr.mxu0 0.0
        %707 = vmatpush1.msra.mxu0 0.0
        %708 = vmatprep.subr.mxu0 0.0
        %709 = vmatpush1.msra.mxu0 0.0
        %710 = vmatprep.subr.mxu0 0.0
        %711 = vmatpush1.msra.mxu0 0.0
        %712 = vmatprep.subr.mxu0 0.0
        %713 = vmatpush1.msra.mxu0 0.0
        %714 = vmatprep.subr.mxu0 0.0
        %715 = vmatpush1.msra.mxu0 0.0
        %716 = vmatprep.subr.mxu0 0.0
        %717 = vmatpush1.msra.mxu0 0.0
        %718 = vmatprep.subr.mxu0 0.0
        %719 = vmatpush1.msra.mxu0 0.0
        %720 = vmatprep.mubr.f32.mxu0 0.0
        %721 = vmatmul.mubr.f32.gmra.mrb[0].mxu0 %v654
        %v722 = vpop.f32.mrb[0].mxu0
        %v723 = vadd.f32 0.0, %v722
        %v724 = vpop.f32.mrb[0].mxu0
        %725 = vdwg.mxu0
        %v726 = vadd.f32 %v232, %v723
        %v727 = vld [vmem:[#allocation4 + $0x1] sm:$0xff]
        %s728 = scalar_lea.vmem %s3, 16
        %v729 = vld [vmem:[%s728] sm:$0xff]
        %v730 = vld [vmem:[%s728 + $0x8] sm:$0xff]
        %v732 = vsel %vm521, %v727, 0
        %734 = vmatprep.subr.mxu0 0.0
        %735 = vmatpush1.msra.mxu0 %v729
        %736 = vmatprep.subr.mxu0 0.0
        %737 = vmatpush1.msra.mxu0 %v730
        %738 = vmatprep.subr.mxu0 0.0
        %739 = vmatpush1.msra.mxu0 0.0
        %740 = vmatprep.subr.mxu0 0.0
        %741 = vmatpush1.msra.mxu0 0.0
        %742 = vmatprep.subr.mxu0 0.0
        %743 = vmatpush1.msra.mxu0 0.0
        %744 = vmatprep.subr.mxu0 0.0
        %745 = vmatpush1.msra.mxu0 0.0
        %746 = vmatprep.subr.mxu0 0.0
        %747 = vmatpush1.msra.mxu0 0.0
        %748 = vmatprep.subr.mxu0 0.0
        %749 = vmatpush1.msra.mxu0 0.0
        %750 = vmatprep.subr.mxu0 0.0
        %751 = vmatpush1.msra.mxu0 0.0
        %752 = vmatprep.subr.mxu0 0.0
        %753 = vmatpush1.msra.mxu0 0.0
        %754 = vmatprep.subr.mxu0 0.0
        %755 = vmatpush1.msra.mxu0 0.0
        %756 = vmatprep.subr.mxu0 0.0
        %757 = vmatpush1.msra.mxu0 0.0
        %758 = vmatprep.subr.mxu0 0.0
        %759 = vmatpush1.msra.mxu0 0.0
        %760 = vmatprep.subr.mxu0 0.0
        %761 = vmatpush1.msra.mxu0 0.0
        %762 = vmatprep.subr.mxu0 0.0
        %763 = vmatpush1.msra.mxu0 0.0
        %764 = vmatprep.subr.mxu0 0.0
        %765 = vmatpush1.msra.mxu0 0.0
        %766 = vmatprep.subr.mxu0 0.0
        %767 = vmatpush1.msra.mxu0 0.0
        %768 = vmatprep.subr.mxu0 0.0
        %769 = vmatpush1.msra.mxu0 0.0
        %770 = vmatprep.subr.mxu0 0.0
        %771 = vmatpush1.msra.mxu0 0.0
        %772 = vmatprep.subr.mxu0 0.0
        %773 = vmatpush1.msra.mxu0 0.0
        %774 = vmatprep.subr.mxu0 0.0
        %775 = vmatpush1.msra.mxu0 0.0
        %776 = vmatprep.subr.mxu0 0.0
        %777 = vmatpush1.msra.mxu0 0.0
        %778 = vmatprep.subr.mxu0 0.0
        %779 = vmatpush1.msra.mxu0 0.0
        %780 = vmatprep.subr.mxu0 0.0
        %781 = vmatpush1.msra.mxu0 0.0
        %782 = vmatprep.subr.mxu0 0.0
        %783 = vmatpush1.msra.mxu0 0.0
        %784 = vmatprep.subr.mxu0 0.0
        %785 = vmatpush1.msra.mxu0 0.0
        %786 = vmatprep.subr.mxu0 0.0
        %787 = vmatpush1.msra.mxu0 0.0
        %788 = vmatprep.subr.mxu0 0.0
        %789 = vmatpush1.msra.mxu0 0.0
        %790 = vmatprep.subr.mxu0 0.0
        %791 = vmatpush1.msra.mxu0 0.0
        %792 = vmatprep.subr.mxu0 0.0
        %793 = vmatpush1.msra.mxu0 0.0
        %794 = vmatprep.subr.mxu0 0.0
        %795 = vmatpush1.msra.mxu0 0.0
        %796 = vmatprep.subr.mxu0 0.0
        %797 = vmatpush1.msra.mxu0 0.0
        %798 = vmatprep.mubr.f32.mxu0 0.0
        %799 = vmatmul.mubr.f32.gmra.mrb[0].mxu0 %v732
        %v800 = vpop.f32.mrb[0].mxu0
        %v801 = vadd.f32 0.0, %v800
        %v802 = vpop.f32.mrb[0].mxu0
        %803 = vdwg.mxu0
        %v804 = vadd.f32 %v726, %v801
        %v805 = vld [vmem:[#allocation4 + $0x2] sm:$0xff]
        %s806 = scalar_lea.vmem %s3, 32
        %v807 = vld [vmem:[%s806] sm:$0xff]
        %v808 = vld [vmem:[%s806 + $0x8] sm:$0xff]
        %v810 = vsel %vm521, %v805, 0
        %812 = vmatprep.subr.mxu0 0.0
        %813 = vmatpush1.msra.mxu0 %v807
        %814 = vmatprep.subr.mxu0 0.0
        %815 = vmatpush1.msra.mxu0 %v808
        %816 = vmatprep.subr.mxu0 0.0
        %817 = vmatpush1.msra.mxu0 0.0
        %818 = vmatprep.subr.mxu0 0.0
        %819 = vmatpush1.msra.mxu0 0.0
        %820 = vmatprep.subr.mxu0 0.0
        %821 = vmatpush1.msra.mxu0 0.0
        %822 = vmatprep.subr.mxu0 0.0
        %823 = vmatpush1.msra.mxu0 0.0
        %824 = vmatprep.subr.mxu0 0.0
        %825 = vmatpush1.msra.mxu0 0.0
        %826 = vmatprep.subr.mxu0 0.0
        %827 = vmatpush1.msra.mxu0 0.0
        %828 = vmatprep.subr.mxu0 0.0
        %829 = vmatpush1.msra.mxu0 0.0
        %830 = vmatprep.subr.mxu0 0.0
        %831 = vmatpush1.msra.mxu0 0.0
        %832 = vmatprep.subr.mxu0 0.0
        %833 = vmatpush1.msra.mxu0 0.0
        %834 = vmatprep.subr.mxu0 0.0
        %835 = vmatpush1.msra.mxu0 0.0
        %836 = vmatprep.subr.mxu0 0.0
        %837 = vmatpush1.msra.mxu0 0.0
        %838 = vmatprep.subr.mxu0 0.0
        %839 = vmatpush1.msra.mxu0 0.0
        %840 = vmatprep.subr.mxu0 0.0
        %841 = vmatpush1.msra.mxu0 0.0
        %842 = vmatprep.subr.mxu0 0.0
        %843 = vmatpush1.msra.mxu0 0.0
        %844 = vmatprep.subr.mxu0 0.0
        %845 = vmatpush1.msra.mxu0 0.0
        %846 = vmatprep.subr.mxu0 0.0
        %847 = vmatpush1.msra.mxu0 0.0
        %848 = vmatprep.subr.mxu0 0.0
        %849 = vmatpush1.msra.mxu0 0.0
        %850 = vmatprep.subr.mxu0 0.0
        %851 = vmatpush1.msra.mxu0 0.0
        %852 = vmatprep.subr.mxu0 0.0
        %853 = vmatpush1.msra.mxu0 0.0
        %854 = vmatprep.subr.mxu0 0.0
        %855 = vmatpush1.msra.mxu0 0.0
        %856 = vmatprep.subr.mxu0 0.0
        %857 = vmatpush1.msra.mxu0 0.0
        %858 = vmatprep.subr.mxu0 0.0
        %859 = vmatpush1.msra.mxu0 0.0
        %860 = vmatprep.subr.mxu0 0.0
        %861 = vmatpush1.msra.mxu0 0.0
        %862 = vmatprep.subr.mxu0 0.0
        %863 = vmatpush1.msra.mxu0 0.0
        %864 = vmatprep.subr.mxu0 0.0
        %865 = vmatpush1.msra.mxu0 0.0
        %866 = vmatprep.subr.mxu0 0.0
        %867 = vmatpush1.msra.mxu0 0.0
        %868 = vmatprep.subr.mxu0 0.0
        %869 = vmatpush1.msra.mxu0 0.0
        %870 = vmatprep.subr.mxu0 0.0
        %871 = vmatpush1.msra.mxu0 0.0
        %872 = vmatprep.subr.mxu0 0.0
        %873 = vmatpush1.msra.mxu0 0.0
        %874 = vmatprep.subr.mxu0 0.0
        %875 = vmatpush1.msra.mxu0 0.0
        %876 = vmatprep.mubr.f32.mxu0 0.0
        %877 = vmatmul.mubr.f32.gmra.mrb[0].mxu0 %v810
        %v878 = vpop.f32.mrb[0].mxu0
        %v879 = vadd.f32 0.0, %v878
        %v880 = vpop.f32.mrb[0].mxu0
        %881 = vdwg.mxu0
        %v882 = vadd.f32 %v804, %v879
        %v883 = vld [vmem:[#allocation4 + $0x3] sm:$0xff]
        %s884 = scalar_lea.vmem %s3, 48
        %v885 = vld [vmem:[%s884] sm:$0xff]
        %v886 = vld [vmem:[%s884 + $0x8] sm:$0xff]
        %v888 = vsel %vm521, %v883, 0
        %890 = vmatprep.subr.mxu0 0.0
        %891 = vmatpush1.msra.mxu0 %v885
        %892 = vmatprep.subr.mxu0 0.0
        %893 = vmatpush1.msra.mxu0 %v886
        %894 = vmatprep.subr.mxu0 0.0
        %895 = vmatpush1.msra.mxu0 0.0
        %896 = vmatprep.subr.mxu0 0.0
        %897 = vmatpush1.msra.mxu0 0.0
        %898 = vmatprep.subr.mxu0 0.0
        %899 = vmatpush1.msra.mxu0 0.0
        %900 = vmatprep.subr.mxu0 0.0
        %901 = vmatpush1.msra.mxu0 0.0
        %902 = vmatprep.subr.mxu0 0.0
        %903 = vmatpush1.msra.mxu0 0.0
        %904 = vmatprep.subr.mxu0 0.0
        %905 = vmatpush1.msra.mxu0 0.0
        %906 = vmatprep.subr.mxu0 0.0
        %907 = vmatpush1.msra.mxu0 0.0
        %908 = vmatprep.subr.mxu0 0.0
        %909 = vmatpush1.msra.mxu0 0.0
        %910 = vmatprep.subr.mxu0 0.0
        %911 = vmatpush1.msra.mxu0 0.0
        %912 = vmatprep.subr.mxu0 0.0
        %913 = vmatpush1.msra.mxu0 0.0
        %914 = vmatprep.subr.mxu0 0.0
        %915 = vmatpush1.msra.mxu0 0.0
        %916 = vmatprep.subr.mxu0 0.0
        %917 = vmatpush1.msra.mxu0 0.0
        %918 = vmatprep.subr.mxu0 0.0
        %919 = vmatpush1.msra.mxu0 0.0
        %920 = vmatprep.subr.mxu0 0.0
        %921 = vmatpush1.msra.mxu0 0.0
        %922 = vmatprep.subr.mxu0 0.0
        %923 = vmatpush1.msra.mxu0 0.0
        %924 = vmatprep.subr.mxu0 0.0
        %925 = vmatpush1.msra.mxu0 0.0
        %926 = vmatprep.subr.mxu0 0.0
        %927 = vmatpush1.msra.mxu0 0.0
        %928 = vmatprep.subr.mxu0 0.0
        %929 = vmatpush1.msra.mxu0 0.0
        %930 = vmatprep.subr.mxu0 0.0
        %931 = vmatpush1.msra.mxu0 0.0
        %932 = vmatprep.subr.mxu0 0.0
        %933 = vmatpush1.msra.mxu0 0.0
        %934 = vmatprep.subr.mxu0 0.0
        %935 = vmatpush1.msra.mxu0 0.0
        %936 = vmatprep.subr.mxu0 0.0
        %937 = vmatpush1.msra.mxu0 0.0
        %938 = vmatprep.subr.mxu0 0.0
        %939 = vmatpush1.msra.mxu0 0.0
        %940 = vmatprep.subr.mxu0 0.0
        %941 = vmatpush1.msra.mxu0 0.0
        %942 = vmatprep.subr.mxu0 0.0
        %943 = vmatpush1.msra.mxu0 0.0
        %944 = vmatprep.subr.mxu0 0.0
        %945 = vmatpush1.msra.mxu0 0.0
        %946 = vmatprep.subr.mxu0 0.0
        %947 = vmatpush1.msra.mxu0 0.0
        %948 = vmatprep.subr.mxu0 0.0
        %949 = vmatpush1.msra.mxu0 0.0
        %950 = vmatprep.subr.mxu0 0.0
        %951 = vmatpush1.msra.mxu0 0.0
        %952 = vmatprep.subr.mxu0 0.0
        %953 = vmatpush1.msra.mxu0 0.0
        %954 = vmatprep.mubr.f32.mxu0 0.0
        %955 = vmatmul.mubr.f32.gmra.mrb[0].mxu0 %v888
        %v956 = vpop.f32.mrb[0].mxu0
        %v957 = vadd.f32 0.0, %v956
        %v958 = vpop.f32.mrb[0].mxu0
        %959 = vdwg.mxu0
        %v960 = vadd.f32 %v882, %v957
        %v961 = vld [vmem:[#allocation4 + $0x4] sm:$0xff]
        %s962 = scalar_lea.vmem %s3, 64
        %v963 = vld [vmem:[%s962] sm:$0xff]
        %v964 = vld [vmem:[%s962 + $0x8] sm:$0xff]
        %v966 = vsel %vm521, %v961, 0
        %968 = vmatprep.subr.mxu0 0.0
        %969 = vmatpush1.msra.mxu0 %v963
        %970 = vmatprep.subr.mxu0 0.0
        %971 = vmatpush1.msra.mxu0 %v964
        %972 = vmatprep.subr.mxu0 0.0
        %973 = vmatpush1.msra.mxu0 0.0
        %974 = vmatprep.subr.mxu0 0.0
        %975 = vmatpush1.msra.mxu0 0.0
        %976 = vmatprep.subr.mxu0 0.0
        %977 = vmatpush1.msra.mxu0 0.0
        %978 = vmatprep.subr.mxu0 0.0
        %979 = vmatpush1.msra.mxu0 0.0
        %980 = vmatprep.subr.mxu0 0.0
        %981 = vmatpush1.msra.mxu0 0.0
        %982 = vmatprep.subr.mxu0 0.0
        %983 = vmatpush1.msra.mxu0 0.0
        %984 = vmatprep.subr.mxu0 0.0
        %985 = vmatpush1.msra.mxu0 0.0
        %986 = vmatprep.subr.mxu0 0.0
        %987 = vmatpush1.msra.mxu0 0.0
        %988 = vmatprep.subr.mxu0 0.0
        %989 = vmatpush1.msra.mxu0 0.0
        %990 = vmatprep.subr.mxu0 0.0
        %991 = vmatpush1.msra.mxu0 0.0
        %992 = vmatprep.subr.mxu0 0.0
        %993 = vmatpush1.msra.mxu0 0.0
        %994 = vmatprep.subr.mxu0 0.0
        %995 = vmatpush1.msra.mxu0 0.0
        %996 = vmatprep.subr.mxu0 0.0
        %997 = vmatpush1.msra.mxu0 0.0
        %998 = vmatprep.subr.mxu0 0.0
        %999 = vmatpush1.msra.mxu0 0.0
        %1000 = vmatprep.subr.mxu0 0.0
        %1001 = vmatpush1.msra.mxu0 0.0
        %1002 = vmatprep.subr.mxu0 0.0
        %1003 = vmatpush1.msra.mxu0 0.0
        %1004 = vmatprep.subr.mxu0 0.0
        %1005 = vmatpush1.msra.mxu0 0.0
        %1006 = vmatprep.subr.mxu0 0.0
        %1007 = vmatpush1.msra.mxu0 0.0
        %1008 = vmatprep.subr.mxu0 0.0
        %1009 = vmatpush1.msra.mxu0 0.0
        %1010 = vmatprep.subr.mxu0 0.0
        %1011 = vmatpush1.msra.mxu0 0.0
        %1012 = vmatprep.subr.mxu0 0.0
        %1013 = vmatpush1.msra.mxu0 0.0
        %1014 = vmatprep.subr.mxu0 0.0
        %1015 = vmatpush1.msra.mxu0 0.0
        %1016 = vmatprep.subr.mxu0 0.0
        %1017 = vmatpush1.msra.mxu0 0.0
        %1018 = vmatprep.subr.mxu0 0.0
        %1019 = vmatpush1.msra.mxu0 0.0
        %1020 = vmatprep.subr.mxu0 0.0
        %1021 = vmatpush1.msra.mxu0 0.0
        %1022 = vmatprep.subr.mxu0 0.0
        %1023 = vmatpush1.msra.mxu0 0.0
        %1024 = vmatprep.subr.mxu0 0.0
        %1025 = vmatpush1.msra.mxu0 0.0
        %1026 = vmatprep.subr.mxu0 0.0
        %1027 = vmatpush1.msra.mxu0 0.0
        %1028 = vmatprep.subr.mxu0 0.0
        %1029 = vmatpush1.msra.mxu0 0.0
        %1030 = vmatprep.subr.mxu0 0.0
        %1031 = vmatpush1.msra.mxu0 0.0
        %1032 = vmatprep.mubr.f32.mxu0 0.0
        %1033 = vmatmul.mubr.f32.gmra.mrb[0].mxu0 %v966
        %v1034 = vpop.f32.mrb[0].mxu0
        %v1035 = vadd.f32 0.0, %v1034
        %v1036 = vpop.f32.mrb[0].mxu0
        %1037 = vdwg.mxu0
        %v1038 = vadd.f32 %v960, %v1035
        %v1039 = vld [vmem:[#allocation4 + $0x6] sm:$0xff]
        %s1040 = scalar_lea.vmem %s3, 80
        %v1041 = vld [vmem:[%s1040] sm:$0xff]
        %v1042 = vld [vmem:[%s1040 + $0x8] sm:$0xff]
        %v1044 = vsel %vm521, %v1039, 0
        %1046 = vmatprep.subr.mxu0 0.0
        %1047 = vmatpush1.msra.mxu0 %v1041
        %1048 = vmatprep.subr.mxu0 0.0
        %1049 = vmatpush1.msra.mxu0 %v1042
        %1050 = vmatprep.subr.mxu0 0.0
        %1051 = vmatpush1.msra.mxu0 0.0
        %1052 = vmatprep.subr.mxu0 0.0
        %1053 = vmatpush1.msra.mxu0 0.0
        %1054 = vmatprep.subr.mxu0 0.0
        %1055 = vmatpush1.msra.mxu0 0.0
        %1056 = vmatprep.subr.mxu0 0.0
        %1057 = vmatpush1.msra.mxu0 0.0
        %1058 = vmatprep.subr.mxu0 0.0
        %1059 = vmatpush1.msra.mxu0 0.0
        %1060 = vmatprep.subr.mxu0 0.0
        %1061 = vmatpush1.msra.mxu0 0.0
        %1062 = vmatprep.subr.mxu0 0.0
        %1063 = vmatpush1.msra.mxu0 0.0
        %1064 = vmatprep.subr.mxu0 0.0
        %1065 = vmatpush1.msra.mxu0 0.0
        %1066 = vmatprep.subr.mxu0 0.0
        %1067 = vmatpush1.msra.mxu0 0.0
        %1068 = vmatprep.subr.mxu0 0.0
        %1069 = vmatpush1.msra.mxu0 0.0
        %1070 = vmatprep.subr.mxu0 0.0
        %1071 = vmatpush1.msra.mxu0 0.0
        %1072 = vmatprep.subr.mxu0 0.0
        %1073 = vmatpush1.msra.mxu0 0.0
        %1074 = vmatprep.subr.mxu0 0.0
        %1075 = vmatpush1.msra.mxu0 0.0
        %1076 = vmatprep.subr.mxu0 0.0
        %1077 = vmatpush1.msra.mxu0 0.0
        %1078 = vmatprep.subr.mxu0 0.0
        %1079 = vmatpush1.msra.mxu0 0.0
        %1080 = vmatprep.subr.mxu0 0.0
        %1081 = vmatpush1.msra.mxu0 0.0
        %1082 = vmatprep.subr.mxu0 0.0
        %1083 = vmatpush1.msra.mxu0 0.0
        %1084 = vmatprep.subr.mxu0 0.0
        %1085 = vmatpush1.msra.mxu0 0.0
        %1086 = vmatprep.subr.mxu0 0.0
        %1087 = vmatpush1.msra.mxu0 0.0
        %1088 = vmatprep.subr.mxu0 0.0
        %1089 = vmatpush1.msra.mxu0 0.0
        %1090 = vmatprep.subr.mxu0 0.0
        %1091 = vmatpush1.msra.mxu0 0.0
        %1092 = vmatprep.subr.mxu0 0.0
        %1093 = vmatpush1.msra.mxu0 0.0
        %1094 = vmatprep.subr.mxu0 0.0
        %1095 = vmatpush1.msra.mxu0 0.0
        %1096 = vmatprep.subr.mxu0 0.0
        %1097 = vmatpush1.msra.mxu0 0.0
        %1098 = vmatprep.subr.mxu0 0.0
        %1099 = vmatpush1.msra.mxu0 0.0
        %1100 = vmatprep.subr.mxu0 0.0
        %1101 = vmatpush1.msra.mxu0 0.0
        %1102 = vmatprep.subr.mxu0 0.0
        %1103 = vmatpush1.msra.mxu0 0.0
        %1104 = vmatprep.subr.mxu0 0.0
        %1105 = vmatpush1.msra.mxu0 0.0
        %1106 = vmatprep.subr.mxu0 0.0
        %1107 = vmatpush1.msra.mxu0 0.0
        %1108 = vmatprep.subr.mxu0 0.0
        %1109 = vmatpush1.msra.mxu0 0.0
        %1110 = vmatprep.mubr.f32.mxu0 0.0
        %1111 = vmatmul.mubr.f32.gmra.mrb[0].mxu0 %v1044
        %v1112 = vpop.f32.mrb[0].mxu0
        %v1113 = vadd.f32 0.0, %v1112
        %v1114 = vpop.f32.mrb[0].mxu0
        %1115 = vdwg.mxu0
        %v1116 = vadd.f32 %v1038, %v1113
        %v1117 = vld [vmem:[#allocation4 + $0x7] sm:$0xff]
        %s1118 = scalar_lea.vmem %s3, 96
        %v1119 = vld [vmem:[%s1118] sm:$0xff]
        %v1120 = vld [vmem:[%s1118 + $0x8] sm:$0xff]
        %v1122 = vsel %vm521, %v1117, 0
        %1124 = vmatprep.subr.mxu0 0.0
        %1125 = vmatpush1.msra.mxu0 %v1119
        %1126 = vmatprep.subr.mxu0 0.0
        %1127 = vmatpush1.msra.mxu0 %v1120
        %1128 = vmatprep.subr.mxu0 0.0
        %1129 = vmatpush1.msra.mxu0 0.0
        %1130 = vmatprep.subr.mxu0 0.0
        %1131 = vmatpush1.msra.mxu0 0.0
        %1132 = vmatprep.subr.mxu0 0.0
        %1133 = vmatpush1.msra.mxu0 0.0
        %1134 = vmatprep.subr.mxu0 0.0
        %1135 = vmatpush1.msra.mxu0 0.0
        %1136 = vmatprep.subr.mxu0 0.0
        %1137 = vmatpush1.msra.mxu0 0.0
        %1138 = vmatprep.subr.mxu0 0.0
        %1139 = vmatpush1.msra.mxu0 0.0
        %1140 = vmatprep.subr.mxu0 0.0
        %1141 = vmatpush1.msra.mxu0 0.0
        %1142 = vmatprep.subr.mxu0 0.0
        %1143 = vmatpush1.msra.mxu0 0.0
        %1144 = vmatprep.subr.mxu0 0.0
        %1145 = vmatpush1.msra.mxu0 0.0
        %1146 = vmatprep.subr.mxu0 0.0
        %1147 = vmatpush1.msra.mxu0 0.0
        %1148 = vmatprep.subr.mxu0 0.0
        %1149 = vmatpush1.msra.mxu0 0.0
        %1150 = vmatprep.subr.mxu0 0.0
        %1151 = vmatpush1.msra.mxu0 0.0
        %1152 = vmatprep.subr.mxu0 0.0
        %1153 = vmatpush1.msra.mxu0 0.0
        %1154 = vmatprep.subr.mxu0 0.0
        %1155 = vmatpush1.msra.mxu0 0.0
        %1156 = vmatprep.subr.mxu0 0.0
        %1157 = vmatpush1.msra.mxu0 0.0
        %1158 = vmatprep.subr.mxu0 0.0
        %1159 = vmatpush1.msra.mxu0 0.0
        %1160 = vmatprep.subr.mxu0 0.0
        %1161 = vmatpush1.msra.mxu0 0.0
        %1162 = vmatprep.subr.mxu0 0.0
        %1163 = vmatpush1.msra.mxu0 0.0
        %1164 = vmatprep.subr.mxu0 0.0
        %1165 = vmatpush1.msra.mxu0 0.0
        %1166 = vmatprep.subr.mxu0 0.0
        %1167 = vmatpush1.msra.mxu0 0.0
        %1168 = vmatprep.subr.mxu0 0.0
        %1169 = vmatpush1.msra.mxu0 0.0
        %1170 = vmatprep.subr.mxu0 0.0
        %1171 = vmatpush1.msra.mxu0 0.0
        %1172 = vmatprep.subr.mxu0 0.0
        %1173 = vmatpush1.msra.mxu0 0.0
        %1174 = vmatprep.subr.mxu0 0.0
        %1175 = vmatpush1.msra.mxu0 0.0
        %1176 = vmatprep.subr.mxu0 0.0
        %1177 = vmatpush1.msra.mxu0 0.0
        %1178 = vmatprep.subr.mxu0 0.0
        %1179 = vmatpush1.msra.mxu0 0.0
        %1180 = vmatprep.subr.mxu0 0.0
        %1181 = vmatpush1.msra.mxu0 0.0
        %1182 = vmatprep.subr.mxu0 0.0
        %1183 = vmatpush1.msra.mxu0 0.0
        %1184 = vmatprep.subr.mxu0 0.0
        %1185 = vmatpush1.msra.mxu0 0.0
        %1186 = vmatprep.subr.mxu0 0.0
        %1187 = vmatpush1.msra.mxu0 0.0
        %1188 = vmatprep.mubr.f32.mxu0 0.0
        %1189 = vmatmul.mubr.f32.gmra.mrb[0].mxu0 %v1122
        %v1190 = vpop.f32.mrb[0].mxu0
        %v1191 = vadd.f32 0.0, %v1190
        %v1192 = vpop.f32.mrb[0].mxu0
        %1193 = vdwg.mxu0
        %v1194 = vadd.f32 %v1116, %v1191
        %v1195 = vld [vmem:[#allocation4 + $0x8] sm:$0xff]
        %s1196 = scalar_lea.vmem %s3, 112
        %v1197 = vld [vmem:[%s1196] sm:$0xff]
        %v1198 = vld [vmem:[%s1196 + $0x8] sm:$0xff]
        %v1200 = vsel %vm521, %v1195, 0
        %1202 = vmatprep.subr.mxu0 0.0
        %1203 = vmatpush1.msra.mxu0 %v1197
        %1204 = vmatprep.subr.mxu0 0.0
        %1205 = vmatpush1.msra.mxu0 %v1198
        %1206 = vmatprep.subr.mxu0 0.0
        %1207 = vmatpush1.msra.mxu0 0.0
        %1208 = vmatprep.subr.mxu0 0.0
        %1209 = vmatpush1.msra.mxu0 0.0
        %1210 = vmatprep.subr.mxu0 0.0
        %1211 = vmatpush1.msra.mxu0 0.0
        %1212 = vmatprep.subr.mxu0 0.0
        %1213 = vmatpush1.msra.mxu0 0.0
        %1214 = vmatprep.subr.mxu0 0.0
        %1215 = vmatpush1.msra.mxu0 0.0
        %1216 = vmatprep.subr.mxu0 0.0
        %1217 = vmatpush1.msra.mxu0 0.0
        %1218 = vmatprep.subr.mxu0 0.0
        %1219 = vmatpush1.msra.mxu0 0.0
        %1220 = vmatprep.subr.mxu0 0.0
        %1221 = vmatpush1.msra.mxu0 0.0
        %1222 = vmatprep.subr.mxu0 0.0
        %1223 = vmatpush1.msra.mxu0 0.0
        %1224 = vmatprep.subr.mxu0 0.0
        %1225 = vmatpush1.msra.mxu0 0.0
        %1226 = vmatprep.subr.mxu0 0.0
        %1227 = vmatpush1.msra.mxu0 0.0
        %1228 = vmatprep.subr.mxu0 0.0
        %1229 = vmatpush1.msra.mxu0 0.0
        %1230 = vmatprep.subr.mxu0 0.0
        %1231 = vmatpush1.msra.mxu0 0.0
        %1232 = vmatprep.subr.mxu0 0.0
        %1233 = vmatpush1.msra.mxu0 0.0
        %1234 = vmatprep.subr.mxu0 0.0
        %1235 = vmatpush1.msra.mxu0 0.0
        %1236 = vmatprep.subr.mxu0 0.0
        %1237 = vmatpush1.msra.mxu0 0.0
        %1238 = vmatprep.subr.mxu0 0.0
        %1239 = vmatpush1.msra.mxu0 0.0
        %1240 = vmatprep.subr.mxu0 0.0
        %1241 = vmatpush1.msra.mxu0 0.0
        %1242 = vmatprep.subr.mxu0 0.0
        %1243 = vmatpush1.msra.mxu0 0.0
        %1244 = vmatprep.subr.mxu0 0.0
        %1245 = vmatpush1.msra.mxu0 0.0
        %1246 = vmatprep.subr.mxu0 0.0
        %1247 = vmatpush1.msra.mxu0 0.0
        %1248 = vmatprep.subr.mxu0 0.0
        %1249 = vmatpush1.msra.mxu0 0.0
        %1250 = vmatprep.subr.mxu0 0.0
        %1251 = vmatpush1.msra.mxu0 0.0
        %1252 = vmatprep.subr.mxu0 0.0
        %1253 = vmatpush1.msra.mxu0 0.0
        %1254 = vmatprep.subr.mxu0 0.0
        %1255 = vmatpush1.msra.mxu0 0.0
        %1256 = vmatprep.subr.mxu0 0.0
        %1257 = vmatpush1.msra.mxu0 0.0
        %1258 = vmatprep.subr.mxu0 0.0
        %1259 = vmatpush1.msra.mxu0 0.0
        %1260 = vmatprep.subr.mxu0 0.0
        %1261 = vmatpush1.msra.mxu0 0.0
        %1262 = vmatprep.subr.mxu0 0.0
        %1263 = vmatpush1.msra.mxu0 0.0
        %1264 = vmatprep.subr.mxu0 0.0
        %1265 = vmatpush1.msra.mxu0 0.0
        %1266 = vmatprep.mubr.f32.mxu0 0.0
        %1267 = vmatmul.mubr.f32.gmra.mrb[0].mxu0 %v1200
        %v1268 = vpop.f32.mrb[0].mxu0
        %v1269 = vadd.f32 0.0, %v1268
        %v1270 = vpop.f32.mrb[0].mxu0
        %1271 = vdwg.mxu0
        %v1272 = vadd.f32 %v1194, %v1269
        %v1273 = vld [vmem:[#allocation4 + $0x9] sm:$0xff]
        %s1274 = scalar_lea.vmem %s3, 128
        %v1275 = vld [vmem:[%s1274] sm:$0xff]
        %v1276 = vld [vmem:[%s1274 + $0x8] sm:$0xff]
        %v1278 = vsel %vm521, %v1273, 0
        %1280 = vmatprep.subr.mxu0 0.0
        %1281 = vmatpush1.msra.mxu0 %v1275
        %1282 = vmatprep.subr.mxu0 0.0
        %1283 = vmatpush1.msra.mxu0 %v1276
        %1284 = vmatprep.subr.mxu0 0.0
        %1285 = vmatpush1.msra.mxu0 0.0
        %1286 = vmatprep.subr.mxu0 0.0
        %1287 = vmatpush1.msra.mxu0 0.0
        %1288 = vmatprep.subr.mxu0 0.0
        %1289 = vmatpush1.msra.mxu0 0.0
        %1290 = vmatprep.subr.mxu0 0.0
        %1291 = vmatpush1.msra.mxu0 0.0
        %1292 = vmatprep.subr.mxu0 0.0
        %1293 = vmatpush1.msra.mxu0 0.0
        %1294 = vmatprep.subr.mxu0 0.0
        %1295 = vmatpush1.msra.mxu0 0.0
        %1296 = vmatprep.subr.mxu0 0.0
        %1297 = vmatpush1.msra.mxu0 0.0
        %1298 = vmatprep.subr.mxu0 0.0
        %1299 = vmatpush1.msra.mxu0 0.0
        %1300 = vmatprep.subr.mxu0 0.0
        %1301 = vmatpush1.msra.mxu0 0.0
        %1302 = vmatprep.subr.mxu0 0.0
        %1303 = vmatpush1.msra.mxu0 0.0
        %1304 = vmatprep.subr.mxu0 0.0
        %1305 = vmatpush1.msra.mxu0 0.0
        %1306 = vmatprep.subr.mxu0 0.0
        %1307 = vmatpush1.msra.mxu0 0.0
        %1308 = vmatprep.subr.mxu0 0.0
        %1309 = vmatpush1.msra.mxu0 0.0
        %1310 = vmatprep.subr.mxu0 0.0
        %1311 = vmatpush1.msra.mxu0 0.0
        %1312 = vmatprep.subr.mxu0 0.0
        %1313 = vmatpush1.msra.mxu0 0.0
        %1314 = vmatprep.subr.mxu0 0.0
        %1315 = vmatpush1.msra.mxu0 0.0
        %1316 = vmatprep.subr.mxu0 0.0
        %1317 = vmatpush1.msra.mxu0 0.0
        %1318 = vmatprep.subr.mxu0 0.0
        %1319 = vmatpush1.msra.mxu0 0.0
        %1320 = vmatprep.subr.mxu0 0.0
        %1321 = vmatpush1.msra.mxu0 0.0
        %1322 = vmatprep.subr.mxu0 0.0
        %1323 = vmatpush1.msra.mxu0 0.0
        %1324 = vmatprep.subr.mxu0 0.0
        %1325 = vmatpush1.msra.mxu0 0.0
        %1326 = vmatprep.subr.mxu0 0.0
        %1327 = vmatpush1.msra.mxu0 0.0
        %1328 = vmatprep.subr.mxu0 0.0
        %1329 = vmatpush1.msra.mxu0 0.0
        %1330 = vmatprep.subr.mxu0 0.0
        %1331 = vmatpush1.msra.mxu0 0.0
        %1332 = vmatprep.subr.mxu0 0.0
        %1333 = vmatpush1.msra.mxu0 0.0
        %1334 = vmatprep.subr.mxu0 0.0
        %1335 = vmatpush1.msra.mxu0 0.0
        %1336 = vmatprep.subr.mxu0 0.0
        %1337 = vmatpush1.msra.mxu0 0.0
        %1338 = vmatprep.subr.mxu0 0.0
        %1339 = vmatpush1.msra.mxu0 0.0
        %1340 = vmatprep.subr.mxu0 0.0
        %1341 = vmatpush1.msra.mxu0 0.0
        %1342 = vmatprep.subr.mxu0 0.0
        %1343 = vmatpush1.msra.mxu0 0.0
        %1344 = vmatprep.mubr.f32.mxu0 0.0
        %1345 = vmatmul.mubr.f32.gmra.mrb[0].mxu0 %v1278
        %v1346 = vpop.f32.mrb[0].mxu0
        %v1347 = vadd.f32 0.0, %v1346
        %v1348 = vpop.f32.mrb[0].mxu0
        %1349 = vdwg.mxu0
        %v1350 = vadd.f32 %v1272, %v1347
        %v1351 = vld [vmem:[#allocation4 + $0xa] sm:$0xff]
        %s1352 = scalar_lea.vmem %s3, 144
        %v1353 = vld [vmem:[%s1352] sm:$0xff]
        %v1354 = vld [vmem:[%s1352 + $0x8] sm:$0xff]
        %v1356 = vsel %vm521, %v1351, 0
        %1358 = vmatprep.subr.mxu0 0.0
        %1359 = vmatpush1.msra.mxu0 %v1353
        %1360 = vmatprep.subr.mxu0 0.0
        %1361 = vmatpush1.msra.mxu0 %v1354
        %1362 = vmatprep.subr.mxu0 0.0
        %1363 = vmatpush1.msra.mxu0 0.0
        %1364 = vmatprep.subr.mxu0 0.0
        %1365 = vmatpush1.msra.mxu0 0.0
        %1366 = vmatprep.subr.mxu0 0.0
        %1367 = vmatpush1.msra.mxu0 0.0
        %1368 = vmatprep.subr.mxu0 0.0
        %1369 = vmatpush1.msra.mxu0 0.0
        %1370 = vmatprep.subr.mxu0 0.0
        %1371 = vmatpush1.msra.mxu0 0.0
        %1372 = vmatprep.subr.mxu0 0.0
        %1373 = vmatpush1.msra.mxu0 0.0
        %1374 = vmatprep.subr.mxu0 0.0
        %1375 = vmatpush1.msra.mxu0 0.0
        %1376 = vmatprep.subr.mxu0 0.0
        %1377 = vmatpush1.msra.mxu0 0.0
        %1378 = vmatprep.subr.mxu0 0.0
        %1379 = vmatpush1.msra.mxu0 0.0
        %1380 = vmatprep.subr.mxu0 0.0
        %1381 = vmatpush1.msra.mxu0 0.0
        %1382 = vmatprep.subr.mxu0 0.0
        %1383 = vmatpush1.msra.mxu0 0.0
        %1384 = vmatprep.subr.mxu0 0.0
        %1385 = vmatpush1.msra.mxu0 0.0
        %1386 = vmatprep.subr.mxu0 0.0
        %1387 = vmatpush1.msra.mxu0 0.0
        %1388 = vmatprep.subr.mxu0 0.0
        %1389 = vmatpush1.msra.mxu0 0.0
        %1390 = vmatprep.subr.mxu0 0.0
        %1391 = vmatpush1.msra.mxu0 0.0
        %1392 = vmatprep.subr.mxu0 0.0
        %1393 = vmatpush1.msra.mxu0 0.0
        %1394 = vmatprep.subr.mxu0 0.0
        %1395 = vmatpush1.msra.mxu0 0.0
        %1396 = vmatprep.subr.mxu0 0.0
        %1397 = vmatpush1.msra.mxu0 0.0
        %1398 = vmatprep.subr.mxu0 0.0
        %1399 = vmatpush1.msra.mxu0 0.0
        %1400 = vmatprep.subr.mxu0 0.0
        %1401 = vmatpush1.msra.mxu0 0.0
        %1402 = vmatprep.subr.mxu0 0.0
        %1403 = vmatpush1.msra.mxu0 0.0
        %1404 = vmatprep.subr.mxu0 0.0
        %1405 = vmatpush1.msra.mxu0 0.0
        %1406 = vmatprep.subr.mxu0 0.0
        %1407 = vmatpush1.msra.mxu0 0.0
        %1408 = vmatprep.subr.mxu0 0.0
        %1409 = vmatpush1.msra.mxu0 0.0
        %1410 = vmatprep.subr.mxu0 0.0
        %1411 = vmatpush1.msra.mxu0 0.0
        %1412 = vmatprep.subr.mxu0 0.0
        %1413 = vmatpush1.msra.mxu0 0.0
        %1414 = vmatprep.subr.mxu0 0.0
        %1415 = vmatpush1.msra.mxu0 0.0
        %1416 = vmatprep.subr.mxu0 0.0
        %1417 = vmatpush1.msra.mxu0 0.0
        %1418 = vmatprep.subr.mxu0 0.0
        %1419 = vmatpush1.msra.mxu0 0.0
        %1420 = vmatprep.subr.mxu0 0.0
        %1421 = vmatpush1.msra.mxu0 0.0
        %1422 = vmatprep.mubr.f32.mxu0 0.0
        %1423 = vmatmul.mubr.f32.gmra.mrb[0].mxu0 %v1356
        %v1424 = vpop.f32.mrb[0].mxu0
        %v1425 = vadd.f32 0.0, %v1424
        %v1426 = vpop.f32.mrb[0].mxu0
        %1427 = vdwg.mxu0
        %v1428 = vadd.f32 %v1350, %v1425
        %v1429 = vld [vmem:[#allocation4 + $0xc] sm:$0xff]
        %s1430 = scalar_lea.vmem %s3, 160
        %v1431 = vld [vmem:[%s1430] sm:$0xff]
        %v1432 = vld [vmem:[%s1430 + $0x8] sm:$0xff]
        %v1434 = vsel %vm521, %v1429, 0
        %1436 = vmatprep.subr.mxu0 0.0
        %1437 = vmatpush1.msra.mxu0 %v1431
        %1438 = vmatprep.subr.mxu0 0.0
        %1439 = vmatpush1.msra.mxu0 %v1432
        %1440 = vmatprep.subr.mxu0 0.0
        %1441 = vmatpush1.msra.mxu0 0.0
        %1442 = vmatprep.subr.mxu0 0.0
        %1443 = vmatpush1.msra.mxu0 0.0
        %1444 = vmatprep.subr.mxu0 0.0
        %1445 = vmatpush1.msra.mxu0 0.0
        %1446 = vmatprep.subr.mxu0 0.0
        %1447 = vmatpush1.msra.mxu0 0.0
        %1448 = vmatprep.subr.mxu0 0.0
        %1449 = vmatpush1.msra.mxu0 0.0
        %1450 = vmatprep.subr.mxu0 0.0
        %1451 = vmatpush1.msra.mxu0 0.0
        %1452 = vmatprep.subr.mxu0 0.0
        %1453 = vmatpush1.msra.mxu0 0.0
        %1454 = vmatprep.subr.mxu0 0.0
        %1455 = vmatpush1.msra.mxu0 0.0
        %1456 = vmatprep.subr.mxu0 0.0
        %1457 = vmatpush1.msra.mxu0 0.0
        %1458 = vmatprep.subr.mxu0 0.0
        %1459 = vmatpush1.msra.mxu0 0.0
        %1460 = vmatprep.subr.mxu0 0.0
        %1461 = vmatpush1.msra.mxu0 0.0
        %1462 = vmatprep.subr.mxu0 0.0
        %1463 = vmatpush1.msra.mxu0 0.0
        %1464 = vmatprep.subr.mxu0 0.0
        %1465 = vmatpush1.msra.mxu0 0.0
        %1466 = vmatprep.subr.mxu0 0.0
        %1467 = vmatpush1.msra.mxu0 0.0
        %1468 = vmatprep.subr.mxu0 0.0
        %1469 = vmatpush1.msra.mxu0 0.0
        %1470 = vmatprep.subr.mxu0 0.0
        %1471 = vmatpush1.msra.mxu0 0.0
        %1472 = vmatprep.subr.mxu0 0.0
        %1473 = vmatpush1.msra.mxu0 0.0
        %1474 = vmatprep.subr.mxu0 0.0
        %1475 = vmatpush1.msra.mxu0 0.0
        %1476 = vmatprep.subr.mxu0 0.0
        %1477 = vmatpush1.msra.mxu0 0.0
        %1478 = vmatprep.subr.mxu0 0.0
        %1479 = vmatpush1.msra.mxu0 0.0
        %1480 = vmatprep.subr.mxu0 0.0
        %1481 = vmatpush1.msra.mxu0 0.0
        %1482 = vmatprep.subr.mxu0 0.0
        %1483 = vmatpush1.msra.mxu0 0.0
        %1484 = vmatprep.subr.mxu0 0.0
        %1485 = vmatpush1.msra.mxu0 0.0
        %1486 = vmatprep.subr.mxu0 0.0
        %1487 = vmatpush1.msra.mxu0 0.0
        %1488 = vmatprep.subr.mxu0 0.0
        %1489 = vmatpush1.msra.mxu0 0.0
        %1490 = vmatprep.subr.mxu0 0.0
        %1491 = vmatpush1.msra.mxu0 0.0
        %1492 = vmatprep.subr.mxu0 0.0
        %1493 = vmatpush1.msra.mxu0 0.0
        %1494 = vmatprep.subr.mxu0 0.0
        %1495 = vmatpush1.msra.mxu0 0.0
        %1496 = vmatprep.subr.mxu0 0.0
        %1497 = vmatpush1.msra.mxu0 0.0
        %1498 = vmatprep.subr.mxu0 0.0
        %1499 = vmatpush1.msra.mxu0 0.0
        %1500 = vmatprep.mubr.f32.mxu0 0.0
        %1501 = vmatmul.mubr.f32.gmra.mrb[0].mxu0 %v1434
        %v1502 = vpop.f32.mrb[0].mxu0
        %v1503 = vadd.f32 0.0, %v1502
        %v1504 = vpop.f32.mrb[0].mxu0
        %1505 = vdwg.mxu0
        %v1506 = vadd.f32 %v1428, %v1503
        %v1507 = vld [vmem:[#allocation4 + $0xd] sm:$0xff]
        %s1508 = scalar_lea.vmem %s3, 176
        %v1509 = vld [vmem:[%s1508] sm:$0xff]
        %v1510 = vld [vmem:[%s1508 + $0x8] sm:$0xff]
        %v1512 = vsel %vm521, %v1507, 0
        %1514 = vmatprep.subr.mxu0 0.0
        %1515 = vmatpush1.msra.mxu0 %v1509
        %1516 = vmatprep.subr.mxu0 0.0
        %1517 = vmatpush1.msra.mxu0 %v1510
        %1518 = vmatprep.subr.mxu0 0.0
        %1519 = vmatpush1.msra.mxu0 0.0
        %1520 = vmatprep.subr.mxu0 0.0
        %1521 = vmatpush1.msra.mxu0 0.0
        %1522 = vmatprep.subr.mxu0 0.0
        %1523 = vmatpush1.msra.mxu0 0.0
        %1524 = vmatprep.subr.mxu0 0.0
        %1525 = vmatpush1.msra.mxu0 0.0
        %1526 = vmatprep.subr.mxu0 0.0
        %1527 = vmatpush1.msra.mxu0 0.0
        %1528 = vmatprep.subr.mxu0 0.0
        %1529 = vmatpush1.msra.mxu0 0.0
        %1530 = vmatprep.subr.mxu0 0.0
        %1531 = vmatpush1.msra.mxu0 0.0
        %1532 = vmatprep.subr.mxu0 0.0
        %1533 = vmatpush1.msra.mxu0 0.0
        %1534 = vmatprep.subr.mxu0 0.0
        %1535 = vmatpush1.msra.mxu0 0.0
        %1536 = vmatprep.subr.mxu0 0.0
        %1537 = vmatpush1.msra.mxu0 0.0
        %1538 = vmatprep.subr.mxu0 0.0
        %1539 = vmatpush1.msra.mxu0 0.0
        %1540 = vmatprep.subr.mxu0 0.0
        %1541 = vmatpush1.msra.mxu0 0.0
        %1542 = vmatprep.subr.mxu0 0.0
        %1543 = vmatpush1.msra.mxu0 0.0
        %1544 = vmatprep.subr.mxu0 0.0
        %1545 = vmatpush1.msra.mxu0 0.0
        %1546 = vmatprep.subr.mxu0 0.0
        %1547 = vmatpush1.msra.mxu0 0.0
        %1548 = vmatprep.subr.mxu0 0.0
        %1549 = vmatpush1.msra.mxu0 0.0
        %1550 = vmatprep.subr.mxu0 0.0
        %1551 = vmatpush1.msra.mxu0 0.0
        %1552 = vmatprep.subr.mxu0 0.0
        %1553 = vmatpush1.msra.mxu0 0.0
        %1554 = vmatprep.subr.mxu0 0.0
        %1555 = vmatpush1.msra.mxu0 0.0
        %1556 = vmatprep.subr.mxu0 0.0
        %1557 = vmatpush1.msra.mxu0 0.0
        %1558 = vmatprep.subr.mxu0 0.0
        %1559 = vmatpush1.msra.mxu0 0.0
        %1560 = vmatprep.subr.mxu0 0.0
        %1561 = vmatpush1.msra.mxu0 0.0
        %1562 = vmatprep.subr.mxu0 0.0
        %1563 = vmatpush1.msra.mxu0 0.0
        %1564 = vmatprep.subr.mxu0 0.0
        %1565 = vmatpush1.msra.mxu0 0.0
        %1566 = vmatprep.subr.mxu0 0.0
        %1567 = vmatpush1.msra.mxu0 0.0
        %1568 = vmatprep.subr.mxu0 0.0
        %1569 = vmatpush1.msra.mxu0 0.0
        %1570 = vmatprep.subr.mxu0 0.0
        %1571 = vmatpush1.msra.mxu0 0.0
        %1572 = vmatprep.subr.mxu0 0.0
        %1573 = vmatpush1.msra.mxu0 0.0
        %1574 = vmatprep.subr.mxu0 0.0
        %1575 = vmatpush1.msra.mxu0 0.0
        %1576 = vmatprep.subr.mxu0 0.0
        %1577 = vmatpush1.msra.mxu0 0.0
        %1578 = vmatprep.mubr.f32.mxu0 0.0
        %1579 = vmatmul.mubr.f32.gmra.mrb[0].mxu0 %v1512
        %v1580 = vpop.f32.mrb[0].mxu0
        %v1581 = vadd.f32 0.0, %v1580
        %v1582 = vpop.f32.mrb[0].mxu0
        %1583 = vdwg.mxu0
        %v1584 = vadd.f32 %v1506, %v1581
        %v1585 = vld [vmem:[#allocation4 + $0xe] sm:$0xff]
        %s1586 = scalar_lea.vmem %s3, 192
        %v1587 = vld [vmem:[%s1586] sm:$0xff]
        %v1588 = vld [vmem:[%s1586 + $0x8] sm:$0xff]
        %v1590 = vsel %vm521, %v1585, 0
        %1592 = vmatprep.subr.mxu0 0.0
        %1593 = vmatpush1.msra.mxu0 %v1587
        %1594 = vmatprep.subr.mxu0 0.0
        %1595 = vmatpush1.msra.mxu0 %v1588
        %1596 = vmatprep.subr.mxu0 0.0
        %1597 = vmatpush1.msra.mxu0 0.0
        %1598 = vmatprep.subr.mxu0 0.0
        %1599 = vmatpush1.msra.mxu0 0.0
        %1600 = vmatprep.subr.mxu0 0.0
        %1601 = vmatpush1.msra.mxu0 0.0
        %1602 = vmatprep.subr.mxu0 0.0
        %1603 = vmatpush1.msra.mxu0 0.0
        %1604 = vmatprep.subr.mxu0 0.0
        %1605 = vmatpush1.msra.mxu0 0.0
        %1606 = vmatprep.subr.mxu0 0.0
        %1607 = vmatpush1.msra.mxu0 0.0
        %1608 = vmatprep.subr.mxu0 0.0
        %1609 = vmatpush1.msra.mxu0 0.0
        %1610 = vmatprep.subr.mxu0 0.0
        %1611 = vmatpush1.msra.mxu0 0.0
        %1612 = vmatprep.subr.mxu0 0.0
        %1613 = vmatpush1.msra.mxu0 0.0
        %1614 = vmatprep.subr.mxu0 0.0
        %1615 = vmatpush1.msra.mxu0 0.0
        %1616 = vmatprep.subr.mxu0 0.0
        %1617 = vmatpush1.msra.mxu0 0.0
        %1618 = vmatprep.subr.mxu0 0.0
        %1619 = vmatpush1.msra.mxu0 0.0
        %1620 = vmatprep.subr.mxu0 0.0
        %1621 = vmatpush1.msra.mxu0 0.0
        %1622 = vmatprep.subr.mxu0 0.0
        %1623 = vmatpush1.msra.mxu0 0.0
        %1624 = vmatprep.subr.mxu0 0.0
        %1625 = vmatpush1.msra.mxu0 0.0
        %1626 = vmatprep.subr.mxu0 0.0
        %1627 = vmatpush1.msra.mxu0 0.0
        %1628 = vmatprep.subr.mxu0 0.0
        %1629 = vmatpush1.msra.mxu0 0.0
        %1630 = vmatprep.subr.mxu0 0.0
        %1631 = vmatpush1.msra.mxu0 0.0
        %1632 = vmatprep.subr.mxu0 0.0
        %1633 = vmatpush1.msra.mxu0 0.0
        %1634 = vmatprep.subr.mxu0 0.0
        %1635 = vmatpush1.msra.mxu0 0.0
        %1636 = vmatprep.subr.mxu0 0.0
        %1637 = vmatpush1.msra.mxu0 0.0
        %1638 = vmatprep.subr.mxu0 0.0
        %1639 = vmatpush1.msra.mxu0 0.0
        %1640 = vmatprep.subr.mxu0 0.0
        %1641 = vmatpush1.msra.mxu0 0.0
        %1642 = vmatprep.subr.mxu0 0.0
        %1643 = vmatpush1.msra.mxu0 0.0
        %1644 = vmatprep.subr.mxu0 0.0
        %1645 = vmatpush1.msra.mxu0 0.0
        %1646 = vmatprep.subr.mxu0 0.0
        %1647 = vmatpush1.msra.mxu0 0.0
        %1648 = vmatprep.subr.mxu0 0.0
        %1649 = vmatpush1.msra.mxu0 0.0
        %1650 = vmatprep.subr.mxu0 0.0
        %1651 = vmatpush1.msra.mxu0 0.0
        %1652 = vmatprep.subr.mxu0 0.0
        %1653 = vmatpush1.msra.mxu0 0.0
        %1654 = vmatprep.subr.mxu0 0.0
        %1655 = vmatpush1.msra.mxu0 0.0
        %1656 = vmatprep.mubr.f32.mxu0 0.0
        %1657 = vmatmul.mubr.f32.gmra.mrb[0].mxu0 %v1590
        %v1658 = vpop.f32.mrb[0].mxu0
        %v1659 = vadd.f32 0.0, %v1658
        %v1660 = vpop.f32.mrb[0].mxu0
        %1661 = vdwg.mxu0
        %v1662 = vadd.f32 %v1584, %v1659
        %v1663 = vld [vmem:[#allocation4 + $0xf] sm:$0xff]
        %s1664 = scalar_lea.vmem %s3, 208
        %v1665 = vld [vmem:[%s1664] sm:$0xff]
        %v1666 = vld [vmem:[%s1664 + $0x8] sm:$0xff]
        %v1668 = vsel %vm521, %v1663, 0
        %1670 = vmatprep.subr.mxu0 0.0
        %1671 = vmatpush1.msra.mxu0 %v1665
        %1672 = vmatprep.subr.mxu0 0.0
        %1673 = vmatpush1.msra.mxu0 %v1666
        %1674 = vmatprep.subr.mxu0 0.0
        %1675 = vmatpush1.msra.mxu0 0.0
        %1676 = vmatprep.subr.mxu0 0.0
        %1677 = vmatpush1.msra.mxu0 0.0
        %1678 = vmatprep.subr.mxu0 0.0
        %1679 = vmatpush1.msra.mxu0 0.0
        %1680 = vmatprep.subr.mxu0 0.0
        %1681 = vmatpush1.msra.mxu0 0.0
        %1682 = vmatprep.subr.mxu0 0.0
        %1683 = vmatpush1.msra.mxu0 0.0
        %1684 = vmatprep.subr.mxu0 0.0
        %1685 = vmatpush1.msra.mxu0 0.0
        %1686 = vmatprep.subr.mxu0 0.0
        %1687 = vmatpush1.msra.mxu0 0.0
        %1688 = vmatprep.subr.mxu0 0.0
        %1689 = vmatpush1.msra.mxu0 0.0
        %1690 = vmatprep.subr.mxu0 0.0
        %1691 = vmatpush1.msra.mxu0 0.0
        %1692 = vmatprep.subr.mxu0 0.0
        %1693 = vmatpush1.msra.mxu0 0.0
        %1694 = vmatprep.subr.mxu0 0.0
        %1695 = vmatpush1.msra.mxu0 0.0
        %1696 = vmatprep.subr.mxu0 0.0
        %1697 = vmatpush1.msra.mxu0 0.0
        %1698 = vmatprep.subr.mxu0 0.0
        %1699 = vmatpush1.msra.mxu0 0.0
        %1700 = vmatprep.subr.mxu0 0.0
        %1701 = vmatpush1.msra.mxu0 0.0
        %1702 = vmatprep.subr.mxu0 0.0
        %1703 = vmatpush1.msra.mxu0 0.0
        %1704 = vmatprep.subr.mxu0 0.0
        %1705 = vmatpush1.msra.mxu0 0.0
        %1706 = vmatprep.subr.mxu0 0.0
        %1707 = vmatpush1.msra.mxu0 0.0
        %1708 = vmatprep.subr.mxu0 0.0
        %1709 = vmatpush1.msra.mxu0 0.0
        %1710 = vmatprep.subr.mxu0 0.0
        %1711 = vmatpush1.msra.mxu0 0.0
        %1712 = vmatprep.subr.mxu0 0.0
        %1713 = vmatpush1.msra.mxu0 0.0
        %1714 = vmatprep.subr.mxu0 0.0
        %1715 = vmatpush1.msra.mxu0 0.0
        %1716 = vmatprep.subr.mxu0 0.0
        %1717 = vmatpush1.msra.mxu0 0.0
        %1718 = vmatprep.subr.mxu0 0.0
        %1719 = vmatpush1.msra.mxu0 0.0
        %1720 = vmatprep.subr.mxu0 0.0
        %1721 = vmatpush1.msra.mxu0 0.0
        %1722 = vmatprep.subr.mxu0 0.0
        %1723 = vmatpush1.msra.mxu0 0.0
        %1724 = vmatprep.subr.mxu0 0.0
        %1725 = vmatpush1.msra.mxu0 0.0
        %1726 = vmatprep.subr.mxu0 0.0
        %1727 = vmatpush1.msra.mxu0 0.0
        %1728 = vmatprep.subr.mxu0 0.0
        %1729 = vmatpush1.msra.mxu0 0.0
        %1730 = vmatprep.subr.mxu0 0.0
        %1731 = vmatpush1.msra.mxu0 0.0
        %1732 = vmatprep.subr.mxu0 0.0
        %1733 = vmatpush1.msra.mxu0 0.0
        %1734 = vmatprep.mubr.f32.mxu0 0.0
        %1735 = vmatmul.mubr.f32.gmra.mrb[0].mxu0 %v1668
        %v1736 = vpop.f32.mrb[0].mxu0
        %v1737 = vadd.f32 0.0, %v1736
        %v1738 = vpop.f32.mrb[0].mxu0
        %1739 = vdwg.mxu0
        %v1740 = vadd.f32 %v1662, %v1737
        %v1741 = vld [vmem:[#allocation4 + $0x10] sm:$0xff]
        %s1742 = scalar_lea.vmem %s3, 224
        %v1743 = vld [vmem:[%s1742] sm:$0xff]
        %v1744 = vld [vmem:[%s1742 + $0x8] sm:$0xff]
        %v1746 = vsel %vm521, %v1741, 0
        %1748 = vmatprep.subr.mxu0 0.0
        %1749 = vmatpush1.msra.mxu0 %v1743
        %1750 = vmatprep.subr.mxu0 0.0
        %1751 = vmatpush1.msra.mxu0 %v1744
        %1752 = vmatprep.subr.mxu0 0.0
        %1753 = vmatpush1.msra.mxu0 0.0
        %1754 = vmatprep.subr.mxu0 0.0
        %1755 = vmatpush1.msra.mxu0 0.0
        %1756 = vmatprep.subr.mxu0 0.0
        %1757 = vmatpush1.msra.mxu0 0.0
        %1758 = vmatprep.subr.mxu0 0.0
        %1759 = vmatpush1.msra.mxu0 0.0
        %1760 = vmatprep.subr.mxu0 0.0
        %1761 = vmatpush1.msra.mxu0 0.0
        %1762 = vmatprep.subr.mxu0 0.0
        %1763 = vmatpush1.msra.mxu0 0.0
        %1764 = vmatprep.subr.mxu0 0.0
        %1765 = vmatpush1.msra.mxu0 0.0
        %1766 = vmatprep.subr.mxu0 0.0
        %1767 = vmatpush1.msra.mxu0 0.0
        %1768 = vmatprep.subr.mxu0 0.0
        %1769 = vmatpush1.msra.mxu0 0.0
        %1770 = vmatprep.subr.mxu0 0.0
        %1771 = vmatpush1.msra.mxu0 0.0
        %1772 = vmatprep.subr.mxu0 0.0
        %1773 = vmatpush1.msra.mxu0 0.0
        %1774 = vmatprep.subr.mxu0 0.0
        %1775 = vmatpush1.msra.mxu0 0.0
        %1776 = vmatprep.subr.mxu0 0.0
        %1777 = vmatpush1.msra.mxu0 0.0
        %1778 = vmatprep.subr.mxu0 0.0
        %1779 = vmatpush1.msra.mxu0 0.0
        %1780 = vmatprep.subr.mxu0 0.0
        %1781 = vmatpush1.msra.mxu0 0.0
        %1782 = vmatprep.subr.mxu0 0.0
        %1783 = vmatpush1.msra.mxu0 0.0
        %1784 = vmatprep.subr.mxu0 0.0
        %1785 = vmatpush1.msra.mxu0 0.0
        %1786 = vmatprep.subr.mxu0 0.0
        %1787 = vmatpush1.msra.mxu0 0.0
        %1788 = vmatprep.subr.mxu0 0.0
        %1789 = vmatpush1.msra.mxu0 0.0
        %1790 = vmatprep.subr.mxu0 0.0
        %1791 = vmatpush1.msra.mxu0 0.0
        %1792 = vmatprep.subr.mxu0 0.0
        %1793 = vmatpush1.msra.mxu0 0.0
        %1794 = vmatprep.subr.mxu0 0.0
        %1795 = vmatpush1.msra.mxu0 0.0
        %1796 = vmatprep.subr.mxu0 0.0
        %1797 = vmatpush1.msra.mxu0 0.0
        %1798 = vmatprep.subr.mxu0 0.0
        %1799 = vmatpush1.msra.mxu0 0.0
        %1800 = vmatprep.subr.mxu0 0.0
        %1801 = vmatpush1.msra.mxu0 0.0
        %1802 = vmatprep.subr.mxu0 0.0
        %1803 = vmatpush1.msra.mxu0 0.0
        %1804 = vmatprep.subr.mxu0 0.0
        %1805 = vmatpush1.msra.mxu0 0.0
        %1806 = vmatprep.subr.mxu0 0.0
        %1807 = vmatpush1.msra.mxu0 0.0
        %1808 = vmatprep.subr.mxu0 0.0
        %1809 = vmatpush1.msra.mxu0 0.0
        %1810 = vmatprep.subr.mxu0 0.0
        %1811 = vmatpush1.msra.mxu0 0.0
        %1812 = vmatprep.mubr.f32.mxu0 0.0
        %1813 = vmatmul.mubr.f32.gmra.mrb[0].mxu0 %v1746
        %v1814 = vpop.f32.mrb[0].mxu0
        %v1815 = vadd.f32 0.0, %v1814
        %v1816 = vpop.f32.mrb[0].mxu0
        %1817 = vdwg.mxu0
        %v1818 = vadd.f32 %v1740, %v1815
        %v1819 = vld [vmem:[#allocation4 + $0x12] sm:$0xff]
        %s1820 = scalar_lea.vmem %s3, 240
        %v1821 = vld [vmem:[%s1820] sm:$0xff]
        %v1822 = vld [vmem:[%s1820 + $0x8] sm:$0xff]
        %v1824 = vsel %vm521, %v1819, 0
        %1826 = vmatprep.subr.mxu0 0.0
        %1827 = vmatpush1.msra.mxu0 %v1821
        %1828 = vmatprep.subr.mxu0 0.0
        %1829 = vmatpush1.msra.mxu0 %v1822
        %1830 = vmatprep.subr.mxu0 0.0
        %1831 = vmatpush1.msra.mxu0 0.0
        %1832 = vmatprep.subr.mxu0 0.0
        %1833 = vmatpush1.msra.mxu0 0.0
        %1834 = vmatprep.subr.mxu0 0.0
        %1835 = vmatpush1.msra.mxu0 0.0
        %1836 = vmatprep.subr.mxu0 0.0
        %1837 = vmatpush1.msra.mxu0 0.0
        %1838 = vmatprep.subr.mxu0 0.0
        %1839 = vmatpush1.msra.mxu0 0.0
        %1840 = vmatprep.subr.mxu0 0.0
        %1841 = vmatpush1.msra.mxu0 0.0
        %1842 = vmatprep.subr.mxu0 0.0
        %1843 = vmatpush1.msra.mxu0 0.0
        %1844 = vmatprep.subr.mxu0 0.0
        %1845 = vmatpush1.msra.mxu0 0.0
        %1846 = vmatprep.subr.mxu0 0.0
        %1847 = vmatpush1.msra.mxu0 0.0
        %1848 = vmatprep.subr.mxu0 0.0
        %1849 = vmatpush1.msra.mxu0 0.0
        %1850 = vmatprep.subr.mxu0 0.0
        %1851 = vmatpush1.msra.mxu0 0.0
        %1852 = vmatprep.subr.mxu0 0.0
        %1853 = vmatpush1.msra.mxu0 0.0
        %1854 = vmatprep.subr.mxu0 0.0
        %1855 = vmatpush1.msra.mxu0 0.0
        %1856 = vmatprep.subr.mxu0 0.0
        %1857 = vmatpush1.msra.mxu0 0.0
        %1858 = vmatprep.subr.mxu0 0.0
        %1859 = vmatpush1.msra.mxu0 0.0
        %1860 = vmatprep.subr.mxu0 0.0
        %1861 = vmatpush1.msra.mxu0 0.0
        %1862 = vmatprep.subr.mxu0 0.0
        %1863 = vmatpush1.msra.mxu0 0.0
        %1864 = vmatprep.subr.mxu0 0.0
        %1865 = vmatpush1.msra.mxu0 0.0
        %1866 = vmatprep.subr.mxu0 0.0
        %1867 = vmatpush1.msra.mxu0 0.0
        %1868 = vmatprep.subr.mxu0 0.0
        %1869 = vmatpush1.msra.mxu0 0.0
        %1870 = vmatprep.subr.mxu0 0.0
        %1871 = vmatpush1.msra.mxu0 0.0
        %1872 = vmatprep.subr.mxu0 0.0
        %1873 = vmatpush1.msra.mxu0 0.0
        %1874 = vmatprep.subr.mxu0 0.0
        %1875 = vmatpush1.msra.mxu0 0.0
        %1876 = vmatprep.subr.mxu0 0.0
        %1877 = vmatpush1.msra.mxu0 0.0
        %1878 = vmatprep.subr.mxu0 0.0
        %1879 = vmatpush1.msra.mxu0 0.0
        %1880 = vmatprep.subr.mxu0 0.0
        %1881 = vmatpush1.msra.mxu0 0.0
        %1882 = vmatprep.subr.mxu0 0.0
        %1883 = vmatpush1.msra.mxu0 0.0
        %1884 = vmatprep.subr.mxu0 0.0
        %1885 = vmatpush1.msra.mxu0 0.0
        %1886 = vmatprep.subr.mxu0 0.0
        %1887 = vmatpush1.msra.mxu0 0.0
        %1888 = vmatprep.subr.mxu0 0.0
        %1889 = vmatpush1.msra.mxu0 0.0
        %1890 = vmatprep.mubr.f32.mxu0 0.0
        %1891 = vmatmul.mubr.f32.gmra.mrb[0].mxu0 %v1824
        %v1892 = vpop.f32.mrb[0].mxu0
        %v1893 = vadd.f32 0.0, %v1892
        %v1894 = vpop.f32.mrb[0].mxu0
        %1895 = vdwg.mxu0
        %v1896 = vadd.f32 %v1818, %v1893
        %v1897 = vld [vmem:[#allocation4 + $0x13] sm:$0xff]
        %s1898 = scalar_lea.vmem %s3, 256
        %v1899 = vld [vmem:[%s1898] sm:$0xff]
        %v1900 = vld [vmem:[%s1898 + $0x8] sm:$0xff]
        %v1902 = vsel %vm521, %v1897, 0
        %1904 = vmatprep.subr.mxu0 0.0
        %1905 = vmatpush1.msra.mxu0 %v1899
        %1906 = vmatprep.subr.mxu0 0.0
        %1907 = vmatpush1.msra.mxu0 %v1900
        %1908 = vmatprep.subr.mxu0 0.0
        %1909 = vmatpush1.msra.mxu0 0.0
        %1910 = vmatprep.subr.mxu0 0.0
        %1911 = vmatpush1.msra.mxu0 0.0
        %1912 = vmatprep.subr.mxu0 0.0
        %1913 = vmatpush1.msra.mxu0 0.0
        %1914 = vmatprep.subr.mxu0 0.0
        %1915 = vmatpush1.msra.mxu0 0.0
        %1916 = vmatprep.subr.mxu0 0.0
        %1917 = vmatpush1.msra.mxu0 0.0
        %1918 = vmatprep.subr.mxu0 0.0
        %1919 = vmatpush1.msra.mxu0 0.0
        %1920 = vmatprep.subr.mxu0 0.0
        %1921 = vmatpush1.msra.mxu0 0.0
        %1922 = vmatprep.subr.mxu0 0.0
        %1923 = vmatpush1.msra.mxu0 0.0
        %1924 = vmatprep.subr.mxu0 0.0
        %1925 = vmatpush1.msra.mxu0 0.0
        %1926 = vmatprep.subr.mxu0 0.0
        %1927 = vmatpush1.msra.mxu0 0.0
        %1928 = vmatprep.subr.mxu0 0.0
        %1929 = vmatpush1.msra.mxu0 0.0
        %1930 = vmatprep.subr.mxu0 0.0
        %1931 = vmatpush1.msra.mxu0 0.0
        %1932 = vmatprep.subr.mxu0 0.0
        %1933 = vmatpush1.msra.mxu0 0.0
        %1934 = vmatprep.subr.mxu0 0.0
        %1935 = vmatpush1.msra.mxu0 0.0
        %1936 = vmatprep.subr.mxu0 0.0
        %1937 = vmatpush1.msra.mxu0 0.0
        %1938 = vmatprep.subr.mxu0 0.0
        %1939 = vmatpush1.msra.mxu0 0.0
        %1940 = vmatprep.subr.mxu0 0.0
        %1941 = vmatpush1.msra.mxu0 0.0
        %1942 = vmatprep.subr.mxu0 0.0
        %1943 = vmatpush1.msra.mxu0 0.0
        %1944 = vmatprep.subr.mxu0 0.0
        %1945 = vmatpush1.msra.mxu0 0.0
        %1946 = vmatprep.subr.mxu0 0.0
        %1947 = vmatpush1.msra.mxu0 0.0
        %1948 = vmatprep.subr.mxu0 0.0
        %1949 = vmatpush1.msra.mxu0 0.0
        %1950 = vmatprep.subr.mxu0 0.0
        %1951 = vmatpush1.msra.mxu0 0.0
        %1952 = vmatprep.subr.mxu0 0.0
        %1953 = vmatpush1.msra.mxu0 0.0
        %1954 = vmatprep.subr.mxu0 0.0
        %1955 = vmatpush1.msra.mxu0 0.0
        %1956 = vmatprep.subr.mxu0 0.0
        %1957 = vmatpush1.msra.mxu0 0.0
        %1958 = vmatprep.subr.mxu0 0.0
        %1959 = vmatpush1.msra.mxu0 0.0
        %1960 = vmatprep.subr.mxu0 0.0
        %1961 = vmatpush1.msra.mxu0 0.0
        %1962 = vmatprep.subr.mxu0 0.0
        %1963 = vmatpush1.msra.mxu0 0.0
        %1964 = vmatprep.subr.mxu0 0.0
        %1965 = vmatpush1.msra.mxu0 0.0
        %1966 = vmatprep.subr.mxu0 0.0
        %1967 = vmatpush1.msra.mxu0 0.0
        %1968 = vmatprep.mubr.f32.mxu0 0.0
        %1969 = vmatmul.mubr.f32.gmra.mrb[0].mxu0 %v1902
        %v1970 = vpop.f32.mrb[0].mxu0
        %v1971 = vadd.f32 0.0, %v1970
        %v1972 = vpop.f32.mrb[0].mxu0
        %1973 = vdwg.mxu0
        %v1974 = vadd.f32 %v1896, %v1971
        %v1975 = vld [vmem:[#allocation4 + $0x14] sm:$0xff]
        %s1976 = scalar_lea.vmem %s3, 272
        %v1977 = vld [vmem:[%s1976] sm:$0xff]
        %v1978 = vld [vmem:[%s1976 + $0x8] sm:$0xff]
        %v1980 = vsel %vm521, %v1975, 0
        %1982 = vmatprep.subr.mxu0 0.0
        %1983 = vmatpush1.msra.mxu0 %v1977
        %1984 = vmatprep.subr.mxu0 0.0
        %1985 = vmatpush1.msra.mxu0 %v1978
        %1986 = vmatprep.subr.mxu0 0.0
        %1987 = vmatpush1.msra.mxu0 0.0
        %1988 = vmatprep.subr.mxu0 0.0
        %1989 = vmatpush1.msra.mxu0 0.0
        %1990 = vmatprep.subr.mxu0 0.0
        %1991 = vmatpush1.msra.mxu0 0.0
        %1992 = vmatprep.subr.mxu0 0.0
        %1993 = vmatpush1.msra.mxu0 0.0
        %1994 = vmatprep.subr.mxu0 0.0
        %1995 = vmatpush1.msra.mxu0 0.0
        %1996 = vmatprep.subr.mxu0 0.0
        %1997 = vmatpush1.msra.mxu0 0.0
        %1998 = vmatprep.subr.mxu0 0.0
        %1999 = vmatpush1.msra.mxu0 0.0
        %2000 = vmatprep.subr.mxu0 0.0
        %2001 = vmatpush1.msra.mxu0 0.0
        %2002 = vmatprep.subr.mxu0 0.0
        %2003 = vmatpush1.msra.mxu0 0.0
        %2004 = vmatprep.subr.mxu0 0.0
        %2005 = vmatpush1.msra.mxu0 0.0
        %2006 = vmatprep.subr.mxu0 0.0
        %2007 = vmatpush1.msra.mxu0 0.0
        %2008 = vmatprep.subr.mxu0 0.0
        %2009 = vmatpush1.msra.mxu0 0.0
        %2010 = vmatprep.subr.mxu0 0.0
        %2011 = vmatpush1.msra.mxu0 0.0
        %2012 = vmatprep.subr.mxu0 0.0
        %2013 = vmatpush1.msra.mxu0 0.0
        %2014 = vmatprep.subr.mxu0 0.0
        %2015 = vmatpush1.msra.mxu0 0.0
        %2016 = vmatprep.subr.mxu0 0.0
        %2017 = vmatpush1.msra.mxu0 0.0
        %2018 = vmatprep.subr.mxu0 0.0
        %2019 = vmatpush1.msra.mxu0 0.0
        %2020 = vmatprep.subr.mxu0 0.0
        %2021 = vmatpush1.msra.mxu0 0.0
        %2022 = vmatprep.subr.mxu0 0.0
        %2023 = vmatpush1.msra.mxu0 0.0
        %2024 = vmatprep.subr.mxu0 0.0
        %2025 = vmatpush1.msra.mxu0 0.0
        %2026 = vmatprep.subr.mxu0 0.0
        %2027 = vmatpush1.msra.mxu0 0.0
        %2028 = vmatprep.subr.mxu0 0.0
        %2029 = vmatpush1.msra.mxu0 0.0
        %2030 = vmatprep.subr.mxu0 0.0
        %2031 = vmatpush1.msra.mxu0 0.0
        %2032 = vmatprep.subr.mxu0 0.0
        %2033 = vmatpush1.msra.mxu0 0.0
        %2034 = vmatprep.subr.mxu0 0.0
        %2035 = vmatpush1.msra.mxu0 0.0
        %2036 = vmatprep.subr.mxu0 0.0
        %2037 = vmatpush1.msra.mxu0 0.0
        %2038 = vmatprep.subr.mxu0 0.0
        %2039 = vmatpush1.msra.mxu0 0.0
        %2040 = vmatprep.subr.mxu0 0.0
        %2041 = vmatpush1.msra.mxu0 0.0
        %2042 = vmatprep.subr.mxu0 0.0
        %2043 = vmatpush1.msra.mxu0 0.0
        %2044 = vmatprep.subr.mxu0 0.0
        %2045 = vmatpush1.msra.mxu0 0.0
        %2046 = vmatprep.mubr.f32.mxu0 0.0
        %2047 = vmatmul.mubr.f32.gmra.mrb[0].mxu0 %v1980
        %v2048 = vpop.f32.mrb[0].mxu0
        %v2049 = vadd.f32 0.0, %v2048
        %v2050 = vpop.f32.mrb[0].mxu0
        %2051 = vdwg.mxu0
        %v2052 = vadd.f32 %v1974, %v2049
        %v2053 = vld [vmem:[#allocation4 + $0x15] sm:$0xff]
        %s2054 = scalar_lea.vmem %s3, 288
        %v2055 = vld [vmem:[%s2054] sm:$0xff]
        %v2056 = vld [vmem:[%s2054 + $0x8] sm:$0xff]
        %v2058 = vsel %vm521, %v2053, 0
        %2060 = vmatprep.subr.mxu0 0.0
        %2061 = vmatpush1.msra.mxu0 %v2055
        %2062 = vmatprep.subr.mxu0 0.0
        %2063 = vmatpush1.msra.mxu0 %v2056
        %2064 = vmatprep.subr.mxu0 0.0
        %2065 = vmatpush1.msra.mxu0 0.0
        %2066 = vmatprep.subr.mxu0 0.0
        %2067 = vmatpush1.msra.mxu0 0.0
        %2068 = vmatprep.subr.mxu0 0.0
        %2069 = vmatpush1.msra.mxu0 0.0
        %2070 = vmatprep.subr.mxu0 0.0
        %2071 = vmatpush1.msra.mxu0 0.0
        %2072 = vmatprep.subr.mxu0 0.0
        %2073 = vmatpush1.msra.mxu0 0.0
        %2074 = vmatprep.subr.mxu0 0.0
        %2075 = vmatpush1.msra.mxu0 0.0
        %2076 = vmatprep.subr.mxu0 0.0
        %2077 = vmatpush1.msra.mxu0 0.0
        %2078 = vmatprep.subr.mxu0 0.0
        %2079 = vmatpush1.msra.mxu0 0.0
        %2080 = vmatprep.subr.mxu0 0.0
        %2081 = vmatpush1.msra.mxu0 0.0
        %2082 = vmatprep.subr.mxu0 0.0
        %2083 = vmatpush1.msra.mxu0 0.0
        %2084 = vmatprep.subr.mxu0 0.0
        %2085 = vmatpush1.msra.mxu0 0.0
        %2086 = vmatprep.subr.mxu0 0.0
        %2087 = vmatpush1.msra.mxu0 0.0
        %2088 = vmatprep.subr.mxu0 0.0
        %2089 = vmatpush1.msra.mxu0 0.0
        %2090 = vmatprep.subr.mxu0 0.0
        %2091 = vmatpush1.msra.mxu0 0.0
        %2092 = vmatprep.subr.mxu0 0.0
        %2093 = vmatpush1.msra.mxu0 0.0
        %2094 = vmatprep.subr.mxu0 0.0
        %2095 = vmatpush1.msra.mxu0 0.0
        %2096 = vmatprep.subr.mxu0 0.0
        %2097 = vmatpush1.msra.mxu0 0.0
        %2098 = vmatprep.subr.mxu0 0.0
        %2099 = vmatpush1.msra.mxu0 0.0
        %2100 = vmatprep.subr.mxu0 0.0
        %2101 = vmatpush1.msra.mxu0 0.0
        %2102 = vmatprep.subr.mxu0 0.0
        %2103 = vmatpush1.msra.mxu0 0.0
        %2104 = vmatprep.subr.mxu0 0.0
        %2105 = vmatpush1.msra.mxu0 0.0
        %2106 = vmatprep.subr.mxu0 0.0
        %2107 = vmatpush1.msra.mxu0 0.0
        %2108 = vmatprep.subr.mxu0 0.0
        %2109 = vmatpush1.msra.mxu0 0.0
        %2110 = vmatprep.subr.mxu0 0.0
        %2111 = vmatpush1.msra.mxu0 0.0
        %2112 = vmatprep.subr.mxu0 0.0
        %2113 = vmatpush1.msra.mxu0 0.0
        %2114 = vmatprep.subr.mxu0 0.0
        %2115 = vmatpush1.msra.mxu0 0.0
        %2116 = vmatprep.subr.mxu0 0.0
        %2117 = vmatpush1.msra.mxu0 0.0
        %2118 = vmatprep.subr.mxu0 0.0
        %2119 = vmatpush1.msra.mxu0 0.0
        %2120 = vmatprep.subr.mxu0 0.0
        %2121 = vmatpush1.msra.mxu0 0.0
        %2122 = vmatprep.subr.mxu0 0.0
        %2123 = vmatpush1.msra.mxu0 0.0
        %2124 = vmatprep.mubr.f32.mxu0 0.0
        %2125 = vmatmul.mubr.f32.gmra.mrb[0].mxu0 %v2058
        %v2126 = vpop.f32.mrb[0].mxu0
        %v2127 = vadd.f32 0.0, %v2126
        %v2128 = vpop.f32.mrb[0].mxu0
        %2129 = vdwg.mxu0
        %v2130 = vadd.f32 %v2052, %v2127
        %v2131 = vld [vmem:[#allocation4 + $0x16] sm:$0xff]
        %s2132 = scalar_lea.vmem %s3, 304
        %v2133 = vld [vmem:[%s2132] sm:$0xff]
        %v2134 = vld [vmem:[%s2132 + $0x8] sm:$0xff]
        %v2136 = vsel %vm521, %v2131, 0
        %2138 = vmatprep.subr.mxu0 0.0
        %2139 = vmatpush1.msra.mxu0 %v2133
        %2140 = vmatprep.subr.mxu0 0.0
        %2141 = vmatpush1.msra.mxu0 %v2134
        %2142 = vmatprep.subr.mxu0 0.0
        %2143 = vmatpush1.msra.mxu0 0.0
        %2144 = vmatprep.subr.mxu0 0.0
        %2145 = vmatpush1.msra.mxu0 0.0
        %2146 = vmatprep.subr.mxu0 0.0
        %2147 = vmatpush1.msra.mxu0 0.0
        %2148 = vmatprep.subr.mxu0 0.0
        %2149 = vmatpush1.msra.mxu0 0.0
        %2150 = vmatprep.subr.mxu0 0.0
        %2151 = vmatpush1.msra.mxu0 0.0
        %2152 = vmatprep.subr.mxu0 0.0
        %2153 = vmatpush1.msra.mxu0 0.0
        %2154 = vmatprep.subr.mxu0 0.0
        %2155 = vmatpush1.msra.mxu0 0.0
        %2156 = vmatprep.subr.mxu0 0.0
        %2157 = vmatpush1.msra.mxu0 0.0
        %2158 = vmatprep.subr.mxu0 0.0
        %2159 = vmatpush1.msra.mxu0 0.0
        %2160 = vmatprep.subr.mxu0 0.0
        %2161 = vmatpush1.msra.mxu0 0.0
        %2162 = vmatprep.subr.mxu0 0.0
        %2163 = vmatpush1.msra.mxu0 0.0
        %2164 = vmatprep.subr.mxu0 0.0
        %2165 = vmatpush1.msra.mxu0 0.0
        %2166 = vmatprep.subr.mxu0 0.0
        %2167 = vmatpush1.msra.mxu0 0.0
        %2168 = vmatprep.subr.mxu0 0.0
        %2169 = vmatpush1.msra.mxu0 0.0
        %2170 = vmatprep.subr.mxu0 0.0
        %2171 = vmatpush1.msra.mxu0 0.0
        %2172 = vmatprep.subr.mxu0 0.0
        %2173 = vmatpush1.msra.mxu0 0.0
        %2174 = vmatprep.subr.mxu0 0.0
        %2175 = vmatpush1.msra.mxu0 0.0
        %2176 = vmatprep.subr.mxu0 0.0
        %2177 = vmatpush1.msra.mxu0 0.0
        %2178 = vmatprep.subr.mxu0 0.0
        %2179 = vmatpush1.msra.mxu0 0.0
        %2180 = vmatprep.subr.mxu0 0.0
        %2181 = vmatpush1.msra.mxu0 0.0
        %2182 = vmatprep.subr.mxu0 0.0
        %2183 = vmatpush1.msra.mxu0 0.0
        %2184 = vmatprep.subr.mxu0 0.0
        %2185 = vmatpush1.msra.mxu0 0.0
        %2186 = vmatprep.subr.mxu0 0.0
        %2187 = vmatpush1.msra.mxu0 0.0
        %2188 = vmatprep.subr.mxu0 0.0
        %2189 = vmatpush1.msra.mxu0 0.0
        %2190 = vmatprep.subr.mxu0 0.0
        %2191 = vmatpush1.msra.mxu0 0.0
        %2192 = vmatprep.subr.mxu0 0.0
        %2193 = vmatpush1.msra.mxu0 0.0
        %2194 = vmatprep.subr.mxu0 0.0
        %2195 = vmatpush1.msra.mxu0 0.0
        %2196 = vmatprep.subr.mxu0 0.0
        %2197 = vmatpush1.msra.mxu0 0.0
        %2198 = vmatprep.subr.mxu0 0.0
        %2199 = vmatpush1.msra.mxu0 0.0
        %2200 = vmatprep.subr.mxu0 0.0
        %2201 = vmatpush1.msra.mxu0 0.0
        %2202 = vmatprep.mubr.f32.mxu0 0.0
        %2203 = vmatmul.mubr.f32.gmra.mrb[0].mxu0 %v2136
        %v2204 = vpop.f32.mrb[0].mxu0
        %v2205 = vadd.f32 0.0, %v2204
        %v2206 = vpop.f32.mrb[0].mxu0
        %2207 = vdwg.mxu0
        %v2208 = vadd.f32 %v2130, %v2205
        %v2209 = vld [vmem:[#allocation4 + $0x18] sm:$0xff]
        %s2210 = scalar_lea.vmem %s3, 320
        %v2211 = vld [vmem:[%s2210] sm:$0xff]
        %v2212 = vld [vmem:[%s2210 + $0x8] sm:$0xff]
        %v2214 = vsel %vm521, %v2209, 0
        %2216 = vmatprep.subr.mxu0 0.0
        %2217 = vmatpush1.msra.mxu0 %v2211
        %2218 = vmatprep.subr.mxu0 0.0
        %2219 = vmatpush1.msra.mxu0 %v2212
        %2220 = vmatprep.subr.mxu0 0.0
        %2221 = vmatpush1.msra.mxu0 0.0
        %2222 = vmatprep.subr.mxu0 0.0
        %2223 = vmatpush1.msra.mxu0 0.0
        %2224 = vmatprep.subr.mxu0 0.0
        %2225 = vmatpush1.msra.mxu0 0.0
        %2226 = vmatprep.subr.mxu0 0.0
        %2227 = vmatpush1.msra.mxu0 0.0
        %2228 = vmatprep.subr.mxu0 0.0
        %2229 = vmatpush1.msra.mxu0 0.0
        %2230 = vmatprep.subr.mxu0 0.0
        %2231 = vmatpush1.msra.mxu0 0.0
        %2232 = vmatprep.subr.mxu0 0.0
        %2233 = vmatpush1.msra.mxu0 0.0
        %2234 = vmatprep.subr.mxu0 0.0
        %2235 = vmatpush1.msra.mxu0 0.0
        %2236 = vmatprep.subr.mxu0 0.0
        %2237 = vmatpush1.msra.mxu0 0.0
        %2238 = vmatprep.subr.mxu0 0.0
        %2239 = vmatpush1.msra.mxu0 0.0
        %2240 = vmatprep.subr.mxu0 0.0
        %2241 = vmatpush1.msra.mxu0 0.0
        %2242 = vmatprep.subr.mxu0 0.0
        %2243 = vmatpush1.msra.mxu0 0.0
        %2244 = vmatprep.subr.mxu0 0.0
        %2245 = vmatpush1.msra.mxu0 0.0
        %2246 = vmatprep.subr.mxu0 0.0
        %2247 = vmatpush1.msra.mxu0 0.0
        %2248 = vmatprep.subr.mxu0 0.0
        %2249 = vmatpush1.msra.mxu0 0.0
        %2250 = vmatprep.subr.mxu0 0.0
        %2251 = vmatpush1.msra.mxu0 0.0
        %2252 = vmatprep.subr.mxu0 0.0
        %2253 = vmatpush1.msra.mxu0 0.0
        %2254 = vmatprep.subr.mxu0 0.0
        %2255 = vmatpush1.msra.mxu0 0.0
        %2256 = vmatprep.subr.mxu0 0.0
        %2257 = vmatpush1.msra.mxu0 0.0
        %2258 = vmatprep.subr.mxu0 0.0
        %2259 = vmatpush1.msra.mxu0 0.0
        %2260 = vmatprep.subr.mxu0 0.0
        %2261 = vmatpush1.msra.mxu0 0.0
        %2262 = vmatprep.subr.mxu0 0.0
        %2263 = vmatpush1.msra.mxu0 0.0
        %2264 = vmatprep.subr.mxu0 0.0
        %2265 = vmatpush1.msra.mxu0 0.0
        %2266 = vmatprep.subr.mxu0 0.0
        %2267 = vmatpush1.msra.mxu0 0.0
        %2268 = vmatprep.subr.mxu0 0.0
        %2269 = vmatpush1.msra.mxu0 0.0
        %2270 = vmatprep.subr.mxu0 0.0
        %2271 = vmatpush1.msra.mxu0 0.0
        %2272 = vmatprep.subr.mxu0 0.0
        %2273 = vmatpush1.msra.mxu0 0.0
        %2274 = vmatprep.subr.mxu0 0.0
        %2275 = vmatpush1.msra.mxu0 0.0
        %2276 = vmatprep.subr.mxu0 0.0
        %2277 = vmatpush1.msra.mxu0 0.0
        %2278 = vmatprep.subr.mxu0 0.0
        %2279 = vmatpush1.msra.mxu0 0.0
        %2280 = vmatprep.mubr.f32.mxu0 0.0
        %2281 = vmatmul.mubr.f32.gmra.mrb[0].mxu0 %v2214
        %v2282 = vpop.f32.mrb[0].mxu0
        %v2283 = vadd.f32 0.0, %v2282
        %v2284 = vpop.f32.mrb[0].mxu0
        %2285 = vdwg.mxu0
        %v2286 = vadd.f32 %v2208, %v2283
        %v2287 = vld [vmem:[#allocation4 + $0x19] sm:$0xff]
        %s2288 = scalar_lea.vmem %s3, 336
        %v2289 = vld [vmem:[%s2288] sm:$0xff]
        %v2290 = vld [vmem:[%s2288 + $0x8] sm:$0xff]
        %v2292 = vsel %vm521, %v2287, 0
        %2294 = vmatprep.subr.mxu0 0.0
        %2295 = vmatpush1.msra.mxu0 %v2289
        %2296 = vmatprep.subr.mxu0 0.0
        %2297 = vmatpush1.msra.mxu0 %v2290
        %2298 = vmatprep.subr.mxu0 0.0
        %2299 = vmatpush1.msra.mxu0 0.0
        %2300 = vmatprep.subr.mxu0 0.0
        %2301 = vmatpush1.msra.mxu0 0.0
        %2302 = vmatprep.subr.mxu0 0.0
        %2303 = vmatpush1.msra.mxu0 0.0
        %2304 = vmatprep.subr.mxu0 0.0
        %2305 = vmatpush1.msra.mxu0 0.0
        %2306 = vmatprep.subr.mxu0 0.0
        %2307 = vmatpush1.msra.mxu0 0.0
        %2308 = vmatprep.subr.mxu0 0.0
        %2309 = vmatpush1.msra.mxu0 0.0
        %2310 = vmatprep.subr.mxu0 0.0
        %2311 = vmatpush1.msra.mxu0 0.0
        %2312 = vmatprep.subr.mxu0 0.0
        %2313 = vmatpush1.msra.mxu0 0.0
        %2314 = vmatprep.subr.mxu0 0.0
        %2315 = vmatpush1.msra.mxu0 0.0
        %2316 = vmatprep.subr.mxu0 0.0
        %2317 = vmatpush1.msra.mxu0 0.0
        %2318 = vmatprep.subr.mxu0 0.0
        %2319 = vmatpush1.msra.mxu0 0.0
        %2320 = vmatprep.subr.mxu0 0.0
        %2321 = vmatpush1.msra.mxu0 0.0
        %2322 = vmatprep.subr.mxu0 0.0
        %2323 = vmatpush1.msra.mxu0 0.0
        %2324 = vmatprep.subr.mxu0 0.0
        %2325 = vmatpush1.msra.mxu0 0.0
        %2326 = vmatprep.subr.mxu0 0.0
        %2327 = vmatpush1.msra.mxu0 0.0
        %2328 = vmatprep.subr.mxu0 0.0
        %2329 = vmatpush1.msra.mxu0 0.0
        %2330 = vmatprep.subr.mxu0 0.0
        %2331 = vmatpush1.msra.mxu0 0.0
        %2332 = vmatprep.subr.mxu0 0.0
        %2333 = vmatpush1.msra.mxu0 0.0
        %2334 = vmatprep.subr.mxu0 0.0
        %2335 = vmatpush1.msra.mxu0 0.0
        %2336 = vmatprep.subr.mxu0 0.0
        %2337 = vmatpush1.msra.mxu0 0.0
        %2338 = vmatprep.subr.mxu0 0.0
        %2339 = vmatpush1.msra.mxu0 0.0
        %2340 = vmatprep.subr.mxu0 0.0
        %2341 = vmatpush1.msra.mxu0 0.0
        %2342 = vmatprep.subr.mxu0 0.0
        %2343 = vmatpush1.msra.mxu0 0.0
        %2344 = vmatprep.subr.mxu0 0.0
        %2345 = vmatpush1.msra.mxu0 0.0
        %2346 = vmatprep.subr.mxu0 0.0
        %2347 = vmatpush1.msra.mxu0 0.0
        %2348 = vmatprep.subr.mxu0 0.0
        %2349 = vmatpush1.msra.mxu0 0.0
        %2350 = vmatprep.subr.mxu0 0.0
        %2351 = vmatpush1.msra.mxu0 0.0
        %2352 = vmatprep.subr.mxu0 0.0
        %2353 = vmatpush1.msra.mxu0 0.0
        %2354 = vmatprep.subr.mxu0 0.0
        %2355 = vmatpush1.msra.mxu0 0.0
        %2356 = vmatprep.subr.mxu0 0.0
        %2357 = vmatpush1.msra.mxu0 0.0
        %2358 = vmatprep.mubr.f32.mxu0 0.0
        %2359 = vmatmul.mubr.f32.gmra.mrb[0].mxu0 %v2292
        %v2360 = vpop.f32.mrb[0].mxu0
        %v2361 = vadd.f32 0.0, %v2360
        %v2362 = vpop.f32.mrb[0].mxu0
        %2363 = vdwg.mxu0
        %v2364 = vadd.f32 %v2286, %v2361
        %v2365 = vld [vmem:[#allocation4 + $0x1a] sm:$0xff]
        %s2366 = scalar_lea.vmem %s3, 352
        %v2367 = vld [vmem:[%s2366] sm:$0xff]
        %v2368 = vld [vmem:[%s2366 + $0x8] sm:$0xff]
        %v2370 = vsel %vm521, %v2365, 0
        %2372 = vmatprep.subr.mxu0 0.0
        %2373 = vmatpush1.msra.mxu0 %v2367
        %2374 = vmatprep.subr.mxu0 0.0
        %2375 = vmatpush1.msra.mxu0 %v2368
        %2376 = vmatprep.subr.mxu0 0.0
        %2377 = vmatpush1.msra.mxu0 0.0
        %2378 = vmatprep.subr.mxu0 0.0
        %2379 = vmatpush1.msra.mxu0 0.0
        %2380 = vmatprep.subr.mxu0 0.0
        %2381 = vmatpush1.msra.mxu0 0.0
        %2382 = vmatprep.subr.mxu0 0.0
        %2383 = vmatpush1.msra.mxu0 0.0
        %2384 = vmatprep.subr.mxu0 0.0
        %2385 = vmatpush1.msra.mxu0 0.0
        %2386 = vmatprep.subr.mxu0 0.0
        %2387 = vmatpush1.msra.mxu0 0.0
        %2388 = vmatprep.subr.mxu0 0.0
        %2389 = vmatpush1.msra.mxu0 0.0
        %2390 = vmatprep.subr.mxu0 0.0
        %2391 = vmatpush1.msra.mxu0 0.0
        %2392 = vmatprep.subr.mxu0 0.0
        %2393 = vmatpush1.msra.mxu0 0.0
        %2394 = vmatprep.subr.mxu0 0.0
        %2395 = vmatpush1.msra.mxu0 0.0
        %2396 = vmatprep.subr.mxu0 0.0
        %2397 = vmatpush1.msra.mxu0 0.0
        %2398 = vmatprep.subr.mxu0 0.0
        %2399 = vmatpush1.msra.mxu0 0.0
        %2400 = vmatprep.subr.mxu0 0.0
        %2401 = vmatpush1.msra.mxu0 0.0
        %2402 = vmatprep.subr.mxu0 0.0
        %2403 = vmatpush1.msra.mxu0 0.0
        %2404 = vmatprep.subr.mxu0 0.0
        %2405 = vmatpush1.msra.mxu0 0.0
        %2406 = vmatprep.subr.mxu0 0.0
        %2407 = vmatpush1.msra.mxu0 0.0
        %2408 = vmatprep.subr.mxu0 0.0
        %2409 = vmatpush1.msra.mxu0 0.0
        %2410 = vmatprep.subr.mxu0 0.0
        %2411 = vmatpush1.msra.mxu0 0.0
        %2412 = vmatprep.subr.mxu0 0.0
        %2413 = vmatpush1.msra.mxu0 0.0
        %2414 = vmatprep.subr.mxu0 0.0
        %2415 = vmatpush1.msra.mxu0 0.0
        %2416 = vmatprep.subr.mxu0 0.0
        %2417 = vmatpush1.msra.mxu0 0.0
        %2418 = vmatprep.subr.mxu0 0.0
        %2419 = vmatpush1.msra.mxu0 0.0
        %2420 = vmatprep.subr.mxu0 0.0
        %2421 = vmatpush1.msra.mxu0 0.0
        %2422 = vmatprep.subr.mxu0 0.0
        %2423 = vmatpush1.msra.mxu0 0.0
        %2424 = vmatprep.subr.mxu0 0.0
        %2425 = vmatpush1.msra.mxu0 0.0
        %2426 = vmatprep.subr.mxu0 0.0
        %2427 = vmatpush1.msra.mxu0 0.0
        %2428 = vmatprep.subr.mxu0 0.0
        %2429 = vmatpush1.msra.mxu0 0.0
        %2430 = vmatprep.subr.mxu0 0.0
        %2431 = vmatpush1.msra.mxu0 0.0
        %2432 = vmatprep.subr.mxu0 0.0
        %2433 = vmatpush1.msra.mxu0 0.0
        %2434 = vmatprep.subr.mxu0 0.0
        %2435 = vmatpush1.msra.mxu0 0.0
        %2436 = vmatprep.mubr.f32.mxu0 0.0
        %2437 = vmatmul.mubr.f32.gmra.mrb[0].mxu0 %v2370
        %v2438 = vpop.f32.mrb[0].mxu0
        %v2439 = vadd.f32 0.0, %v2438
        %v2440 = vpop.f32.mrb[0].mxu0
        %2441 = vdwg.mxu0
        %v2442 = vadd.f32 %v2364, %v2439
        %v2443 = vld [vmem:[#allocation4 + $0x1b] sm:$0xff]
        %s2444 = scalar_lea.vmem %s3, 368
        %v2445 = vld [vmem:[%s2444] sm:$0xff]
        %v2446 = vld [vmem:[%s2444 + $0x8] sm:$0xff]
        %v2448 = vsel %vm521, %v2443, 0
        %2450 = vmatprep.subr.mxu0 0.0
        %2451 = vmatpush1.msra.mxu0 %v2445
        %2452 = vmatprep.subr.mxu0 0.0
        %2453 = vmatpush1.msra.mxu0 %v2446
        %2454 = vmatprep.subr.mxu0 0.0
        %2455 = vmatpush1.msra.mxu0 0.0
        %2456 = vmatprep.subr.mxu0 0.0
        %2457 = vmatpush1.msra.mxu0 0.0
        %2458 = vmatprep.subr.mxu0 0.0
        %2459 = vmatpush1.msra.mxu0 0.0
        %2460 = vmatprep.subr.mxu0 0.0
        %2461 = vmatpush1.msra.mxu0 0.0
        %2462 = vmatprep.subr.mxu0 0.0
        %2463 = vmatpush1.msra.mxu0 0.0
        %2464 = vmatprep.subr.mxu0 0.0
        %2465 = vmatpush1.msra.mxu0 0.0
        %2466 = vmatprep.subr.mxu0 0.0
        %2467 = vmatpush1.msra.mxu0 0.0
        %2468 = vmatprep.subr.mxu0 0.0
        %2469 = vmatpush1.msra.mxu0 0.0
        %2470 = vmatprep.subr.mxu0 0.0
        %2471 = vmatpush1.msra.mxu0 0.0
        %2472 = vmatprep.subr.mxu0 0.0
        %2473 = vmatpush1.msra.mxu0 0.0
        %2474 = vmatprep.subr.mxu0 0.0
        %2475 = vmatpush1.msra.mxu0 0.0
        %2476 = vmatprep.subr.mxu0 0.0
        %2477 = vmatpush1.msra.mxu0 0.0
        %2478 = vmatprep.subr.mxu0 0.0
        %2479 = vmatpush1.msra.mxu0 0.0
        %2480 = vmatprep.subr.mxu0 0.0
        %2481 = vmatpush1.msra.mxu0 0.0
        %2482 = vmatprep.subr.mxu0 0.0
        %2483 = vmatpush1.msra.mxu0 0.0
        %2484 = vmatprep.subr.mxu0 0.0
        %2485 = vmatpush1.msra.mxu0 0.0
        %2486 = vmatprep.subr.mxu0 0.0
        %2487 = vmatpush1.msra.mxu0 0.0
        %2488 = vmatprep.subr.mxu0 0.0
        %2489 = vmatpush1.msra.mxu0 0.0
        %2490 = vmatprep.subr.mxu0 0.0
        %2491 = vmatpush1.msra.mxu0 0.0
        %2492 = vmatprep.subr.mxu0 0.0
        %2493 = vmatpush1.msra.mxu0 0.0
        %2494 = vmatprep.subr.mxu0 0.0
        %2495 = vmatpush1.msra.mxu0 0.0
        %2496 = vmatprep.subr.mxu0 0.0
        %2497 = vmatpush1.msra.mxu0 0.0
        %2498 = vmatprep.subr.mxu0 0.0
        %2499 = vmatpush1.msra.mxu0 0.0
        %2500 = vmatprep.subr.mxu0 0.0
        %2501 = vmatpush1.msra.mxu0 0.0
        %2502 = vmatprep.subr.mxu0 0.0
        %2503 = vmatpush1.msra.mxu0 0.0
        %2504 = vmatprep.subr.mxu0 0.0
        %2505 = vmatpush1.msra.mxu0 0.0
        %2506 = vmatprep.subr.mxu0 0.0
        %2507 = vmatpush1.msra.mxu0 0.0
        %2508 = vmatprep.subr.mxu0 0.0
        %2509 = vmatpush1.msra.mxu0 0.0
        %2510 = vmatprep.subr.mxu0 0.0
        %2511 = vmatpush1.msra.mxu0 0.0
        %2512 = vmatprep.subr.mxu0 0.0
        %2513 = vmatpush1.msra.mxu0 0.0
        %2514 = vmatprep.mubr.f32.mxu0 0.0
        %2515 = vmatmul.mubr.f32.gmra.mrb[0].mxu0 %v2448
        %v2516 = vpop.f32.mrb[0].mxu0
        %v2517 = vadd.f32 0.0, %v2516
        %v2518 = vpop.f32.mrb[0].mxu0
        %2519 = vdwg.mxu0
        %v2520 = vadd.f32 %v2442, %v2517
        %v2521 = vld [vmem:[#allocation4 + $0x1c] sm:$0xff]
        %s2522 = scalar_lea.vmem %s3, 384
        %v2523 = vld [vmem:[%s2522] sm:$0xff]
        %v2524 = vld [vmem:[%s2522 + $0x8] sm:$0xff]
        %v2526 = vsel %vm521, %v2521, 0
        %2528 = vmatprep.subr.mxu0 0.0
        %2529 = vmatpush1.msra.mxu0 %v2523
        %2530 = vmatprep.subr.mxu0 0.0
        %2531 = vmatpush1.msra.mxu0 %v2524
        %2532 = vmatprep.subr.mxu0 0.0
        %2533 = vmatpush1.msra.mxu0 0.0
        %2534 = vmatprep.subr.mxu0 0.0
        %2535 = vmatpush1.msra.mxu0 0.0
        %2536 = vmatprep.subr.mxu0 0.0
        %2537 = vmatpush1.msra.mxu0 0.0
        %2538 = vmatprep.subr.mxu0 0.0
        %2539 = vmatpush1.msra.mxu0 0.0
        %2540 = vmatprep.subr.mxu0 0.0
        %2541 = vmatpush1.msra.mxu0 0.0
        %2542 = vmatprep.subr.mxu0 0.0
        %2543 = vmatpush1.msra.mxu0 0.0
        %2544 = vmatprep.subr.mxu0 0.0
        %2545 = vmatpush1.msra.mxu0 0.0
        %2546 = vmatprep.subr.mxu0 0.0
        %2547 = vmatpush1.msra.mxu0 0.0
        %2548 = vmatprep.subr.mxu0 0.0
        %2549 = vmatpush1.msra.mxu0 0.0
        %2550 = vmatprep.subr.mxu0 0.0
        %2551 = vmatpush1.msra.mxu0 0.0
        %2552 = vmatprep.subr.mxu0 0.0
        %2553 = vmatpush1.msra.mxu0 0.0
        %2554 = vmatprep.subr.mxu0 0.0
        %2555 = vmatpush1.msra.mxu0 0.0
        %2556 = vmatprep.subr.mxu0 0.0
        %2557 = vmatpush1.msra.mxu0 0.0
        %2558 = vmatprep.subr.mxu0 0.0
        %2559 = vmatpush1.msra.mxu0 0.0
        %2560 = vmatprep.subr.mxu0 0.0
        %2561 = vmatpush1.msra.mxu0 0.0
        %2562 = vmatprep.subr.mxu0 0.0
        %2563 = vmatpush1.msra.mxu0 0.0
        %2564 = vmatprep.subr.mxu0 0.0
        %2565 = vmatpush1.msra.mxu0 0.0
        %2566 = vmatprep.subr.mxu0 0.0
        %2567 = vmatpush1.msra.mxu0 0.0
        %2568 = vmatprep.subr.mxu0 0.0
        %2569 = vmatpush1.msra.mxu0 0.0
        %2570 = vmatprep.subr.mxu0 0.0
        %2571 = vmatpush1.msra.mxu0 0.0
        %2572 = vmatprep.subr.mxu0 0.0
        %2573 = vmatpush1.msra.mxu0 0.0
        %2574 = vmatprep.subr.mxu0 0.0
        %2575 = vmatpush1.msra.mxu0 0.0
        %2576 = vmatprep.subr.mxu0 0.0
        %2577 = vmatpush1.msra.mxu0 0.0
        %2578 = vmatprep.subr.mxu0 0.0
        %2579 = vmatpush1.msra.mxu0 0.0
        %2580 = vmatprep.subr.mxu0 0.0
        %2581 = vmatpush1.msra.mxu0 0.0
        %2582 = vmatprep.subr.mxu0 0.0
        %2583 = vmatpush1.msra.mxu0 0.0
        %2584 = vmatprep.subr.mxu0 0.0
        %2585 = vmatpush1.msra.mxu0 0.0
        %2586 = vmatprep.subr.mxu0 0.0
        %2587 = vmatpush1.msra.mxu0 0.0
        %2588 = vmatprep.subr.mxu0 0.0
        %2589 = vmatpush1.msra.mxu0 0.0
        %2590 = vmatprep.subr.mxu0 0.0
        %2591 = vmatpush1.msra.mxu0 0.0
        %2592 = vmatprep.mubr.f32.mxu0 0.0
        %2593 = vmatmul.mubr.f32.gmra.mrb[0].mxu0 %v2526
        %v2594 = vpop.f32.mrb[0].mxu0
        %v2595 = vadd.f32 0.0, %v2594
        %v2596 = vpop.f32.mrb[0].mxu0
        %2597 = vdwg.mxu0
        %v2598 = vadd.f32 %v2520, %v2595
        %v2599 = vmax.f32 %v2598, 0.0
        %v2601 = vrot.slane %v2599, 1
        %v2603 = vmax.f32 %v2599, %v2601
        %v2605 = vrot.slane %v2603, 6
        %v2607 = vmax.f32 %v2603, %v2605
        %s2608 = scalar_lea.vmem %s224, %s235
        %2609 = vst [vmem:[%s2608] sm:$0x1] %v2607
      $region45: #{model_forward.1} parent=39 // loop_footer
        %s239 = sadd.s32 1, %s235
      $region46: #{model_forward.1} parent=39 // loop_footer_branch
        %234 = sbr.rel target = $region42
      $region47: #{model_forward.1} parent=39 // loop_exit
        _
      %s2610 = smul.u32 4, %s16
      %p2611 = scmp.lt.s32.totalorder %s2610, 7
      %s2612 = scalar_select %p2611, %s2610, 7
      %s2613 = scalar_lea.vmem %s5, %s2612
      // Predicated region
      $region48: #{model_forward.1} parent=39 // pred_check
        %p2614 = pneg %p144
      $region49: #{model_forward.1} parent=39 // pred_check_branch
        %2616 = sbr.rel (%p2614) target = $region51
      $region50: #{model_forward.1} parent=39 // pred_region
        %s2617 = smul.u32 4, %s16
      $region51: #{model_forward.1} parent=39 // pred_fallthru
        _
    $region40: #{model_forward.1} parent=5 // pred_fallthru
      _
    %p2618 = scmp.le.s32.totalorder 2, %s11
    // Predicated region
    $region52: #{model_forward.1} parent=5 // pred_check
      %p2619 = pneg %p2618
    $region53: #{model_forward.1} parent=5 // pred_check_branch
      %2621 = sbr.rel (%p2619) target = $region55
    $region54: #{model_forward.1} parent=5 // pred_region
      %s2622 = ssub.s32 %s11, 2
      // Predicated region
      $region56: #{model_forward.1} parent=54 // pred_check
        %p2623 = pneg %p150
      $region57: #{model_forward.1} parent=54 // pred_check_branch
        %2625 = sbr.rel (%p2623) target = $region59
      $region58: #{model_forward.1} parent=54 // pred_region
        %s2626 = smul.u32 4, %s17
        %p2627 = scmp.lt.s32.totalorder %s2626, 7
        %s2628 = scalar_select %p2627, %s2626, 7
        %s2629 = scalar_lea.vmem %s5, %s2628
      $region59: #{model_forward.1} parent=54 // pred_fallthru
        _
    $region55: #{model_forward.1} parent=5 // pred_fallthru
      _
  $region6: #{model_forward.1} parent=0 // loop_footer
    %s15 = sadd.s32 1, %s11
  $region7: #{model_forward.1} parent=0 // loop_footer_branch
    %10 = sbr.rel target = $region3
  $region8: #{model_forward.1} parent=0 // loop_exit
    _

</llo_original>
